<compile_context>
chip_gen: v5e
topology: v5e:2x2
jax: 0.10.0
libtpu: 0.0.40
codegen_flags: <defaults>
</compile_context>

<pallas_src>
import math

import jax
import jax.numpy as jnp
import numpy as np
from jax.experimental import pallas as pl
from jax.experimental.pallas import tpu as pltpu

NPAD = 128  # lane-dense padded class dimension for the FC weight / output

PACKED_ORDER = [
    "a1_w1t", "a1_b1t", "a1_w2t", "a1_b2t",
    "se_w1t", "se_b1t", "se_w2t", "se_b2t",
    "sa_w", "sa_b",
    "c1_w", "c25_w", "c6_wt", "cb",
    "fc_w", "fc_b",
]


def init_params(key, cin, co, h, w, ncls):
    """Deterministic synthetic parameters mirroring the torch module shapes."""
    ks = list(jax.random.split(key, 64))
    it = iter(range(64))

    def rnd(shape, scale):
        return (scale * jax.random.normal(ks[next(it)], shape)).astype(jnp.float32)

    hid1 = max(cin // 8, 1)
    hid2 = max(co // 8, 1)
    p = {}

    # Spectral_attention(in_chanels, in_chanels//8, in_chanels)
    p["a1_w1"] = rnd((cin, hid1), 1.0 / math.sqrt(cin))
    p["a1_b1"] = rnd((1, hid1), 0.05)
    p["a1_w2"] = rnd((hid1, cin), 1.0 / math.sqrt(hid1))
    p["a1_b2"] = rnd((1, cin), 0.05)

    # Spatial_attention(2, 3, 1, 1, 1) x3 (attention2 / attention4 / attention6)
    for name in ("a2", "a4", "a6"):
        p[f"{name}_w"] = rnd((3, 3, 2, 1), math.sqrt(2.0 / (2 * 9)))
        p[f"{name}_b"] = rnd((1, 1), 0.05)

    # conv1: cin -> co, conv2..5: co -> co, all 3x3 pad 1 stride 1 (HWIO)
    p["c1_w"] = rnd((3, 3, cin, co), math.sqrt(2.0 / (cin * 9)))
    p["c1_b"] = rnd((1, co), 0.05)
    for name in ("c2", "c3", "c4", "c5"):
        p[f"{name}_w"] = rnd((3, 3, co, co), math.sqrt(2.0 / (co * 9)))
        p[f"{name}_b"] = rnd((1, co), 0.05)
    # conv6: 1x1, co -> co; stored as (ci, co_out)
    p["c6_w"] = rnd((co, co), math.sqrt(2.0 / co))
    p["c6_b"] = rnd((1, co), 0.05)

    # BatchNorm (inference mode, running stats as scale/offset)
    eps = 1e-3
    for name in ("bn1", "bn2", "bn3", "bn4", "bn5"):
        gamma = 1.0 + rnd((1, co), 0.1)
        beta = rnd((1, co), 0.1)
        mean = rnd((1, co), 0.1)
        var = 1.0 + jnp.abs(rnd((1, co), 0.1))
        scale = gamma / jnp.sqrt(var + eps)
        p[f"{name}_s"] = scale.astype(jnp.float32)
        p[f"{name}_o"] = (beta - mean * scale).astype(jnp.float32)

    # Spectral_attention(co, co//8, co) x2 (attention3 / attention5)
    for name in ("a3", "a5"):
        p[f"{name}_w1"] = rnd((co, hid2), 1.0 / math.sqrt(co))
        p[f"{name}_b1"] = rnd((1, hid2), 0.05)
        p[f"{name}_w2"] = rnd((hid2, co), 1.0 / math.sqrt(hid2))
        p[f"{name}_b2"] = rnd((1, co), 0.05)

    # Fully connected: torch layout is (ncls, co*h*w) flattening NCHW order.
    # Generate in (ncls, co, h, w) and permute to (ncls, h*w, co) so the
    # reference's NHWC flatten matches the torch NCHW flatten exactly.
    fcw_torch = rnd((ncls, co, h, w), 1.0 / math.sqrt(co * h * w))
    p["fc_w"] = jnp.transpose(fcw_torch, (0, 2, 3, 1)).reshape(ncls, h * w, co)
    p["fc_b"] = rnd((1, ncls), 0.05)
    return p


def pack_params(p, H, W, L):
    """Plain-JAX glue: fold BN into convs, transpose weights for the
    channels-on-sublanes layout, pre-broadcast the tiny spatial-attention
    weights along lanes, and pack everything into 16 lane-friendly slabs."""
    ncls = p["fc_b"].shape[1]
    co = p["c1_b"].shape[1]

    def fold(wname, bname, bn):
        s = p[f"{bn}_s"]
        w_ = p[wname] * s.reshape(1, 1, 1, -1)
        b_ = p[bname] * s + p[f"{bn}_o"]
        return w_, b_

    def kmat(w_):  # HWIO (3,3,ci,co) -> (co, 9*ci); K index = (ky*3+kx)*ci + c
        ci, co_ = w_.shape[2], w_.shape[3]
        return jnp.transpose(w_, (3, 0, 1, 2)).reshape(co_, 9 * ci)

    c1w, c1b = fold("c1_w", "c1_b", "bn1")
    c2w, c2b = fold("c2_w", "c2_b", "bn2")
    c3w, c3b = fold("c3_w", "c3_b", "bn3")
    c4w, c4b = fold("c4_w", "c4_b", "bn4")
    c5w, c5b = fold("c5_w", "c5_b", "bn5")

    # Spatial-attention 3x3 convs (2 -> 1 channel): flatten to 18 taps and
    # pre-broadcast along the lane dim so the kernel is pure VPU FMAs.
    def sa_broadcast(w_):  # (3,3,2,1) -> (18, L); row = 2*(ky*3+kx) + cin
        flat = w_.reshape(18)
        return jnp.broadcast_to(flat[:, None], (18, L))

    sa_w = jnp.stack([sa_broadcast(p["a2_w"]), sa_broadcast(p["a4_w"]),
                      sa_broadcast(p["a6_w"])])                           # (3,18,L)
    sa_b = jnp.stack([jnp.broadcast_to(p["a2_b"].reshape(1, 1), (1, L)),
                      jnp.broadcast_to(p["a4_b"].reshape(1, 1), (1, L)),
                      jnp.broadcast_to(p["a6_b"].reshape(1, 1), (1, L))])  # (3,1,L)

    # FC: torch flattens NCHW -> K index = c*HW + s.  p["fc_w"] is (ncls,HW,co).
    fcw = jnp.transpose(p["fc_w"], (2, 1, 0)).reshape(co * H * W, ncls)
    fcw = jnp.pad(fcw, ((0, 0), (0, NPAD - ncls)))                         # (Co*HW, NPAD)
    fcb = jnp.pad(p["fc_b"], ((0, 0), (0, NPAD - ncls)))                   # (1, NPAD)

    return {
        "a1_w1t": p["a1_w1"].T,                                   # (hid1, Cin)
        "a1_b1t": p["a1_b1"].T,                                   # (hid1, 1)
        "a1_w2t": p["a1_w2"].T,                                   # (Cin, hid1)
        "a1_b2t": p["a1_b2"].T,                                   # (Cin, 1)
        "se_w1t": jnp.stack([p["a3_w1"].T, p["a5_w1"].T]),        # (2, hid2, Co)
        "se_b1t": jnp.stack([p["a3_b1"].T, p["a5_b1"].T]),        # (2, hid2, 1)
        "se_w2t": jnp.stack([p["a3_w2"].T, p["a5_w2"].T]),        # (2, Co, hid2)
        "se_b2t": jnp.stack([p["a3_b2"].T, p["a5_b2"].T]),        # (2, Co, 1)
        "sa_w": sa_w, "sa_b": sa_b,
        "c1_w": kmat(c1w),                                        # (Co, 9*Cin), BN folded
        "c25_w": jnp.stack([kmat(c2w), kmat(c3w), kmat(c4w), kmat(c5w)]),  # (4,Co,9*Co)
        "c6_wt": p["c6_w"].T,                                     # (Co_out, Ci)
        "cb": jnp.stack([c1b.reshape(co, 1), c2b.reshape(co, 1),
                         c3b.reshape(co, 1), c4b.reshape(co, 1),
                         c5b.reshape(co, 1), p["c6_b"].reshape(co, 1)]),   # (6,Co,1)
        "fc_w": fcw, "fc_b": fcb,
    }


def rssan_pallas(x_nhwc, params):
    B, H, W, Cin = x_nhwc.shape
    Co = params["c1_b"].shape[1]
    NCLS = params["fc_b"].shape[1]
    HW = H * W

    # Pack Bblk images into the lane dimension (lane-dense: Bblk*HW ~ 128).
    Bblk = max(1, 128 // HW)
    Bgrid = pl.cdiv(B, Bblk)
    Bpad = Bgrid * Bblk
    L = Bblk * HW

    # NHWC -> (Bgrid, Cin, L) with lane index = bb*HW + h*W + w (wrapper-side).
    x_nchw = jnp.transpose(x_nhwc, (0, 3, 1, 2))
    if Bpad != B:
        x_nchw = jnp.pad(x_nchw, ((0, Bpad - B), (0, 0), (0, 0), (0, 0)))
    x_pack = (x_nchw.reshape(Bgrid, Bblk, Cin, HW)
              .transpose(0, 2, 1, 3).reshape(Bgrid, Cin, L))

    # Static per-tap lane shifts and border masks for the rolled 3x3 conv taps.
    lane = np.arange(L)
    hh = (lane % HW) // W
    ww = lane % W
    shifts, mask_rows = [], []
    for dy in (-1, 0, 1):
        for dx in (-1, 0, 1):
            shifts.append(int((-(dy * W + dx)) % L))
            ok = (hh + dy >= 0) & (hh + dy < H) & (ww + dx >= 0) & (ww + dx < W)
            mask_rows.append(ok.astype(np.float32))
    masks = jnp.asarray(np.stack(mask_rows))                       # (9, L)

    packed = pack_params(params, H, W, L)
    plist = [packed[n] for n in PACKED_ORDER] + [masks]

    def kernel(x_ref,
               a1w1, a1b1, a1w2, a1b2,
               sew1, seb1, sew2, seb2,
               saw, sab,
               c1w, c25w, c6wt, cb,
               fcw, fcb, masks_ref,
               out_ref):

        msk = masks_ref[...]                                       # (9, L)

        def sigmoid(v):
            return 0.5 * jnp.tanh(0.5 * v) + 0.5                   # EUP tanh; exact

        def tap(v, t):
            # v shifted by (dy, dx) with zero padding, in packed-lane layout.
            if t == 4:                                             # dy = dx = 0
                return v
            return pltpu.roll(v, shift=shifts[t], axis=1) * msk[t:t + 1, :]

        def conv3x3(x2d, w2d, b_col):
            # x2d: (C, L) -> (Co, L); one lane-dense MXU matmul per conv.
            col = jnp.concatenate([tap(x2d, t) for t in range(9)], axis=0)
            return jnp.dot(w2d, col, preferred_element_type=jnp.float32) + b_col

        def lane_expand(att):
            # (C, Bblk) -> (C, L): each image's column broadcast over its lanes.
            c = att.shape[0]
            return jnp.concatenate(
                [jnp.broadcast_to(att[:, bb:bb + 1], (c, HW)) for bb in range(Bblk)],
                axis=1)

        def spec_att(x2d, w1t, b1t, w2t, b2t):
            # Channel (spectral) attention; returns (C, Bblk).
            cols = []
            for bb in range(Bblk):
                xi = x2d[:, bb * HW:(bb + 1) * HW]
                cols.append(jnp.mean(xi, axis=1, keepdims=True))
                cols.append(jnp.max(xi, axis=1, keepdims=True))
            v = jnp.concatenate(cols, axis=1)                      # (C, 2*Bblk)
            h = jnp.maximum(
                jnp.dot(w1t, v, preferred_element_type=jnp.float32) + b1t, 0.0)
            z = sigmoid(jnp.dot(w2t, h, preferred_element_type=jnp.float32) + b2t)
            return jnp.concatenate(
                [sigmoid(z[:, 2 * bb:2 * bb + 1] + z[:, 2 * bb + 1:2 * bb + 2])
                 for bb in range(Bblk)], axis=1)                   # (C, Bblk)

        def spat_att(x2d, j):
            # Spatial attention: 3x3 conv on [mean_c, max_c] as 18 VPU FMAs
            # against lane-pre-broadcast weights (no MXU, no im2col).
            avg = jnp.mean(x2d, axis=0, keepdims=True)             # (1, L)
            mx = jnp.max(x2d, axis=0, keepdims=True)               # (1, L)
            w = saw[j]                                             # (18, L)
            acc = sab[j]                                           # (1, L)
            for t in range(9):
                acc = acc + w[2 * t:2 * t + 1, :] * tap(avg, t)
                acc = acc + w[2 * t + 1:2 * t + 2, :] * tap(mx, t)
            return sigmoid(acc)                                    # (1, L)

        # ---- forward pass (Bblk images per grid step) ----
        x2d = x_ref[0]                                             # (Cin, L)

        a1 = spec_att(x2d, a1w1[...], a1b1[...], a1w2[...], a1b2[...])
        x3 = x2d * lane_expand(a1)
        x4 = spat_att(x3, 0) * x3

        x6 = jnp.maximum(conv3x3(x4, c1w[...], cb[0]), 0.0)        # conv1+bn1+relu
        x8 = jnp.maximum(conv3x3(x6, c25w[0], cb[1]), 0.0)         # conv2+bn2+relu
        x9 = conv3x3(x8, c25w[1], cb[2])                           # conv3+bn3

        se = lane_expand(spec_att(x9, sew1[0], seb1[0], sew2[0], seb2[0])) * x9
        sa = spat_att(se, 1) * se
        x10 = jnp.maximum(sa * x9 + x6, 0.0)

        x12 = jnp.maximum(conv3x3(x10, c25w[2], cb[3]), 0.0)       # conv4+bn4+relu
        x13 = conv3x3(x12, c25w[3], cb[4])                         # conv5+bn5

        se1 = lane_expand(spec_att(x13, sew1[1], seb1[1], sew2[1], seb2[1])) * x13
        sa1 = spat_att(se1, 2) * se1
        x14 = jnp.maximum(sa1 * x13 + x10, 0.0)

        # AvgPool2d(1) is the identity; conv6 (1x1) is a channel matmul.
        x15 = (jnp.dot(c6wt[...], x14, preferred_element_type=jnp.float32)
               + cb[5])                                            # (Co, L)

        # Final FC: one lane-dense MXU matmul. Build (Bblk, Co*HW) with the
        # torch NCHW flatten order (k = c*HW + s) via cheap lane-slices.
        rows = []
        for bb in range(Bblk):
            rows.append(jnp.concatenate(
                [x15[c:c + 1, bb * HW:(bb + 1) * HW] for c in range(Co)], axis=1))
        lhs = jnp.concatenate(rows, axis=0)                        # (Bblk, Co*HW)
        out_ref[0] = (jnp.dot(lhs, fcw[...], preferred_element_type=jnp.float32)
                      + fcb[...])                                  # (Bblk, NPAD)

    def _const_map(nd):
        return lambda b, _nd=nd: (0,) * _nd

    in_specs = [pl.BlockSpec((1, Cin, L), lambda b: (b, 0, 0))]
    in_specs += [pl.BlockSpec(a.shape, _const_map(a.ndim)) for a in plist]

    # Advisory cost estimate (convs + FC + attention, rough).
    flops = int(Bgrid * (2 * Co * 9 * Cin * L + 4 * 2 * Co * 9 * Co * L
                         + 2 * Co * Co * L + 2 * Bblk * Co * HW * NPAD
                         + 3 * 2 * 18 * L + 60 * Co * L))
    param_bytes = int(sum(int(np.prod(a.shape)) for a in plist) * 4)
    cost = pl.CostEstimate(
        flops=flops,
        transcendentals=int(Bgrid * (3 * L + 8 * (Cin + 2 * Co) * Bblk)),
        bytes_accessed=int(Bgrid * Cin * L * 4 + param_bytes
                           + Bgrid * Bblk * NPAD * 4))

    out = pl.pallas_call(
        kernel,
        out_shape=jax.ShapeDtypeStruct((Bgrid, Bblk, NPAD), jnp.float32),
        grid_spec=pltpu.PrefetchScalarGridSpec(
            num_scalar_prefetch=0,
            grid=(Bgrid,),
            in_specs=in_specs,
            out_specs=pl.BlockSpec((1, Bblk, NPAD), lambda b: (b, 0, 0)),
        ),
        compiler_params=pltpu.CompilerParams(
            dimension_semantics=("parallel",)),
        cost_estimate=cost,
    )(x_pack, *plist)
    return out.reshape(Bpad, NPAD)[:B, :NCLS]


def rssan_reference(x_nhwc, p):
    """Plain-JAX reference with identical math/layout (for validation)."""
    hi = jax.lax.Precision.HIGHEST

    def sg(v):
        return 1.0 / (1.0 + jnp.exp(-v))

    def conv(x, w, b):
        y = jax.lax.conv_general_dilated(
            x, w, (1, 1), ((1, 1), (1, 1)),
            dimension_numbers=("NHWC", "HWIO", "NHWC"), precision=hi)
        return y + b.reshape(1, 1, 1, -1)

    def spec(x, w1, b1, w2, b2):
        avg = jnp.mean(x, axis=(1, 2))
        mx = jnp.max(x, axis=(1, 2))

        def mlp(v):
            return sg(jnp.maximum(v @ w1 + b1, 0.0) @ w2 + b2)

        return sg(mlp(avg) + mlp(mx))[:, None, None, :]

    def spat(x, w, b):
        a = jnp.mean(x, axis=3, keepdims=True)
        m = jnp.max(x, axis=3, keepdims=True)
        return sg(conv(jnp.concatenate([a, m], axis=3), w, b))

    def bn(x, s, o):
        return x * s.reshape(1, 1, 1, -1) + o.reshape(1, 1, 1, -1)

    x3 = spec(x_nhwc, p["a1_w1"], p["a1_b1"], p["a1_w2"], p["a1_b2"]) * x_nhwc
    x4 = spat(x3, p["a2_w"], p["a2_b"]) * x3
    x5 = conv(x4, p["c1_w"], p["c1_b"])
    x6 = jnp.maximum(bn(x5, p["bn1_s"], p["bn1_o"]), 0.0)
    x7 = conv(x6, p["c2_w"], p["c2_b"])
    x8 = jnp.maximum(bn(x7, p["bn2_s"], p["bn2_o"]), 0.0)
    x9 = bn(conv(x8, p["c3_w"], p["c3_b"]), p["bn3_s"], p["bn3_o"])
    se = spec(x9, p["a3_w1"], p["a3_b1"], p["a3_w2"], p["a3_b2"]) * x9
    sa = spat(se, p["a4_w"], p["a4_b"]) * se
    x10 = jnp.maximum(sa * x9 + x6, 0.0)
    x11 = conv(x10, p["c4_w"], p["c4_b"])
    x12 = jnp.maximum(bn(x11, p["bn4_s"], p["bn4_o"]), 0.0)
    x13 = bn(conv(x12, p["c5_w"], p["c5_b"]), p["bn5_s"], p["bn5_o"])
    se1 = spec(x13, p["a5_w1"], p["a5_b1"], p["a5_w2"], p["a5_b2"]) * x13
    sa1 = spat(se1, p["a6_w"], p["a6_b"]) * se1
    x14 = jnp.maximum(sa1 * x13 + x10, 0.0)
    x15 = jnp.einsum("bhwc,cd->bhwd", x14, p["c6_w"],
                     precision=hi) + p["c6_b"].reshape(1, 1, 1, -1)
    B, H, W, Co = x15.shape
    flat = x15.reshape(B, H * W, Co)
    return jnp.einsum("bsc,nsc->bn", flat, p["fc_w"], precision=hi) + p["fc_b"]


if __name__ == "__main__":
    # Small shapes consistent with the module: in_chanels=16, out_chanel=8,
    # windows=8, feature_class=5, batch=2.
    B, Cin, H, W = 2, 16, 8, 8
    Co, NCLS = 8, 5

    key = jax.random.PRNGKey(0)
    kx, kp = jax.random.split(key)
    x_nchw = jax.random.normal(kx, (B, Cin, H, W), jnp.float32)  # PyTorch layout
    params = init_params(kp, Cin, Co, H, W, NCLS)

    x_nhwc = jnp.transpose(x_nchw, (0, 2, 3, 1))  # glue: NCHW -> NHWC

    out = jax.block_until_ready(rssan_pallas(x_nhwc, params))
    ref = jax.block_until_ready(rssan_reference(x_nhwc, params))

    np.testing.assert_allclose(np.asarray(out), np.asarray(ref),
                               rtol=5e-4, atol=5e-4)
    assert out.shape == (B, NCLS)
    print("KERNEL_OK")
</pallas_src>

<mosaic_0001>
module attributes {stable_mosaic.version = 11 : i64} {
  func.func @kernel(%arg0: i32, %arg1: memref<1x16x128xf32, #tpu.memory_space<vmem>>, %arg2: memref<2x16xf32, #tpu.memory_space<vmem>>, %arg3: memref<2x1xf32, #tpu.memory_space<vmem>>, %arg4: memref<16x2xf32, #tpu.memory_space<vmem>>, %arg5: memref<16x1xf32, #tpu.memory_space<vmem>>, %arg6: memref<2x1x8xf32, #tpu.memory_space<vmem>>, %arg7: memref<2x1x1xf32, #tpu.memory_space<vmem>>, %arg8: memref<2x8x1xf32, #tpu.memory_space<vmem>>, %arg9: memref<2x8x1xf32, #tpu.memory_space<vmem>>, %arg10: memref<3x18x128xf32, #tpu.memory_space<vmem>>, %arg11: memref<3x1x128xf32, #tpu.memory_space<vmem>>, %arg12: memref<8x144xf32, #tpu.memory_space<vmem>>, %arg13: memref<4x8x72xf32, #tpu.memory_space<vmem>>, %arg14: memref<8x8xf32, #tpu.memory_space<vmem>>, %arg15: memref<6x8x1xf32, #tpu.memory_space<vmem>>, %arg16: memref<512x128xf32, #tpu.memory_space<vmem>>, %arg17: memref<1x128xf32, #tpu.memory_space<vmem>>, %arg18: memref<9x128xf32, #tpu.memory_space<vmem>>, %arg19: memref<1x2x128xf32, #tpu.memory_space<vmem>>) attributes {dimension_semantics = [#tpu.dimension_semantics<parallel>], iteration_bounds = array<i64: 1>, scalar_prefetch = 0 : i64, scratch_operands = 0 : i64, tpu.core_type = #tpu.core_type<tc>, window_params = [{transform_indices = @transform_0, window_bounds = array<i64: 1, 16, 128>}, {pipeline_mode = #tpu.pipeline_mode<synchronous>, transform_indices = @transform_1, window_bounds = array<i64: 2, 16>}, {pipeline_mode = #tpu.pipeline_mode<synchronous>, transform_indices = @transform_2, window_bounds = array<i64: 2, 1>}, {pipeline_mode = #tpu.pipeline_mode<synchronous>, transform_indices = @transform_3, window_bounds = array<i64: 16, 2>}, {pipeline_mode = #tpu.pipeline_mode<synchronous>, transform_indices = @transform_4, window_bounds = array<i64: 16, 1>}, {pipeline_mode = #tpu.pipeline_mode<synchronous>, transform_indices = @transform_5, window_bounds = array<i64: 2, 1, 8>}, {pipeline_mode = #tpu.pipeline_mode<synchronous>, transform_indices = @transform_6, window_bounds = array<i64: 2, 1, 1>}, {pipeline_mode = #tpu.pipeline_mode<synchronous>, transform_indices = @transform_7, window_bounds = array<i64: 2, 8, 1>}, {pipeline_mode = #tpu.pipeline_mode<synchronous>, transform_indices = @transform_8, window_bounds = array<i64: 2, 8, 1>}, {pipeline_mode = #tpu.pipeline_mode<synchronous>, transform_indices = @transform_9, window_bounds = array<i64: 3, 18, 128>}, {pipeline_mode = #tpu.pipeline_mode<synchronous>, transform_indices = @transform_10, window_bounds = array<i64: 3, 1, 128>}, {pipeline_mode = #tpu.pipeline_mode<synchronous>, transform_indices = @transform_11, window_bounds = array<i64: 8, 144>}, {pipeline_mode = #tpu.pipeline_mode<synchronous>, transform_indices = @transform_12, window_bounds = array<i64: 4, 8, 72>}, {pipeline_mode = #tpu.pipeline_mode<synchronous>, transform_indices = @transform_13, window_bounds = array<i64: 8, 8>}, {pipeline_mode = #tpu.pipeline_mode<synchronous>, transform_indices = @transform_14, window_bounds = array<i64: 6, 8, 1>}, {pipeline_mode = #tpu.pipeline_mode<synchronous>, transform_indices = @transform_15, window_bounds = array<i64: 512, 128>}, {pipeline_mode = #tpu.pipeline_mode<synchronous>, transform_indices = @transform_16, window_bounds = array<i64: 1, 128>}, {pipeline_mode = #tpu.pipeline_mode<synchronous>, transform_indices = @transform_17, window_bounds = array<i64: 9, 128>}, {transform_indices = @transform_18, window_bounds = array<i64: 1, 2, 128>}]} {
    %c0 = arith.constant 0 : index
    %c0_0 = arith.constant 0 : index
    %0 = vector.load %arg18[%c0, %c0_0] : memref<9x128xf32, #tpu.memory_space<vmem>>, vector<9x128xf32>
    %c0_1 = arith.constant 0 : index
    %c0_2 = arith.constant 0 : index
    %c0_3 = arith.constant 0 : index
    %1 = vector.load %arg1[%c0_1, %c0_2, %c0_3] : memref<1x16x128xf32, #tpu.memory_space<vmem>>, vector<1x16x128xf32>
    %2 = vector.shape_cast %1 : vector<1x16x128xf32> to vector<16x128xf32>
    %c0_4 = arith.constant 0 : index
    %c0_5 = arith.constant 0 : index
    %3 = vector.load %arg2[%c0_4, %c0_5] : memref<2x16xf32, #tpu.memory_space<vmem>>, vector<2x16xf32>
    %c0_6 = arith.constant 0 : index
    %c0_7 = arith.constant 0 : index
    %4 = vector.load %arg3[%c0_6, %c0_7] : memref<2x1xf32, #tpu.memory_space<vmem>>, vector<2x1xf32>
    %c0_8 = arith.constant 0 : index
    %c0_9 = arith.constant 0 : index
    %5 = vector.load %arg4[%c0_8, %c0_9] : memref<16x2xf32, #tpu.memory_space<vmem>>, vector<16x2xf32>
    %c0_10 = arith.constant 0 : index
    %c0_11 = arith.constant 0 : index
    %6 = vector.load %arg5[%c0_10, %c0_11] : memref<16x1xf32, #tpu.memory_space<vmem>>, vector<16x1xf32>
    %7 = vector.extract_strided_slice %2 {offsets = [0, 0], sizes = [16, 64], strides = [1, 1]} : vector<16x128xf32> to vector<16x64xf32>
    %cst = arith.constant dense<0.000000e+00> : vector<16xf32>
    %8 = vector.multi_reduction <add>, %7, %cst [1] : vector<16x64xf32> to vector<16xf32>
    %9 = vector.shape_cast %8 : vector<16xf32> to vector<16x1xf32>
    %cst_12 = arith.constant 6.400000e+01 : f32
    %10 = vector.broadcast %cst_12 : f32 to vector<16x1xf32>
    %11 = arith.divf %9, %10 : vector<16x1xf32>
    %cst_13 = arith.constant dense<0xFF800000> : vector<16xf32>
    %12 = vector.multi_reduction <maximumf>, %7, %cst_13 [1] : vector<16x64xf32> to vector<16xf32>
    %13 = vector.shape_cast %12 : vector<16xf32> to vector<16x1xf32>
    %14 = vector.extract_strided_slice %2 {offsets = [0, 64], sizes = [16, 64], strides = [1, 1]} : vector<16x128xf32> to vector<16x64xf32>
    %cst_14 = arith.constant dense<0.000000e+00> : vector<16xf32>
    %15 = vector.multi_reduction <add>, %14, %cst_14 [1] : vector<16x64xf32> to vector<16xf32>
    %16 = vector.shape_cast %15 : vector<16xf32> to vector<16x1xf32>
    %cst_15 = arith.constant 6.400000e+01 : f32
    %17 = vector.broadcast %cst_15 : f32 to vector<16x1xf32>
    %18 = arith.divf %16, %17 : vector<16x1xf32>
    %cst_16 = arith.constant dense<0xFF800000> : vector<16xf32>
    %19 = vector.multi_reduction <maximumf>, %14, %cst_16 [1] : vector<16x64xf32> to vector<16xf32>
    %20 = vector.shape_cast %19 : vector<16xf32> to vector<16x1xf32>
    %21 = tpu.concatenate %11, %13, %18, %20 in 1 : vector<16x1xf32>, vector<16x1xf32>, vector<16x1xf32>, vector<16x1xf32> -> vector<16x4xf32>
    %cst_17 = arith.constant dense<0.000000e+00> : vector<2x4xf32>
    %22 = tpu.matmul %3, %21, %cst_17 {dimension_numbers = #tpu.dot_dimension_numbers<[1], [0], [0], [1], [0, 0, 1, 1], [], []>} : vector<2x16xf32>, vector<16x4xf32>, vector<2x4xf32> -> vector<2x4xf32>
    %23 = vector.broadcast %4 : vector<2x1xf32> to vector<2x4xf32>
    %24 = arith.addf %22, %23 : vector<2x4xf32>
    %cst_18 = arith.constant 0.000000e+00 : f32
    %25 = vector.broadcast %cst_18 : f32 to vector<2x4xf32>
    %26 = arith.maximumf %24, %25 : vector<2x4xf32>
    %cst_19 = arith.constant dense<0.000000e+00> : vector<16x4xf32>
    %27 = tpu.matmul %5, %26, %cst_19 {dimension_numbers = #tpu.dot_dimension_numbers<[1], [0], [0], [1], [0, 0, 1, 1], [], []>} : vector<16x2xf32>, vector<2x4xf32>, vector<16x4xf32> -> vector<16x4xf32>
    %28 = vector.broadcast %6 : vector<16x1xf32> to vector<16x4xf32>
    %29 = arith.addf %27, %28 : vector<16x4xf32>
    %cst_20 = arith.constant 5.000000e-01 : f32
    %30 = vector.broadcast %cst_20 : f32 to vector<16x4xf32>
    %31 = arith.mulf %30, %29 : vector<16x4xf32>
    %32 = math.tanh %31 : vector<16x4xf32>
    %cst_21 = arith.constant 5.000000e-01 : f32
    %33 = vector.broadcast %cst_21 : f32 to vector<16x4xf32>
    %34 = arith.mulf %33, %32 : vector<16x4xf32>
    %cst_22 = arith.constant 5.000000e-01 : f32
    %35 = vector.broadcast %cst_22 : f32 to vector<16x4xf32>
    %36 = arith.addf %34, %35 : vector<16x4xf32>
    %37 = vector.extract_strided_slice %36 {offsets = [0, 0], sizes = [16, 1], strides = [1, 1]} : vector<16x4xf32> to vector<16x1xf32>
    %38 = vector.extract_strided_slice %36 {offsets = [0, 1], sizes = [16, 1], strides = [1, 1]} : vector<16x4xf32> to vector<16x1xf32>
    %39 = arith.addf %37, %38 : vector<16x1xf32>
    %cst_23 = arith.constant 5.000000e-01 : f32
    %40 = vector.broadcast %cst_23 : f32 to vector<16x1xf32>
    %41 = arith.mulf %40, %39 : vector<16x1xf32>
    %42 = math.tanh %41 : vector<16x1xf32>
    %cst_24 = arith.constant 5.000000e-01 : f32
    %43 = vector.broadcast %cst_24 : f32 to vector<16x1xf32>
    %44 = arith.mulf %43, %42 : vector<16x1xf32>
    %cst_25 = arith.constant 5.000000e-01 : f32
    %45 = vector.broadcast %cst_25 : f32 to vector<16x1xf32>
    %46 = arith.addf %44, %45 : vector<16x1xf32>
    %47 = vector.extract_strided_slice %36 {offsets = [0, 2], sizes = [16, 1], strides = [1, 1]} : vector<16x4xf32> to vector<16x1xf32>
    %48 = vector.extract_strided_slice %36 {offsets = [0, 3], sizes = [16, 1], strides = [1, 1]} : vector<16x4xf32> to vector<16x1xf32>
    %49 = arith.addf %47, %48 : vector<16x1xf32>
    %cst_26 = arith.constant 5.000000e-01 : f32
    %50 = vector.broadcast %cst_26 : f32 to vector<16x1xf32>
    %51 = arith.mulf %50, %49 : vector<16x1xf32>
    %52 = math.tanh %51 : vector<16x1xf32>
    %cst_27 = arith.constant 5.000000e-01 : f32
    %53 = vector.broadcast %cst_27 : f32 to vector<16x1xf32>
    %54 = arith.mulf %53, %52 : vector<16x1xf32>
    %cst_28 = arith.constant 5.000000e-01 : f32
    %55 = vector.broadcast %cst_28 : f32 to vector<16x1xf32>
    %56 = arith.addf %54, %55 : vector<16x1xf32>
    %57 = tpu.concatenate %46, %56 in 1 : vector<16x1xf32>, vector<16x1xf32> -> vector<16x2xf32>
    %58 = vector.extract_strided_slice %57 {offsets = [0, 0], sizes = [16, 1], strides = [1, 1]} : vector<16x2xf32> to vector<16x1xf32>
    %59 = vector.shape_cast %58 : vector<16x1xf32> to vector<16x1xf32>
    %60 = vector.broadcast %59 : vector<16x1xf32> to vector<16x64xf32>
    %61 = vector.extract_strided_slice %57 {offsets = [0, 1], sizes = [16, 1], strides = [1, 1]} : vector<16x2xf32> to vector<16x1xf32>
    %62 = vector.shape_cast %61 : vector<16x1xf32> to vector<16x1xf32>
    %63 = vector.broadcast %62 : vector<16x1xf32> to vector<16x64xf32>
    %64 = tpu.concatenate %60, %63 in 1 : vector<16x64xf32>, vector<16x64xf32> -> vector<16x128xf32>
    %65 = arith.mulf %2, %64 : vector<16x128xf32>
    %cst_29 = arith.constant dense<0.000000e+00> : vector<128xf32>
    %66 = vector.multi_reduction <add>, %65, %cst_29 [0] : vector<16x128xf32> to vector<128xf32>
    %67 = vector.shape_cast %66 : vector<128xf32> to vector<1x128xf32>
    %cst_30 = arith.constant 1.600000e+01 : f32
    %68 = vector.broadcast %cst_30 : f32 to vector<1x128xf32>
    %69 = arith.divf %67, %68 : vector<1x128xf32>
    %cst_31 = arith.constant dense<0xFF800000> : vector<128xf32>
    %70 = vector.multi_reduction <maximumf>, %65, %cst_31 [0] : vector<16x128xf32> to vector<128xf32>
    %71 = vector.shape_cast %70 : vector<128xf32> to vector<1x128xf32>
    %c0_32 = arith.constant 0 : index
    %c0_33 = arith.constant 0 : index
    %c0_34 = arith.constant 0 : index
    %72 = vector.load %arg10[%c0_32, %c0_33, %c0_34] : memref<3x18x128xf32, #tpu.memory_space<vmem>>, vector<1x18x128xf32>
    %73 = vector.shape_cast %72 : vector<1x18x128xf32> to vector<18x128xf32>
    %c0_35 = arith.constant 0 : index
    %c0_36 = arith.constant 0 : index
    %c0_37 = arith.constant 0 : index
    %74 = vector.load %arg11[%c0_35, %c0_36, %c0_37] : memref<3x1x128xf32, #tpu.memory_space<vmem>>, vector<1x1x128xf32>
    %75 = vector.shape_cast %74 : vector<1x1x128xf32> to vector<1x128xf32>
    %76 = vector.extract_strided_slice %73 {offsets = [0, 0], sizes = [1, 128], strides = [1, 1]} : vector<18x128xf32> to vector<1x128xf32>
    %c9_i32 = arith.constant 9 : i32
    %77 = tpu.dynamic_rotate %69 by %c9_i32 dim 1 : vector<1x128xf32>, i32 -> vector<1x128xf32>
    %78 = vector.extract_strided_slice %0 {offsets = [0, 0], sizes = [1, 128], strides = [1, 1]} : vector<9x128xf32> to vector<1x128xf32>
    %79 = arith.mulf %77, %78 : vector<1x128xf32>
    %80 = arith.mulf %76, %79 : vector<1x128xf32>
    %81 = arith.addf %75, %80 : vector<1x128xf32>
    %82 = vector.extract_strided_slice %73 {offsets = [1, 0], sizes = [1, 128], strides = [1, 1]} : vector<18x128xf32> to vector<1x128xf32>
    %c9_i32_38 = arith.constant 9 : i32
    %83 = tpu.dynamic_rotate %71 by %c9_i32_38 dim 1 : vector<1x128xf32>, i32 -> vector<1x128xf32>
    %84 = vector.extract_strided_slice %0 {offsets = [0, 0], sizes = [1, 128], strides = [1, 1]} : vector<9x128xf32> to vector<1x128xf32>
    %85 = arith.mulf %83, %84 : vector<1x128xf32>
    %86 = arith.mulf %82, %85 : vector<1x128xf32>
    %87 = arith.addf %81, %86 : vector<1x128xf32>
    %88 = vector.extract_strided_slice %73 {offsets = [2, 0], sizes = [1, 128], strides = [1, 1]} : vector<18x128xf32> to vector<1x128xf32>
    %c8_i32 = arith.constant 8 : i32
    %89 = tpu.dynamic_rotate %69 by %c8_i32 dim 1 : vector<1x128xf32>, i32 -> vector<1x128xf32>
    %90 = vector.extract_strided_slice %0 {offsets = [1, 0], sizes = [1, 128], strides = [1, 1]} : vector<9x128xf32> to vector<1x128xf32>
    %91 = arith.mulf %89, %90 : vector<1x128xf32>
    %92 = arith.mulf %88, %91 : vector<1x128xf32>
    %93 = arith.addf %87, %92 : vector<1x128xf32>
    %94 = vector.extract_strided_slice %73 {offsets = [3, 0], sizes = [1, 128], strides = [1, 1]} : vector<18x128xf32> to vector<1x128xf32>
    %c8_i32_39 = arith.constant 8 : i32
    %95 = tpu.dynamic_rotate %71 by %c8_i32_39 dim 1 : vector<1x128xf32>, i32 -> vector<1x128xf32>
    %96 = vector.extract_strided_slice %0 {offsets = [1, 0], sizes = [1, 128], strides = [1, 1]} : vector<9x128xf32> to vector<1x128xf32>
    %97 = arith.mulf %95, %96 : vector<1x128xf32>
    %98 = arith.mulf %94, %97 : vector<1x128xf32>
    %99 = arith.addf %93, %98 : vector<1x128xf32>
    %100 = vector.extract_strided_slice %73 {offsets = [4, 0], sizes = [1, 128], strides = [1, 1]} : vector<18x128xf32> to vector<1x128xf32>
    %c7_i32 = arith.constant 7 : i32
    %101 = tpu.dynamic_rotate %69 by %c7_i32 dim 1 : vector<1x128xf32>, i32 -> vector<1x128xf32>
    %102 = vector.extract_strided_slice %0 {offsets = [2, 0], sizes = [1, 128], strides = [1, 1]} : vector<9x128xf32> to vector<1x128xf32>
    %103 = arith.mulf %101, %102 : vector<1x128xf32>
    %104 = arith.mulf %100, %103 : vector<1x128xf32>
    %105 = arith.addf %99, %104 : vector<1x128xf32>
    %106 = vector.extract_strided_slice %73 {offsets = [5, 0], sizes = [1, 128], strides = [1, 1]} : vector<18x128xf32> to vector<1x128xf32>
    %c7_i32_40 = arith.constant 7 : i32
    %107 = tpu.dynamic_rotate %71 by %c7_i32_40 dim 1 : vector<1x128xf32>, i32 -> vector<1x128xf32>
    %108 = vector.extract_strided_slice %0 {offsets = [2, 0], sizes = [1, 128], strides = [1, 1]} : vector<9x128xf32> to vector<1x128xf32>
    %109 = arith.mulf %107, %108 : vector<1x128xf32>
    %110 = arith.mulf %106, %109 : vector<1x128xf32>
    %111 = arith.addf %105, %110 : vector<1x128xf32>
    %112 = vector.extract_strided_slice %73 {offsets = [6, 0], sizes = [1, 128], strides = [1, 1]} : vector<18x128xf32> to vector<1x128xf32>
    %c1_i32 = arith.constant 1 : i32
    %113 = tpu.dynamic_rotate %69 by %c1_i32 dim 1 : vector<1x128xf32>, i32 -> vector<1x128xf32>
    %114 = vector.extract_strided_slice %0 {offsets = [3, 0], sizes = [1, 128], strides = [1, 1]} : vector<9x128xf32> to vector<1x128xf32>
    %115 = arith.mulf %113, %114 : vector<1x128xf32>
    %116 = arith.mulf %112, %115 : vector<1x128xf32>
    %117 = arith.addf %111, %116 : vector<1x128xf32>
    %118 = vector.extract_strided_slice %73 {offsets = [7, 0], sizes = [1, 128], strides = [1, 1]} : vector<18x128xf32> to vector<1x128xf32>
    %c1_i32_41 = arith.constant 1 : i32
    %119 = tpu.dynamic_rotate %71 by %c1_i32_41 dim 1 : vector<1x128xf32>, i32 -> vector<1x128xf32>
    %120 = vector.extract_strided_slice %0 {offsets = [3, 0], sizes = [1, 128], strides = [1, 1]} : vector<9x128xf32> to vector<1x128xf32>
    %121 = arith.mulf %119, %120 : vector<1x128xf32>
    %122 = arith.mulf %118, %121 : vector<1x128xf32>
    %123 = arith.addf %117, %122 : vector<1x128xf32>
    %124 = vector.extract_strided_slice %73 {offsets = [8, 0], sizes = [1, 128], strides = [1, 1]} : vector<18x128xf32> to vector<1x128xf32>
    %125 = arith.mulf %124, %69 : vector<1x128xf32>
    %126 = arith.addf %123, %125 : vector<1x128xf32>
    %127 = vector.extract_strided_slice %73 {offsets = [9, 0], sizes = [1, 128], strides = [1, 1]} : vector<18x128xf32> to vector<1x128xf32>
    %128 = arith.mulf %127, %71 : vector<1x128xf32>
    %129 = arith.addf %126, %128 : vector<1x128xf32>
    %130 = vector.extract_strided_slice %73 {offsets = [10, 0], sizes = [1, 128], strides = [1, 1]} : vector<18x128xf32> to vector<1x128xf32>
    %c127_i32 = arith.constant 127 : i32
    %131 = tpu.dynamic_rotate %69 by %c127_i32 dim 1 : vector<1x128xf32>, i32 -> vector<1x128xf32>
    %132 = vector.extract_strided_slice %0 {offsets = [5, 0], sizes = [1, 128], strides = [1, 1]} : vector<9x128xf32> to vector<1x128xf32>
    %133 = arith.mulf %131, %132 : vector<1x128xf32>
    %134 = arith.mulf %130, %133 : vector<1x128xf32>
    %135 = arith.addf %129, %134 : vector<1x128xf32>
    %136 = vector.extract_strided_slice %73 {offsets = [11, 0], sizes = [1, 128], strides = [1, 1]} : vector<18x128xf32> to vector<1x128xf32>
    %c127_i32_42 = arith.constant 127 : i32
    %137 = tpu.dynamic_rotate %71 by %c127_i32_42 dim 1 : vector<1x128xf32>, i32 -> vector<1x128xf32>
    %138 = vector.extract_strided_slice %0 {offsets = [5, 0], sizes = [1, 128], strides = [1, 1]} : vector<9x128xf32> to vector<1x128xf32>
    %139 = arith.mulf %137, %138 : vector<1x128xf32>
    %140 = arith.mulf %136, %139 : vector<1x128xf32>
    %141 = arith.addf %135, %140 : vector<1x128xf32>
    %142 = vector.extract_strided_slice %73 {offsets = [12, 0], sizes = [1, 128], strides = [1, 1]} : vector<18x128xf32> to vector<1x128xf32>
    %c121_i32 = arith.constant 121 : i32
    %143 = tpu.dynamic_rotate %69 by %c121_i32 dim 1 : vector<1x128xf32>, i32 -> vector<1x128xf32>
    %144 = vector.extract_strided_slice %0 {offsets = [6, 0], sizes = [1, 128], strides = [1, 1]} : vector<9x128xf32> to vector<1x128xf32>
    %145 = arith.mulf %143, %144 : vector<1x128xf32>
    %146 = arith.mulf %142, %145 : vector<1x128xf32>
    %147 = arith.addf %141, %146 : vector<1x128xf32>
    %148 = vector.extract_strided_slice %73 {offsets = [13, 0], sizes = [1, 128], strides = [1, 1]} : vector<18x128xf32> to vector<1x128xf32>
    %c121_i32_43 = arith.constant 121 : i32
    %149 = tpu.dynamic_rotate %71 by %c121_i32_43 dim 1 : vector<1x128xf32>, i32 -> vector<1x128xf32>
    %150 = vector.extract_strided_slice %0 {offsets = [6, 0], sizes = [1, 128], strides = [1, 1]} : vector<9x128xf32> to vector<1x128xf32>
    %151 = arith.mulf %149, %150 : vector<1x128xf32>
    %152 = arith.mulf %148, %151 : vector<1x128xf32>
    %153 = arith.addf %147, %152 : vector<1x128xf32>
    %154 = vector.extract_strided_slice %73 {offsets = [14, 0], sizes = [1, 128], strides = [1, 1]} : vector<18x128xf32> to vector<1x128xf32>
    %c120_i32 = arith.constant 120 : i32
    %155 = tpu.dynamic_rotate %69 by %c120_i32 dim 1 : vector<1x128xf32>, i32 -> vector<1x128xf32>
    %156 = vector.extract_strided_slice %0 {offsets = [7, 0], sizes = [1, 128], strides = [1, 1]} : vector<9x128xf32> to vector<1x128xf32>
    %157 = arith.mulf %155, %156 : vector<1x128xf32>
    %158 = arith.mulf %154, %157 : vector<1x128xf32>
    %159 = arith.addf %153, %158 : vector<1x128xf32>
    %160 = vector.extract_strided_slice %73 {offsets = [15, 0], sizes = [1, 128], strides = [1, 1]} : vector<18x128xf32> to vector<1x128xf32>
    %c120_i32_44 = arith.constant 120 : i32
    %161 = tpu.dynamic_rotate %71 by %c120_i32_44 dim 1 : vector<1x128xf32>, i32 -> vector<1x128xf32>
    %162 = vector.extract_strided_slice %0 {offsets = [7, 0], sizes = [1, 128], strides = [1, 1]} : vector<9x128xf32> to vector<1x128xf32>
    %163 = arith.mulf %161, %162 : vector<1x128xf32>
    %164 = arith.mulf %160, %163 : vector<1x128xf32>
    %165 = arith.addf %159, %164 : vector<1x128xf32>
    %166 = vector.extract_strided_slice %73 {offsets = [16, 0], sizes = [1, 128], strides = [1, 1]} : vector<18x128xf32> to vector<1x128xf32>
    %c119_i32 = arith.constant 119 : i32
    %167 = tpu.dynamic_rotate %69 by %c119_i32 dim 1 : vector<1x128xf32>, i32 -> vector<1x128xf32>
    %168 = vector.extract_strided_slice %0 {offsets = [8, 0], sizes = [1, 128], strides = [1, 1]} : vector<9x128xf32> to vector<1x128xf32>
    %169 = arith.mulf %167, %168 : vector<1x128xf32>
    %170 = arith.mulf %166, %169 : vector<1x128xf32>
    %171 = arith.addf %165, %170 : vector<1x128xf32>
    %172 = vector.extract_strided_slice %73 {offsets = [17, 0], sizes = [1, 128], strides = [1, 1]} : vector<18x128xf32> to vector<1x128xf32>
    %c119_i32_45 = arith.constant 119 : i32
    %173 = tpu.dynamic_rotate %71 by %c119_i32_45 dim 1 : vector<1x128xf32>, i32 -> vector<1x128xf32>
    %174 = vector.extract_strided_slice %0 {offsets = [8, 0], sizes = [1, 128], strides = [1, 1]} : vector<9x128xf32> to vector<1x128xf32>
    %175 = arith.mulf %173, %174 : vector<1x128xf32>
    %176 = arith.mulf %172, %175 : vector<1x128xf32>
    %177 = arith.addf %171, %176 : vector<1x128xf32>
    %cst_46 = arith.constant 5.000000e-01 : f32
    %178 = vector.broadcast %cst_46 : f32 to vector<1x128xf32>
    %179 = arith.mulf %178, %177 : vector<1x128xf32>
    %180 = math.tanh %179 : vector<1x128xf32>
    %cst_47 = arith.constant 5.000000e-01 : f32
    %181 = vector.broadcast %cst_47 : f32 to vector<1x128xf32>
    %182 = arith.mulf %181, %180 : vector<1x128xf32>
    %cst_48 = arith.constant 5.000000e-01 : f32
    %183 = vector.broadcast %cst_48 : f32 to vector<1x128xf32>
    %184 = arith.addf %182, %183 : vector<1x128xf32>
    %185 = vector.broadcast %184 : vector<1x128xf32> to vector<16x128xf32>
    %186 = arith.mulf %185, %65 : vector<16x128xf32>
    %c0_49 = arith.constant 0 : index
    %c0_50 = arith.constant 0 : index
    %187 = vector.load %arg12[%c0_49, %c0_50] : memref<8x144xf32, #tpu.memory_space<vmem>>, vector<8x144xf32>
    %c0_51 = arith.constant 0 : index
    %c0_52 = arith.constant 0 : index
    %c0_53 = arith.constant 0 : index
    %188 = vector.load %arg15[%c0_51, %c0_52, %c0_53] : memref<6x8x1xf32, #tpu.memory_space<vmem>>, vector<1x8x1xf32>
    %189 = vector.shape_cast %188 : vector<1x8x1xf32> to vector<8x1xf32>
    %c9_i32_54 = arith.constant 9 : i32
    %190 = tpu.dynamic_rotate %186 by %c9_i32_54 dim 1 : vector<16x128xf32>, i32 -> vector<16x128xf32>
    %191 = vector.extract_strided_slice %0 {offsets = [0, 0], sizes = [1, 128], strides = [1, 1]} : vector<9x128xf32> to vector<1x128xf32>
    %192 = vector.broadcast %191 : vector<1x128xf32> to vector<16x128xf32>
    %193 = arith.mulf %190, %192 : vector<16x128xf32>
    %c8_i32_55 = arith.constant 8 : i32
    %194 = tpu.dynamic_rotate %186 by %c8_i32_55 dim 1 : vector<16x128xf32>, i32 -> vector<16x128xf32>
    %195 = vector.extract_strided_slice %0 {offsets = [1, 0], sizes = [1, 128], strides = [1, 1]} : vector<9x128xf32> to vector<1x128xf32>
    %196 = vector.broadcast %195 : vector<1x128xf32> to vector<16x128xf32>
    %197 = arith.mulf %194, %196 : vector<16x128xf32>
    %c7_i32_56 = arith.constant 7 : i32
    %198 = tpu.dynamic_rotate %186 by %c7_i32_56 dim 1 : vector<16x128xf32>, i32 -> vector<16x128xf32>
    %199 = vector.extract_strided_slice %0 {offsets = [2, 0], sizes = [1, 128], strides = [1, 1]} : vector<9x128xf32> to vector<1x128xf32>
    %200 = vector.broadcast %199 : vector<1x128xf32> to vector<16x128xf32>
    %201 = arith.mulf %198, %200 : vector<16x128xf32>
    %c1_i32_57 = arith.constant 1 : i32
    %202 = tpu.dynamic_rotate %186 by %c1_i32_57 dim 1 : vector<16x128xf32>, i32 -> vector<16x128xf32>
    %203 = vector.extract_strided_slice %0 {offsets = [3, 0], sizes = [1, 128], strides = [1, 1]} : vector<9x128xf32> to vector<1x128xf32>
    %204 = vector.broadcast %203 : vector<1x128xf32> to vector<16x128xf32>
    %205 = arith.mulf %202, %204 : vector<16x128xf32>
    %c127_i32_58 = arith.constant 127 : i32
    %206 = tpu.dynamic_rotate %186 by %c127_i32_58 dim 1 : vector<16x128xf32>, i32 -> vector<16x128xf32>
    %207 = vector.extract_strided_slice %0 {offsets = [5, 0], sizes = [1, 128], strides = [1, 1]} : vector<9x128xf32> to vector<1x128xf32>
    %208 = vector.broadcast %207 : vector<1x128xf32> to vector<16x128xf32>
    %209 = arith.mulf %206, %208 : vector<16x128xf32>
    %c121_i32_59 = arith.constant 121 : i32
    %210 = tpu.dynamic_rotate %186 by %c121_i32_59 dim 1 : vector<16x128xf32>, i32 -> vector<16x128xf32>
    %211 = vector.extract_strided_slice %0 {offsets = [6, 0], sizes = [1, 128], strides = [1, 1]} : vector<9x128xf32> to vector<1x128xf32>
    %212 = vector.broadcast %211 : vector<1x128xf32> to vector<16x128xf32>
    %213 = arith.mulf %210, %212 : vector<16x128xf32>
    %c120_i32_60 = arith.constant 120 : i32
    %214 = tpu.dynamic_rotate %186 by %c120_i32_60 dim 1 : vector<16x128xf32>, i32 -> vector<16x128xf32>
    %215 = vector.extract_strided_slice %0 {offsets = [7, 0], sizes = [1, 128], strides = [1, 1]} : vector<9x128xf32> to vector<1x128xf32>
    %216 = vector.broadcast %215 : vector<1x128xf32> to vector<16x128xf32>
    %217 = arith.mulf %214, %216 : vector<16x128xf32>
    %c119_i32_61 = arith.constant 119 : i32
    %218 = tpu.dynamic_rotate %186 by %c119_i32_61 dim 1 : vector<16x128xf32>, i32 -> vector<16x128xf32>
    %219 = vector.extract_strided_slice %0 {offsets = [8, 0], sizes = [1, 128], strides = [1, 1]} : vector<9x128xf32> to vector<1x128xf32>
    %220 = vector.broadcast %219 : vector<1x128xf32> to vector<16x128xf32>
    %221 = arith.mulf %218, %220 : vector<16x128xf32>
    %222 = tpu.concatenate %193, %197, %201, %205, %186, %209, %213, %217, %221 in 0 : vector<16x128xf32>, vector<16x128xf32>, vector<16x128xf32>, vector<16x128xf32>, vector<16x128xf32>, vector<16x128xf32>, vector<16x128xf32>, vector<16x128xf32>, vector<16x128xf32> -> vector<144x128xf32>
    %cst_62 = arith.constant dense<0.000000e+00> : vector<8x128xf32>
    %223 = tpu.matmul %187, %222, %cst_62 {dimension_numbers = #tpu.dot_dimension_numbers<[1], [0], [0], [1], [0, 0, 1, 1], [], []>} : vector<8x144xf32>, vector<144x128xf32>, vector<8x128xf32> -> vector<8x128xf32>
    %224 = vector.broadcast %189 : vector<8x1xf32> to vector<8x128xf32>
    %225 = arith.addf %223, %224 : vector<8x128xf32>
    %cst_63 = arith.constant 0.000000e+00 : f32
    %226 = vector.broadcast %cst_63 : f32 to vector<8x128xf32>
    %227 = arith.maximumf %225, %226 : vector<8x128xf32>
    %c0_64 = arith.constant 0 : index
    %c0_65 = arith.constant 0 : index
    %c0_66 = arith.constant 0 : index
    %228 = vector.load %arg13[%c0_64, %c0_65, %c0_66] : memref<4x8x72xf32, #tpu.memory_space<vmem>>, vector<1x8x72xf32>
    %229 = vector.shape_cast %228 : vector<1x8x72xf32> to vector<8x72xf32>
    %c1 = arith.constant 1 : index
    %c0_67 = arith.constant 0 : index
    %c0_68 = arith.constant 0 : index
    %230 = vector.load %arg15[%c1, %c0_67, %c0_68] : memref<6x8x1xf32, #tpu.memory_space<vmem>>, vector<1x8x1xf32>
    %231 = vector.shape_cast %230 : vector<1x8x1xf32> to vector<8x1xf32>
    %c9_i32_69 = arith.constant 9 : i32
    %232 = tpu.dynamic_rotate %227 by %c9_i32_69 dim 1 : vector<8x128xf32>, i32 -> vector<8x128xf32>
    %233 = vector.extract_strided_slice %0 {offsets = [0, 0], sizes = [1, 128], strides = [1, 1]} : vector<9x128xf32> to vector<1x128xf32>
    %234 = vector.broadcast %233 : vector<1x128xf32> to vector<8x128xf32>
    %235 = arith.mulf %232, %234 : vector<8x128xf32>
    %c8_i32_70 = arith.constant 8 : i32
    %236 = tpu.dynamic_rotate %227 by %c8_i32_70 dim 1 : vector<8x128xf32>, i32 -> vector<8x128xf32>
    %237 = vector.extract_strided_slice %0 {offsets = [1, 0], sizes = [1, 128], strides = [1, 1]} : vector<9x128xf32> to vector<1x128xf32>
    %238 = vector.broadcast %237 : vector<1x128xf32> to vector<8x128xf32>
    %239 = arith.mulf %236, %238 : vector<8x128xf32>
    %c7_i32_71 = arith.constant 7 : i32
    %240 = tpu.dynamic_rotate %227 by %c7_i32_71 dim 1 : vector<8x128xf32>, i32 -> vector<8x128xf32>
    %241 = vector.extract_strided_slice %0 {offsets = [2, 0], sizes = [1, 128], strides = [1, 1]} : vector<9x128xf32> to vector<1x128xf32>
    %242 = vector.broadcast %241 : vector<1x128xf32> to vector<8x128xf32>
    %243 = arith.mulf %240, %242 : vector<8x128xf32>
    %c1_i32_72 = arith.constant 1 : i32
    %244 = tpu.dynamic_rotate %227 by %c1_i32_72 dim 1 : vector<8x128xf32>, i32 -> vector<8x128xf32>
    %245 = vector.extract_strided_slice %0 {offsets = [3, 0], sizes = [1, 128], strides = [1, 1]} : vector<9x128xf32> to vector<1x128xf32>
    %246 = vector.broadcast %245 : vector<1x128xf32> to vector<8x128xf32>
    %247 = arith.mulf %244, %246 : vector<8x128xf32>
    %c127_i32_73 = arith.constant 127 : i32
    %248 = tpu.dynamic_rotate %227 by %c127_i32_73 dim 1 : vector<8x128xf32>, i32 -> vector<8x128xf32>
    %249 = vector.extract_strided_slice %0 {offsets = [5, 0], sizes = [1, 128], strides = [1, 1]} : vector<9x128xf32> to vector<1x128xf32>
    %250 = vector.broadcast %249 : vector<1x128xf32> to vector<8x128xf32>
    %251 = arith.mulf %248, %250 : vector<8x128xf32>
    %c121_i32_74 = arith.constant 121 : i32
    %252 = tpu.dynamic_rotate %227 by %c121_i32_74 dim 1 : vector<8x128xf32>, i32 -> vector<8x128xf32>
    %253 = vector.extract_strided_slice %0 {offsets = [6, 0], sizes = [1, 128], strides = [1, 1]} : vector<9x128xf32> to vector<1x128xf32>
    %254 = vector.broadcast %253 : vector<1x128xf32> to vector<8x128xf32>
    %255 = arith.mulf %252, %254 : vector<8x128xf32>
    %c120_i32_75 = arith.constant 120 : i32
    %256 = tpu.dynamic_rotate %227 by %c120_i32_75 dim 1 : vector<8x128xf32>, i32 -> vector<8x128xf32>
    %257 = vector.extract_strided_slice %0 {offsets = [7, 0], sizes = [1, 128], strides = [1, 1]} : vector<9x128xf32> to vector<1x128xf32>
    %258 = vector.broadcast %257 : vector<1x128xf32> to vector<8x128xf32>
    %259 = arith.mulf %256, %258 : vector<8x128xf32>
    %c119_i32_76 = arith.constant 119 : i32
    %260 = tpu.dynamic_rotate %227 by %c119_i32_76 dim 1 : vector<8x128xf32>, i32 -> vector<8x128xf32>
    %261 = vector.extract_strided_slice %0 {offsets = [8, 0], sizes = [1, 128], strides = [1, 1]} : vector<9x128xf32> to vector<1x128xf32>
    %262 = vector.broadcast %261 : vector<1x128xf32> to vector<8x128xf32>
    %263 = arith.mulf %260, %262 : vector<8x128xf32>
    %264 = tpu.concatenate %235, %239, %243, %247, %227, %251, %255, %259, %263 in 0 : vector<8x128xf32>, vector<8x128xf32>, vector<8x128xf32>, vector<8x128xf32>, vector<8x128xf32>, vector<8x128xf32>, vector<8x128xf32>, vector<8x128xf32>, vector<8x128xf32> -> vector<72x128xf32>
    %cst_77 = arith.constant dense<0.000000e+00> : vector<8x128xf32>
    %265 = tpu.matmul %229, %264, %cst_77 {dimension_numbers = #tpu.dot_dimension_numbers<[1], [0], [0], [1], [0, 0, 1, 1], [], []>} : vector<8x72xf32>, vector<72x128xf32>, vector<8x128xf32> -> vector<8x128xf32>
    %266 = vector.broadcast %231 : vector<8x1xf32> to vector<8x128xf32>
    %267 = arith.addf %265, %266 : vector<8x128xf32>
    %cst_78 = arith.constant 0.000000e+00 : f32
    %268 = vector.broadcast %cst_78 : f32 to vector<8x128xf32>
    %269 = arith.maximumf %267, %268 : vector<8x128xf32>
    %c1_79 = arith.constant 1 : index
    %c0_80 = arith.constant 0 : index
    %c0_81 = arith.constant 0 : index
    %270 = vector.load %arg13[%c1_79, %c0_80, %c0_81] : memref<4x8x72xf32, #tpu.memory_space<vmem>>, vector<1x8x72xf32>
    %271 = vector.shape_cast %270 : vector<1x8x72xf32> to vector<8x72xf32>
    %c2 = arith.constant 2 : index
    %c0_82 = arith.constant 0 : index
    %c0_83 = arith.constant 0 : index
    %272 = vector.load %arg15[%c2, %c0_82, %c0_83] : memref<6x8x1xf32, #tpu.memory_space<vmem>>, vector<1x8x1xf32>
    %273 = vector.shape_cast %272 : vector<1x8x1xf32> to vector<8x1xf32>
    %c9_i32_84 = arith.constant 9 : i32
    %274 = tpu.dynamic_rotate %269 by %c9_i32_84 dim 1 : vector<8x128xf32>, i32 -> vector<8x128xf32>
    %275 = vector.extract_strided_slice %0 {offsets = [0, 0], sizes = [1, 128], strides = [1, 1]} : vector<9x128xf32> to vector<1x128xf32>
    %276 = vector.broadcast %275 : vector<1x128xf32> to vector<8x128xf32>
    %277 = arith.mulf %274, %276 : vector<8x128xf32>
    %c8_i32_85 = arith.constant 8 : i32
    %278 = tpu.dynamic_rotate %269 by %c8_i32_85 dim 1 : vector<8x128xf32>, i32 -> vector<8x128xf32>
    %279 = vector.extract_strided_slice %0 {offsets = [1, 0], sizes = [1, 128], strides = [1, 1]} : vector<9x128xf32> to vector<1x128xf32>
    %280 = vector.broadcast %279 : vector<1x128xf32> to vector<8x128xf32>
    %281 = arith.mulf %278, %280 : vector<8x128xf32>
    %c7_i32_86 = arith.constant 7 : i32
    %282 = tpu.dynamic_rotate %269 by %c7_i32_86 dim 1 : vector<8x128xf32>, i32 -> vector<8x128xf32>
    %283 = vector.extract_strided_slice %0 {offsets = [2, 0], sizes = [1, 128], strides = [1, 1]} : vector<9x128xf32> to vector<1x128xf32>
    %284 = vector.broadcast %283 : vector<1x128xf32> to vector<8x128xf32>
    %285 = arith.mulf %282, %284 : vector<8x128xf32>
    %c1_i32_87 = arith.constant 1 : i32
    %286 = tpu.dynamic_rotate %269 by %c1_i32_87 dim 1 : vector<8x128xf32>, i32 -> vector<8x128xf32>
    %287 = vector.extract_strided_slice %0 {offsets = [3, 0], sizes = [1, 128], strides = [1, 1]} : vector<9x128xf32> to vector<1x128xf32>
    %288 = vector.broadcast %287 : vector<1x128xf32> to vector<8x128xf32>
    %289 = arith.mulf %286, %288 : vector<8x128xf32>
    %c127_i32_88 = arith.constant 127 : i32
    %290 = tpu.dynamic_rotate %269 by %c127_i32_88 dim 1 : vector<8x128xf32>, i32 -> vector<8x128xf32>
    %291 = vector.extract_strided_slice %0 {offsets = [5, 0], sizes = [1, 128], strides = [1, 1]} : vector<9x128xf32> to vector<1x128xf32>
    %292 = vector.broadcast %291 : vector<1x128xf32> to vector<8x128xf32>
    %293 = arith.mulf %290, %292 : vector<8x128xf32>
    %c121_i32_89 = arith.constant 121 : i32
    %294 = tpu.dynamic_rotate %269 by %c121_i32_89 dim 1 : vector<8x128xf32>, i32 -> vector<8x128xf32>
    %295 = vector.extract_strided_slice %0 {offsets = [6, 0], sizes = [1, 128], strides = [1, 1]} : vector<9x128xf32> to vector<1x128xf32>
    %296 = vector.broadcast %295 : vector<1x128xf32> to vector<8x128xf32>
    %297 = arith.mulf %294, %296 : vector<8x128xf32>
    %c120_i32_90 = arith.constant 120 : i32
    %298 = tpu.dynamic_rotate %269 by %c120_i32_90 dim 1 : vector<8x128xf32>, i32 -> vector<8x128xf32>
    %299 = vector.extract_strided_slice %0 {offsets = [7, 0], sizes = [1, 128], strides = [1, 1]} : vector<9x128xf32> to vector<1x128xf32>
    %300 = vector.broadcast %299 : vector<1x128xf32> to vector<8x128xf32>
    %301 = arith.mulf %298, %300 : vector<8x128xf32>
    %c119_i32_91 = arith.constant 119 : i32
    %302 = tpu.dynamic_rotate %269 by %c119_i32_91 dim 1 : vector<8x128xf32>, i32 -> vector<8x128xf32>
    %303 = vector.extract_strided_slice %0 {offsets = [8, 0], sizes = [1, 128], strides = [1, 1]} : vector<9x128xf32> to vector<1x128xf32>
    %304 = vector.broadcast %303 : vector<1x128xf32> to vector<8x128xf32>
    %305 = arith.mulf %302, %304 : vector<8x128xf32>
    %306 = tpu.concatenate %277, %281, %285, %289, %269, %293, %297, %301, %305 in 0 : vector<8x128xf32>, vector<8x128xf32>, vector<8x128xf32>, vector<8x128xf32>, vector<8x128xf32>, vector<8x128xf32>, vector<8x128xf32>, vector<8x128xf32>, vector<8x128xf32> -> vector<72x128xf32>
    %cst_92 = arith.constant dense<0.000000e+00> : vector<8x128xf32>
    %307 = tpu.matmul %271, %306, %cst_92 {dimension_numbers = #tpu.dot_dimension_numbers<[1], [0], [0], [1], [0, 0, 1, 1], [], []>} : vector<8x72xf32>, vector<72x128xf32>, vector<8x128xf32> -> vector<8x128xf32>
    %308 = vector.broadcast %273 : vector<8x1xf32> to vector<8x128xf32>
    %309 = arith.addf %307, %308 : vector<8x128xf32>
    %c0_93 = arith.constant 0 : index
    %c0_94 = arith.constant 0 : index
    %c0_95 = arith.constant 0 : index
    %310 = vector.load %arg6[%c0_93, %c0_94, %c0_95] : memref<2x1x8xf32, #tpu.memory_space<vmem>>, vector<1x1x8xf32>
    %311 = vector.shape_cast %310 : vector<1x1x8xf32> to vector<1x8xf32>
    %c0_96 = arith.constant 0 : index
    %c0_97 = arith.constant 0 : index
    %c0_98 = arith.constant 0 : index
    %312 = vector.load %arg7[%c0_96, %c0_97, %c0_98] : memref<2x1x1xf32, #tpu.memory_space<vmem>>, vector<1x1x1xf32>
    %313 = vector.shape_cast %312 : vector<1x1x1xf32> to vector<1x1xf32>
    %c0_99 = arith.constant 0 : index
    %c0_100 = arith.constant 0 : index
    %c0_101 = arith.constant 0 : index
    %314 = vector.load %arg8[%c0_99, %c0_100, %c0_101] : memref<2x8x1xf32, #tpu.memory_space<vmem>>, vector<1x8x1xf32>
    %315 = vector.shape_cast %314 : vector<1x8x1xf32> to vector<8x1xf32>
    %c0_102 = arith.constant 0 : index
    %c0_103 = arith.constant 0 : index
    %c0_104 = arith.constant 0 : index
    %316 = vector.load %arg9[%c0_102, %c0_103, %c0_104] : memref<2x8x1xf32, #tpu.memory_space<vmem>>, vector<1x8x1xf32>
    %317 = vector.shape_cast %316 : vector<1x8x1xf32> to vector<8x1xf32>
    %318 = vector.extract_strided_slice %309 {offsets = [0, 0], sizes = [8, 64], strides = [1, 1]} : vector<8x128xf32> to vector<8x64xf32>
    %cst_105 = arith.constant dense<0.000000e+00> : vector<8xf32>
    %319 = vector.multi_reduction <add>, %318, %cst_105 [1] : vector<8x64xf32> to vector<8xf32>
    %320 = vector.shape_cast %319 : vector<8xf32> to vector<8x1xf32>
    %cst_106 = arith.constant 6.400000e+01 : f32
    %321 = vector.broadcast %cst_106 : f32 to vector<8x1xf32>
    %322 = arith.divf %320, %321 : vector<8x1xf32>
    %cst_107 = arith.constant dense<0xFF800000> : vector<8xf32>
    %323 = vector.multi_reduction <maximumf>, %318, %cst_107 [1] : vector<8x64xf32> to vector<8xf32>
    %324 = vector.shape_cast %323 : vector<8xf32> to vector<8x1xf32>
    %325 = vector.extract_strided_slice %309 {offsets = [0, 64], sizes = [8, 64], strides = [1, 1]} : vector<8x128xf32> to vector<8x64xf32>
    %cst_108 = arith.constant dense<0.000000e+00> : vector<8xf32>
    %326 = vector.multi_reduction <add>, %325, %cst_108 [1] : vector<8x64xf32> to vector<8xf32>
    %327 = vector.shape_cast %326 : vector<8xf32> to vector<8x1xf32>
    %cst_109 = arith.constant 6.400000e+01 : f32
    %328 = vector.broadcast %cst_109 : f32 to vector<8x1xf32>
    %329 = arith.divf %327, %328 : vector<8x1xf32>
    %cst_110 = arith.constant dense<0xFF800000> : vector<8xf32>
    %330 = vector.multi_reduction <maximumf>, %325, %cst_110 [1] : vector<8x64xf32> to vector<8xf32>
    %331 = vector.shape_cast %330 : vector<8xf32> to vector<8x1xf32>
    %332 = tpu.concatenate %322, %324, %329, %331 in 1 : vector<8x1xf32>, vector<8x1xf32>, vector<8x1xf32>, vector<8x1xf32> -> vector<8x4xf32>
    %cst_111 = arith.constant dense<0.000000e+00> : vector<1x4xf32>
    %333 = tpu.matmul %311, %332, %cst_111 {dimension_numbers = #tpu.dot_dimension_numbers<[1], [0], [0], [1], [0, 0, 1, 1], [], []>} : vector<1x8xf32>, vector<8x4xf32>, vector<1x4xf32> -> vector<1x4xf32>
    %334 = vector.broadcast %313 : vector<1x1xf32> to vector<1x4xf32>
    %335 = arith.addf %333, %334 : vector<1x4xf32>
    %cst_112 = arith.constant 0.000000e+00 : f32
    %336 = vector.broadcast %cst_112 : f32 to vector<1x4xf32>
    %337 = arith.maximumf %335, %336 : vector<1x4xf32>
    %cst_113 = arith.constant dense<0.000000e+00> : vector<8x4xf32>
    %338 = tpu.matmul %315, %337, %cst_113 {dimension_numbers = #tpu.dot_dimension_numbers<[1], [0], [0], [1], [0, 0, 1, 1], [], []>} : vector<8x1xf32>, vector<1x4xf32>, vector<8x4xf32> -> vector<8x4xf32>
    %339 = vector.broadcast %317 : vector<8x1xf32> to vector<8x4xf32>
    %340 = arith.addf %338, %339 : vector<8x4xf32>
    %cst_114 = arith.constant 5.000000e-01 : f32
    %341 = vector.broadcast %cst_114 : f32 to vector<8x4xf32>
    %342 = arith.mulf %341, %340 : vector<8x4xf32>
    %343 = math.tanh %342 : vector<8x4xf32>
    %cst_115 = arith.constant 5.000000e-01 : f32
    %344 = vector.broadcast %cst_115 : f32 to vector<8x4xf32>
    %345 = arith.mulf %344, %343 : vector<8x4xf32>
    %cst_116 = arith.constant 5.000000e-01 : f32
    %346 = vector.broadcast %cst_116 : f32 to vector<8x4xf32>
    %347 = arith.addf %345, %346 : vector<8x4xf32>
    %348 = vector.extract_strided_slice %347 {offsets = [0, 0], sizes = [8, 1], strides = [1, 1]} : vector<8x4xf32> to vector<8x1xf32>
    %349 = vector.extract_strided_slice %347 {offsets = [0, 1], sizes = [8, 1], strides = [1, 1]} : vector<8x4xf32> to vector<8x1xf32>
    %350 = arith.addf %348, %349 : vector<8x1xf32>
    %cst_117 = arith.constant 5.000000e-01 : f32
    %351 = vector.broadcast %cst_117 : f32 to vector<8x1xf32>
    %352 = arith.mulf %351, %350 : vector<8x1xf32>
    %353 = math.tanh %352 : vector<8x1xf32>
    %cst_118 = arith.constant 5.000000e-01 : f32
    %354 = vector.broadcast %cst_118 : f32 to vector<8x1xf32>
    %355 = arith.mulf %354, %353 : vector<8x1xf32>
    %cst_119 = arith.constant 5.000000e-01 : f32
    %356 = vector.broadcast %cst_119 : f32 to vector<8x1xf32>
    %357 = arith.addf %355, %356 : vector<8x1xf32>
    %358 = vector.extract_strided_slice %347 {offsets = [0, 2], sizes = [8, 1], strides = [1, 1]} : vector<8x4xf32> to vector<8x1xf32>
    %359 = vector.extract_strided_slice %347 {offsets = [0, 3], sizes = [8, 1], strides = [1, 1]} : vector<8x4xf32> to vector<8x1xf32>
    %360 = arith.addf %358, %359 : vector<8x1xf32>
    %cst_120 = arith.constant 5.000000e-01 : f32
    %361 = vector.broadcast %cst_120 : f32 to vector<8x1xf32>
    %362 = arith.mulf %361, %360 : vector<8x1xf32>
    %363 = math.tanh %362 : vector<8x1xf32>
    %cst_121 = arith.constant 5.000000e-01 : f32
    %364 = vector.broadcast %cst_121 : f32 to vector<8x1xf32>
    %365 = arith.mulf %364, %363 : vector<8x1xf32>
    %cst_122 = arith.constant 5.000000e-01 : f32
    %366 = vector.broadcast %cst_122 : f32 to vector<8x1xf32>
    %367 = arith.addf %365, %366 : vector<8x1xf32>
    %368 = tpu.concatenate %357, %367 in 1 : vector<8x1xf32>, vector<8x1xf32> -> vector<8x2xf32>
    %369 = vector.extract_strided_slice %368 {offsets = [0, 0], sizes = [8, 1], strides = [1, 1]} : vector<8x2xf32> to vector<8x1xf32>
    %370 = vector.shape_cast %369 : vector<8x1xf32> to vector<8x1xf32>
    %371 = vector.broadcast %370 : vector<8x1xf32> to vector<8x64xf32>
    %372 = vector.extract_strided_slice %368 {offsets = [0, 1], sizes = [8, 1], strides = [1, 1]} : vector<8x2xf32> to vector<8x1xf32>
    %373 = vector.shape_cast %372 : vector<8x1xf32> to vector<8x1xf32>
    %374 = vector.broadcast %373 : vector<8x1xf32> to vector<8x64xf32>
    %375 = tpu.concatenate %371, %374 in 1 : vector<8x64xf32>, vector<8x64xf32> -> vector<8x128xf32>
    %376 = arith.mulf %375, %309 : vector<8x128xf32>
    %cst_123 = arith.constant dense<0.000000e+00> : vector<128xf32>
    %377 = vector.multi_reduction <add>, %376, %cst_123 [0] : vector<8x128xf32> to vector<128xf32>
    %378 = vector.shape_cast %377 : vector<128xf32> to vector<1x128xf32>
    %cst_124 = arith.constant 8.000000e+00 : f32
    %379 = vector.broadcast %cst_124 : f32 to vector<1x128xf32>
    %380 = arith.divf %378, %379 : vector<1x128xf32>
    %cst_125 = arith.constant dense<0xFF800000> : vector<128xf32>
    %381 = vector.multi_reduction <maximumf>, %376, %cst_125 [0] : vector<8x128xf32> to vector<128xf32>
    %382 = vector.shape_cast %381 : vector<128xf32> to vector<1x128xf32>
    %c1_126 = arith.constant 1 : index
    %c0_127 = arith.constant 0 : index
    %c0_128 = arith.constant 0 : index
    %383 = vector.load %arg10[%c1_126, %c0_127, %c0_128] : memref<3x18x128xf32, #tpu.memory_space<vmem>>, vector<1x18x128xf32>
    %384 = vector.shape_cast %383 : vector<1x18x128xf32> to vector<18x128xf32>
    %c1_129 = arith.constant 1 : index
    %c0_130 = arith.constant 0 : index
    %c0_131 = arith.constant 0 : index
    %385 = vector.load %arg11[%c1_129, %c0_130, %c0_131] : memref<3x1x128xf32, #tpu.memory_space<vmem>>, vector<1x1x128xf32>
    %386 = vector.shape_cast %385 : vector<1x1x128xf32> to vector<1x128xf32>
    %387 = vector.extract_strided_slice %384 {offsets = [0, 0], sizes = [1, 128], strides = [1, 1]} : vector<18x128xf32> to vector<1x128xf32>
    %c9_i32_132 = arith.constant 9 : i32
    %388 = tpu.dynamic_rotate %380 by %c9_i32_132 dim 1 : vector<1x128xf32>, i32 -> vector<1x128xf32>
    %389 = vector.extract_strided_slice %0 {offsets = [0, 0], sizes = [1, 128], strides = [1, 1]} : vector<9x128xf32> to vector<1x128xf32>
    %390 = arith.mulf %388, %389 : vector<1x128xf32>
    %391 = arith.mulf %387, %390 : vector<1x128xf32>
    %392 = arith.addf %386, %391 : vector<1x128xf32>
    %393 = vector.extract_strided_slice %384 {offsets = [1, 0], sizes = [1, 128], strides = [1, 1]} : vector<18x128xf32> to vector<1x128xf32>
    %c9_i32_133 = arith.constant 9 : i32
    %394 = tpu.dynamic_rotate %382 by %c9_i32_133 dim 1 : vector<1x128xf32>, i32 -> vector<1x128xf32>
    %395 = vector.extract_strided_slice %0 {offsets = [0, 0], sizes = [1, 128], strides = [1, 1]} : vector<9x128xf32> to vector<1x128xf32>
    %396 = arith.mulf %394, %395 : vector<1x128xf32>
    %397 = arith.mulf %393, %396 : vector<1x128xf32>
    %398 = arith.addf %392, %397 : vector<1x128xf32>
    %399 = vector.extract_strided_slice %384 {offsets = [2, 0], sizes = [1, 128], strides = [1, 1]} : vector<18x128xf32> to vector<1x128xf32>
    %c8_i32_134 = arith.constant 8 : i32
    %400 = tpu.dynamic_rotate %380 by %c8_i32_134 dim 1 : vector<1x128xf32>, i32 -> vector<1x128xf32>
    %401 = vector.extract_strided_slice %0 {offsets = [1, 0], sizes = [1, 128], strides = [1, 1]} : vector<9x128xf32> to vector<1x128xf32>
    %402 = arith.mulf %400, %401 : vector<1x128xf32>
    %403 = arith.mulf %399, %402 : vector<1x128xf32>
    %404 = arith.addf %398, %403 : vector<1x128xf32>
    %405 = vector.extract_strided_slice %384 {offsets = [3, 0], sizes = [1, 128], strides = [1, 1]} : vector<18x128xf32> to vector<1x128xf32>
    %c8_i32_135 = arith.constant 8 : i32
    %406 = tpu.dynamic_rotate %382 by %c8_i32_135 dim 1 : vector<1x128xf32>, i32 -> vector<1x128xf32>
    %407 = vector.extract_strided_slice %0 {offsets = [1, 0], sizes = [1, 128], strides = [1, 1]} : vector<9x128xf32> to vector<1x128xf32>
    %408 = arith.mulf %406, %407 : vector<1x128xf32>
    %409 = arith.mulf %405, %408 : vector<1x128xf32>
    %410 = arith.addf %404, %409 : vector<1x128xf32>
    %411 = vector.extract_strided_slice %384 {offsets = [4, 0], sizes = [1, 128], strides = [1, 1]} : vector<18x128xf32> to vector<1x128xf32>
    %c7_i32_136 = arith.constant 7 : i32
    %412 = tpu.dynamic_rotate %380 by %c7_i32_136 dim 1 : vector<1x128xf32>, i32 -> vector<1x128xf32>
    %413 = vector.extract_strided_slice %0 {offsets = [2, 0], sizes = [1, 128], strides = [1, 1]} : vector<9x128xf32> to vector<1x128xf32>
    %414 = arith.mulf %412, %413 : vector<1x128xf32>
    %415 = arith.mulf %411, %414 : vector<1x128xf32>
    %416 = arith.addf %410, %415 : vector<1x128xf32>
    %417 = vector.extract_strided_slice %384 {offsets = [5, 0], sizes = [1, 128], strides = [1, 1]} : vector<18x128xf32> to vector<1x128xf32>
    %c7_i32_137 = arith.constant 7 : i32
    %418 = tpu.dynamic_rotate %382 by %c7_i32_137 dim 1 : vector<1x128xf32>, i32 -> vector<1x128xf32>
    %419 = vector.extract_strided_slice %0 {offsets = [2, 0], sizes = [1, 128], strides = [1, 1]} : vector<9x128xf32> to vector<1x128xf32>
    %420 = arith.mulf %418, %419 : vector<1x128xf32>
    %421 = arith.mulf %417, %420 : vector<1x128xf32>
    %422 = arith.addf %416, %421 : vector<1x128xf32>
    %423 = vector.extract_strided_slice %384 {offsets = [6, 0], sizes = [1, 128], strides = [1, 1]} : vector<18x128xf32> to vector<1x128xf32>
    %c1_i32_138 = arith.constant 1 : i32
    %424 = tpu.dynamic_rotate %380 by %c1_i32_138 dim 1 : vector<1x128xf32>, i32 -> vector<1x128xf32>
    %425 = vector.extract_strided_slice %0 {offsets = [3, 0], sizes = [1, 128], strides = [1, 1]} : vector<9x128xf32> to vector<1x128xf32>
    %426 = arith.mulf %424, %425 : vector<1x128xf32>
    %427 = arith.mulf %423, %426 : vector<1x128xf32>
    %428 = arith.addf %422, %427 : vector<1x128xf32>
    %429 = vector.extract_strided_slice %384 {offsets = [7, 0], sizes = [1, 128], strides = [1, 1]} : vector<18x128xf32> to vector<1x128xf32>
    %c1_i32_139 = arith.constant 1 : i32
    %430 = tpu.dynamic_rotate %382 by %c1_i32_139 dim 1 : vector<1x128xf32>, i32 -> vector<1x128xf32>
    %431 = vector.extract_strided_slice %0 {offsets = [3, 0], sizes = [1, 128], strides = [1, 1]} : vector<9x128xf32> to vector<1x128xf32>
    %432 = arith.mulf %430, %431 : vector<1x128xf32>
    %433 = arith.mulf %429, %432 : vector<1x128xf32>
    %434 = arith.addf %428, %433 : vector<1x128xf32>
    %435 = vector.extract_strided_slice %384 {offsets = [8, 0], sizes = [1, 128], strides = [1, 1]} : vector<18x128xf32> to vector<1x128xf32>
    %436 = arith.mulf %435, %380 : vector<1x128xf32>
    %437 = arith.addf %434, %436 : vector<1x128xf32>
    %438 = vector.extract_strided_slice %384 {offsets = [9, 0], sizes = [1, 128], strides = [1, 1]} : vector<18x128xf32> to vector<1x128xf32>
    %439 = arith.mulf %438, %382 : vector<1x128xf32>
    %440 = arith.addf %437, %439 : vector<1x128xf32>
    %441 = vector.extract_strided_slice %384 {offsets = [10, 0], sizes = [1, 128], strides = [1, 1]} : vector<18x128xf32> to vector<1x128xf32>
    %c127_i32_140 = arith.constant 127 : i32
    %442 = tpu.dynamic_rotate %380 by %c127_i32_140 dim 1 : vector<1x128xf32>, i32 -> vector<1x128xf32>
    %443 = vector.extract_strided_slice %0 {offsets = [5, 0], sizes = [1, 128], strides = [1, 1]} : vector<9x128xf32> to vector<1x128xf32>
    %444 = arith.mulf %442, %443 : vector<1x128xf32>
    %445 = arith.mulf %441, %444 : vector<1x128xf32>
    %446 = arith.addf %440, %445 : vector<1x128xf32>
    %447 = vector.extract_strided_slice %384 {offsets = [11, 0], sizes = [1, 128], strides = [1, 1]} : vector<18x128xf32> to vector<1x128xf32>
    %c127_i32_141 = arith.constant 127 : i32
    %448 = tpu.dynamic_rotate %382 by %c127_i32_141 dim 1 : vector<1x128xf32>, i32 -> vector<1x128xf32>
    %449 = vector.extract_strided_slice %0 {offsets = [5, 0], sizes = [1, 128], strides = [1, 1]} : vector<9x128xf32> to vector<1x128xf32>
    %450 = arith.mulf %448, %449 : vector<1x128xf32>
    %451 = arith.mulf %447, %450 : vector<1x128xf32>
    %452 = arith.addf %446, %451 : vector<1x128xf32>
    %453 = vector.extract_strided_slice %384 {offsets = [12, 0], sizes = [1, 128], strides = [1, 1]} : vector<18x128xf32> to vector<1x128xf32>
    %c121_i32_142 = arith.constant 121 : i32
    %454 = tpu.dynamic_rotate %380 by %c121_i32_142 dim 1 : vector<1x128xf32>, i32 -> vector<1x128xf32>
    %455 = vector.extract_strided_slice %0 {offsets = [6, 0], sizes = [1, 128], strides = [1, 1]} : vector<9x128xf32> to vector<1x128xf32>
    %456 = arith.mulf %454, %455 : vector<1x128xf32>
    %457 = arith.mulf %453, %456 : vector<1x128xf32>
    %458 = arith.addf %452, %457 : vector<1x128xf32>
    %459 = vector.extract_strided_slice %384 {offsets = [13, 0], sizes = [1, 128], strides = [1, 1]} : vector<18x128xf32> to vector<1x128xf32>
    %c121_i32_143 = arith.constant 121 : i32
    %460 = tpu.dynamic_rotate %382 by %c121_i32_143 dim 1 : vector<1x128xf32>, i32 -> vector<1x128xf32>
    %461 = vector.extract_strided_slice %0 {offsets = [6, 0], sizes = [1, 128], strides = [1, 1]} : vector<9x128xf32> to vector<1x128xf32>
    %462 = arith.mulf %460, %461 : vector<1x128xf32>
    %463 = arith.mulf %459, %462 : vector<1x128xf32>
    %464 = arith.addf %458, %463 : vector<1x128xf32>
    %465 = vector.extract_strided_slice %384 {offsets = [14, 0], sizes = [1, 128], strides = [1, 1]} : vector<18x128xf32> to vector<1x128xf32>
    %c120_i32_144 = arith.constant 120 : i32
    %466 = tpu.dynamic_rotate %380 by %c120_i32_144 dim 1 : vector<1x128xf32>, i32 -> vector<1x128xf32>
    %467 = vector.extract_strided_slice %0 {offsets = [7, 0], sizes = [1, 128], strides = [1, 1]} : vector<9x128xf32> to vector<1x128xf32>
    %468 = arith.mulf %466, %467 : vector<1x128xf32>
    %469 = arith.mulf %465, %468 : vector<1x128xf32>
    %470 = arith.addf %464, %469 : vector<1x128xf32>
    %471 = vector.extract_strided_slice %384 {offsets = [15, 0], sizes = [1, 128], strides = [1, 1]} : vector<18x128xf32> to vector<1x128xf32>
    %c120_i32_145 = arith.constant 120 : i32
    %472 = tpu.dynamic_rotate %382 by %c120_i32_145 dim 1 : vector<1x128xf32>, i32 -> vector<1x128xf32>
    %473 = vector.extract_strided_slice %0 {offsets = [7, 0], sizes = [1, 128], strides = [1, 1]} : vector<9x128xf32> to vector<1x128xf32>
    %474 = arith.mulf %472, %473 : vector<1x128xf32>
    %475 = arith.mulf %471, %474 : vector<1x128xf32>
    %476 = arith.addf %470, %475 : vector<1x128xf32>
    %477 = vector.extract_strided_slice %384 {offsets = [16, 0], sizes = [1, 128], strides = [1, 1]} : vector<18x128xf32> to vector<1x128xf32>
    %c119_i32_146 = arith.constant 119 : i32
    %478 = tpu.dynamic_rotate %380 by %c119_i32_146 dim 1 : vector<1x128xf32>, i32 -> vector<1x128xf32>
    %479 = vector.extract_strided_slice %0 {offsets = [8, 0], sizes = [1, 128], strides = [1, 1]} : vector<9x128xf32> to vector<1x128xf32>
    %480 = arith.mulf %478, %479 : vector<1x128xf32>
    %481 = arith.mulf %477, %480 : vector<1x128xf32>
    %482 = arith.addf %476, %481 : vector<1x128xf32>
    %483 = vector.extract_strided_slice %384 {offsets = [17, 0], sizes = [1, 128], strides = [1, 1]} : vector<18x128xf32> to vector<1x128xf32>
    %c119_i32_147 = arith.constant 119 : i32
    %484 = tpu.dynamic_rotate %382 by %c119_i32_147 dim 1 : vector<1x128xf32>, i32 -> vector<1x128xf32>
    %485 = vector.extract_strided_slice %0 {offsets = [8, 0], sizes = [1, 128], strides = [1, 1]} : vector<9x128xf32> to vector<1x128xf32>
    %486 = arith.mulf %484, %485 : vector<1x128xf32>
    %487 = arith.mulf %483, %486 : vector<1x128xf32>
    %488 = arith.addf %482, %487 : vector<1x128xf32>
    %cst_148 = arith.constant 5.000000e-01 : f32
    %489 = vector.broadcast %cst_148 : f32 to vector<1x128xf32>
    %490 = arith.mulf %489, %488 : vector<1x128xf32>
    %491 = math.tanh %490 : vector<1x128xf32>
    %cst_149 = arith.constant 5.000000e-01 : f32
    %492 = vector.broadcast %cst_149 : f32 to vector<1x128xf32>
    %493 = arith.mulf %492, %491 : vector<1x128xf32>
    %cst_150 = arith.constant 5.000000e-01 : f32
    %494 = vector.broadcast %cst_150 : f32 to vector<1x128xf32>
    %495 = arith.addf %493, %494 : vector<1x128xf32>
    %496 = vector.broadcast %495 : vector<1x128xf32> to vector<8x128xf32>
    %497 = arith.mulf %496, %376 : vector<8x128xf32>
    %498 = arith.mulf %497, %309 : vector<8x128xf32>
    %499 = arith.addf %498, %227 : vector<8x128xf32>
    %cst_151 = arith.constant 0.000000e+00 : f32
    %500 = vector.broadcast %cst_151 : f32 to vector<8x128xf32>
    %501 = arith.maximumf %499, %500 : vector<8x128xf32>
    %c2_152 = arith.constant 2 : index
    %c0_153 = arith.constant 0 : index
    %c0_154 = arith.constant 0 : index
    %502 = vector.load %arg13[%c2_152, %c0_153, %c0_154] : memref<4x8x72xf32, #tpu.memory_space<vmem>>, vector<1x8x72xf32>
    %503 = vector.shape_cast %502 : vector<1x8x72xf32> to vector<8x72xf32>
    %c3 = arith.constant 3 : index
    %c0_155 = arith.constant 0 : index
    %c0_156 = arith.constant 0 : index
    %504 = vector.load %arg15[%c3, %c0_155, %c0_156] : memref<6x8x1xf32, #tpu.memory_space<vmem>>, vector<1x8x1xf32>
    %505 = vector.shape_cast %504 : vector<1x8x1xf32> to vector<8x1xf32>
    %c9_i32_157 = arith.constant 9 : i32
    %506 = tpu.dynamic_rotate %501 by %c9_i32_157 dim 1 : vector<8x128xf32>, i32 -> vector<8x128xf32>
    %507 = vector.extract_strided_slice %0 {offsets = [0, 0], sizes = [1, 128], strides = [1, 1]} : vector<9x128xf32> to vector<1x128xf32>
    %508 = vector.broadcast %507 : vector<1x128xf32> to vector<8x128xf32>
    %509 = arith.mulf %506, %508 : vector<8x128xf32>
    %c8_i32_158 = arith.constant 8 : i32
    %510 = tpu.dynamic_rotate %501 by %c8_i32_158 dim 1 : vector<8x128xf32>, i32 -> vector<8x128xf32>
    %511 = vector.extract_strided_slice %0 {offsets = [1, 0], sizes = [1, 128], strides = [1, 1]} : vector<9x128xf32> to vector<1x128xf32>
    %512 = vector.broadcast %511 : vector<1x128xf32> to vector<8x128xf32>
    %513 = arith.mulf %510, %512 : vector<8x128xf32>
    %c7_i32_159 = arith.constant 7 : i32
    %514 = tpu.dynamic_rotate %501 by %c7_i32_159 dim 1 : vector<8x128xf32>, i32 -> vector<8x128xf32>
    %515 = vector.extract_strided_slice %0 {offsets = [2, 0], sizes = [1, 128], strides = [1, 1]} : vector<9x128xf32> to vector<1x128xf32>
    %516 = vector.broadcast %515 : vector<1x128xf32> to vector<8x128xf32>
    %517 = arith.mulf %514, %516 : vector<8x128xf32>
    %c1_i32_160 = arith.constant 1 : i32
    %518 = tpu.dynamic_rotate %501 by %c1_i32_160 dim 1 : vector<8x128xf32>, i32 -> vector<8x128xf32>
    %519 = vector.extract_strided_slice %0 {offsets = [3, 0], sizes = [1, 128], strides = [1, 1]} : vector<9x128xf32> to vector<1x128xf32>
    %520 = vector.broadcast %519 : vector<1x128xf32> to vector<8x128xf32>
    %521 = arith.mulf %518, %520 : vector<8x128xf32>
    %c127_i32_161 = arith.constant 127 : i32
    %522 = tpu.dynamic_rotate %501 by %c127_i32_161 dim 1 : vector<8x128xf32>, i32 -> vector<8x128xf32>
    %523 = vector.extract_strided_slice %0 {offsets = [5, 0], sizes = [1, 128], strides = [1, 1]} : vector<9x128xf32> to vector<1x128xf32>
    %524 = vector.broadcast %523 : vector<1x128xf32> to vector<8x128xf32>
    %525 = arith.mulf %522, %524 : vector<8x128xf32>
    %c121_i32_162 = arith.constant 121 : i32
    %526 = tpu.dynamic_rotate %501 by %c121_i32_162 dim 1 : vector<8x128xf32>, i32 -> vector<8x128xf32>
    %527 = vector.extract_strided_slice %0 {offsets = [6, 0], sizes = [1, 128], strides = [1, 1]} : vector<9x128xf32> to vector<1x128xf32>
    %528 = vector.broadcast %527 : vector<1x128xf32> to vector<8x128xf32>
    %529 = arith.mulf %526, %528 : vector<8x128xf32>
    %c120_i32_163 = arith.constant 120 : i32
    %530 = tpu.dynamic_rotate %501 by %c120_i32_163 dim 1 : vector<8x128xf32>, i32 -> vector<8x128xf32>
    %531 = vector.extract_strided_slice %0 {offsets = [7, 0], sizes = [1, 128], strides = [1, 1]} : vector<9x128xf32> to vector<1x128xf32>
    %532 = vector.broadcast %531 : vector<1x128xf32> to vector<8x128xf32>
    %533 = arith.mulf %530, %532 : vector<8x128xf32>
    %c119_i32_164 = arith.constant 119 : i32
    %534 = tpu.dynamic_rotate %501 by %c119_i32_164 dim 1 : vector<8x128xf32>, i32 -> vector<8x128xf32>
    %535 = vector.extract_strided_slice %0 {offsets = [8, 0], sizes = [1, 128], strides = [1, 1]} : vector<9x128xf32> to vector<1x128xf32>
    %536 = vector.broadcast %535 : vector<1x128xf32> to vector<8x128xf32>
    %537 = arith.mulf %534, %536 : vector<8x128xf32>
    %538 = tpu.concatenate %509, %513, %517, %521, %501, %525, %529, %533, %537 in 0 : vector<8x128xf32>, vector<8x128xf32>, vector<8x128xf32>, vector<8x128xf32>, vector<8x128xf32>, vector<8x128xf32>, vector<8x128xf32>, vector<8x128xf32>, vector<8x128xf32> -> vector<72x128xf32>
    %cst_165 = arith.constant dense<0.000000e+00> : vector<8x128xf32>
    %539 = tpu.matmul %503, %538, %cst_165 {dimension_numbers = #tpu.dot_dimension_numbers<[1], [0], [0], [1], [0, 0, 1, 1], [], []>} : vector<8x72xf32>, vector<72x128xf32>, vector<8x128xf32> -> vector<8x128xf32>
    %540 = vector.broadcast %505 : vector<8x1xf32> to vector<8x128xf32>
    %541 = arith.addf %539, %540 : vector<8x128xf32>
    %cst_166 = arith.constant 0.000000e+00 : f32
    %542 = vector.broadcast %cst_166 : f32 to vector<8x128xf32>
    %543 = arith.maximumf %541, %542 : vector<8x128xf32>
    %c3_167 = arith.constant 3 : index
    %c0_168 = arith.constant 0 : index
    %c0_169 = arith.constant 0 : index
    %544 = vector.load %arg13[%c3_167, %c0_168, %c0_169] : memref<4x8x72xf32, #tpu.memory_space<vmem>>, vector<1x8x72xf32>
    %545 = vector.shape_cast %544 : vector<1x8x72xf32> to vector<8x72xf32>
    %c4 = arith.constant 4 : index
    %c0_170 = arith.constant 0 : index
    %c0_171 = arith.constant 0 : index
    %546 = vector.load %arg15[%c4, %c0_170, %c0_171] : memref<6x8x1xf32, #tpu.memory_space<vmem>>, vector<1x8x1xf32>
    %547 = vector.shape_cast %546 : vector<1x8x1xf32> to vector<8x1xf32>
    %c9_i32_172 = arith.constant 9 : i32
    %548 = tpu.dynamic_rotate %543 by %c9_i32_172 dim 1 : vector<8x128xf32>, i32 -> vector<8x128xf32>
    %549 = vector.extract_strided_slice %0 {offsets = [0, 0], sizes = [1, 128], strides = [1, 1]} : vector<9x128xf32> to vector<1x128xf32>
    %550 = vector.broadcast %549 : vector<1x128xf32> to vector<8x128xf32>
    %551 = arith.mulf %548, %550 : vector<8x128xf32>
    %c8_i32_173 = arith.constant 8 : i32
    %552 = tpu.dynamic_rotate %543 by %c8_i32_173 dim 1 : vector<8x128xf32>, i32 -> vector<8x128xf32>
    %553 = vector.extract_strided_slice %0 {offsets = [1, 0], sizes = [1, 128], strides = [1, 1]} : vector<9x128xf32> to vector<1x128xf32>
    %554 = vector.broadcast %553 : vector<1x128xf32> to vector<8x128xf32>
    %555 = arith.mulf %552, %554 : vector<8x128xf32>
    %c7_i32_174 = arith.constant 7 : i32
    %556 = tpu.dynamic_rotate %543 by %c7_i32_174 dim 1 : vector<8x128xf32>, i32 -> vector<8x128xf32>
    %557 = vector.extract_strided_slice %0 {offsets = [2, 0], sizes = [1, 128], strides = [1, 1]} : vector<9x128xf32> to vector<1x128xf32>
    %558 = vector.broadcast %557 : vector<1x128xf32> to vector<8x128xf32>
    %559 = arith.mulf %556, %558 : vector<8x128xf32>
    %c1_i32_175 = arith.constant 1 : i32
    %560 = tpu.dynamic_rotate %543 by %c1_i32_175 dim 1 : vector<8x128xf32>, i32 -> vector<8x128xf32>
    %561 = vector.extract_strided_slice %0 {offsets = [3, 0], sizes = [1, 128], strides = [1, 1]} : vector<9x128xf32> to vector<1x128xf32>
    %562 = vector.broadcast %561 : vector<1x128xf32> to vector<8x128xf32>
    %563 = arith.mulf %560, %562 : vector<8x128xf32>
    %c127_i32_176 = arith.constant 127 : i32
    %564 = tpu.dynamic_rotate %543 by %c127_i32_176 dim 1 : vector<8x128xf32>, i32 -> vector<8x128xf32>
    %565 = vector.extract_strided_slice %0 {offsets = [5, 0], sizes = [1, 128], strides = [1, 1]} : vector<9x128xf32> to vector<1x128xf32>
    %566 = vector.broadcast %565 : vector<1x128xf32> to vector<8x128xf32>
    %567 = arith.mulf %564, %566 : vector<8x128xf32>
    %c121_i32_177 = arith.constant 121 : i32
    %568 = tpu.dynamic_rotate %543 by %c121_i32_177 dim 1 : vector<8x128xf32>, i32 -> vector<8x128xf32>
    %569 = vector.extract_strided_slice %0 {offsets = [6, 0], sizes = [1, 128], strides = [1, 1]} : vector<9x128xf32> to vector<1x128xf32>
    %570 = vector.broadcast %569 : vector<1x128xf32> to vector<8x128xf32>
    %571 = arith.mulf %568, %570 : vector<8x128xf32>
    %c120_i32_178 = arith.constant 120 : i32
    %572 = tpu.dynamic_rotate %543 by %c120_i32_178 dim 1 : vector<8x128xf32>, i32 -> vector<8x128xf32>
    %573 = vector.extract_strided_slice %0 {offsets = [7, 0], sizes = [1, 128], strides = [1, 1]} : vector<9x128xf32> to vector<1x128xf32>
    %574 = vector.broadcast %573 : vector<1x128xf32> to vector<8x128xf32>
    %575 = arith.mulf %572, %574 : vector<8x128xf32>
    %c119_i32_179 = arith.constant 119 : i32
    %576 = tpu.dynamic_rotate %543 by %c119_i32_179 dim 1 : vector<8x128xf32>, i32 -> vector<8x128xf32>
    %577 = vector.extract_strided_slice %0 {offsets = [8, 0], sizes = [1, 128], strides = [1, 1]} : vector<9x128xf32> to vector<1x128xf32>
    %578 = vector.broadcast %577 : vector<1x128xf32> to vector<8x128xf32>
    %579 = arith.mulf %576, %578 : vector<8x128xf32>
    %580 = tpu.concatenate %551, %555, %559, %563, %543, %567, %571, %575, %579 in 0 : vector<8x128xf32>, vector<8x128xf32>, vector<8x128xf32>, vector<8x128xf32>, vector<8x128xf32>, vector<8x128xf32>, vector<8x128xf32>, vector<8x128xf32>, vector<8x128xf32> -> vector<72x128xf32>
    %cst_180 = arith.constant dense<0.000000e+00> : vector<8x128xf32>
    %581 = tpu.matmul %545, %580, %cst_180 {dimension_numbers = #tpu.dot_dimension_numbers<[1], [0], [0], [1], [0, 0, 1, 1], [], []>} : vector<8x72xf32>, vector<72x128xf32>, vector<8x128xf32> -> vector<8x128xf32>
    %582 = vector.broadcast %547 : vector<8x1xf32> to vector<8x128xf32>
    %583 = arith.addf %581, %582 : vector<8x128xf32>
    %c1_181 = arith.constant 1 : index
    %c0_182 = arith.constant 0 : index
    %c0_183 = arith.constant 0 : index
    %584 = vector.load %arg6[%c1_181, %c0_182, %c0_183] : memref<2x1x8xf32, #tpu.memory_space<vmem>>, vector<1x1x8xf32>
    %585 = vector.shape_cast %584 : vector<1x1x8xf32> to vector<1x8xf32>
    %c1_184 = arith.constant 1 : index
    %c0_185 = arith.constant 0 : index
    %c0_186 = arith.constant 0 : index
    %586 = vector.load %arg7[%c1_184, %c0_185, %c0_186] : memref<2x1x1xf32, #tpu.memory_space<vmem>>, vector<1x1x1xf32>
    %587 = vector.shape_cast %586 : vector<1x1x1xf32> to vector<1x1xf32>
    %c1_187 = arith.constant 1 : index
    %c0_188 = arith.constant 0 : index
    %c0_189 = arith.constant 0 : index
    %588 = vector.load %arg8[%c1_187, %c0_188, %c0_189] : memref<2x8x1xf32, #tpu.memory_space<vmem>>, vector<1x8x1xf32>
    %589 = vector.shape_cast %588 : vector<1x8x1xf32> to vector<8x1xf32>
    %c1_190 = arith.constant 1 : index
    %c0_191 = arith.constant 0 : index
    %c0_192 = arith.constant 0 : index
    %590 = vector.load %arg9[%c1_190, %c0_191, %c0_192] : memref<2x8x1xf32, #tpu.memory_space<vmem>>, vector<1x8x1xf32>
    %591 = vector.shape_cast %590 : vector<1x8x1xf32> to vector<8x1xf32>
    %592 = vector.extract_strided_slice %583 {offsets = [0, 0], sizes = [8, 64], strides = [1, 1]} : vector<8x128xf32> to vector<8x64xf32>
    %cst_193 = arith.constant dense<0.000000e+00> : vector<8xf32>
    %593 = vector.multi_reduction <add>, %592, %cst_193 [1] : vector<8x64xf32> to vector<8xf32>
    %594 = vector.shape_cast %593 : vector<8xf32> to vector<8x1xf32>
    %cst_194 = arith.constant 6.400000e+01 : f32
    %595 = vector.broadcast %cst_194 : f32 to vector<8x1xf32>
    %596 = arith.divf %594, %595 : vector<8x1xf32>
    %cst_195 = arith.constant dense<0xFF800000> : vector<8xf32>
    %597 = vector.multi_reduction <maximumf>, %592, %cst_195 [1] : vector<8x64xf32> to vector<8xf32>
    %598 = vector.shape_cast %597 : vector<8xf32> to vector<8x1xf32>
    %599 = vector.extract_strided_slice %583 {offsets = [0, 64], sizes = [8, 64], strides = [1, 1]} : vector<8x128xf32> to vector<8x64xf32>
    %cst_196 = arith.constant dense<0.000000e+00> : vector<8xf32>
    %600 = vector.multi_reduction <add>, %599, %cst_196 [1] : vector<8x64xf32> to vector<8xf32>
    %601 = vector.shape_cast %600 : vector<8xf32> to vector<8x1xf32>
    %cst_197 = arith.constant 6.400000e+01 : f32
    %602 = vector.broadcast %cst_197 : f32 to vector<8x1xf32>
    %603 = arith.divf %601, %602 : vector<8x1xf32>
    %cst_198 = arith.constant dense<0xFF800000> : vector<8xf32>
    %604 = vector.multi_reduction <maximumf>, %599, %cst_198 [1] : vector<8x64xf32> to vector<8xf32>
    %605 = vector.shape_cast %604 : vector<8xf32> to vector<8x1xf32>
    %606 = tpu.concatenate %596, %598, %603, %605 in 1 : vector<8x1xf32>, vector<8x1xf32>, vector<8x1xf32>, vector<8x1xf32> -> vector<8x4xf32>
    %cst_199 = arith.constant dense<0.000000e+00> : vector<1x4xf32>
    %607 = tpu.matmul %585, %606, %cst_199 {dimension_numbers = #tpu.dot_dimension_numbers<[1], [0], [0], [1], [0, 0, 1, 1], [], []>} : vector<1x8xf32>, vector<8x4xf32>, vector<1x4xf32> -> vector<1x4xf32>
    %608 = vector.broadcast %587 : vector<1x1xf32> to vector<1x4xf32>
    %609 = arith.addf %607, %608 : vector<1x4xf32>
    %cst_200 = arith.constant 0.000000e+00 : f32
    %610 = vector.broadcast %cst_200 : f32 to vector<1x4xf32>
    %611 = arith.maximumf %609, %610 : vector<1x4xf32>
    %cst_201 = arith.constant dense<0.000000e+00> : vector<8x4xf32>
    %612 = tpu.matmul %589, %611, %cst_201 {dimension_numbers = #tpu.dot_dimension_numbers<[1], [0], [0], [1], [0, 0, 1, 1], [], []>} : vector<8x1xf32>, vector<1x4xf32>, vector<8x4xf32> -> vector<8x4xf32>
    %613 = vector.broadcast %591 : vector<8x1xf32> to vector<8x4xf32>
    %614 = arith.addf %612, %613 : vector<8x4xf32>
    %cst_202 = arith.constant 5.000000e-01 : f32
    %615 = vector.broadcast %cst_202 : f32 to vector<8x4xf32>
    %616 = arith.mulf %615, %614 : vector<8x4xf32>
    %617 = math.tanh %616 : vector<8x4xf32>
    %cst_203 = arith.constant 5.000000e-01 : f32
    %618 = vector.broadcast %cst_203 : f32 to vector<8x4xf32>
    %619 = arith.mulf %618, %617 : vector<8x4xf32>
    %cst_204 = arith.constant 5.000000e-01 : f32
    %620 = vector.broadcast %cst_204 : f32 to vector<8x4xf32>
    %621 = arith.addf %619, %620 : vector<8x4xf32>
    %622 = vector.extract_strided_slice %621 {offsets = [0, 0], sizes = [8, 1], strides = [1, 1]} : vector<8x4xf32> to vector<8x1xf32>
    %623 = vector.extract_strided_slice %621 {offsets = [0, 1], sizes = [8, 1], strides = [1, 1]} : vector<8x4xf32> to vector<8x1xf32>
    %624 = arith.addf %622, %623 : vector<8x1xf32>
    %cst_205 = arith.constant 5.000000e-01 : f32
    %625 = vector.broadcast %cst_205 : f32 to vector<8x1xf32>
    %626 = arith.mulf %625, %624 : vector<8x1xf32>
    %627 = math.tanh %626 : vector<8x1xf32>
    %cst_206 = arith.constant 5.000000e-01 : f32
    %628 = vector.broadcast %cst_206 : f32 to vector<8x1xf32>
    %629 = arith.mulf %628, %627 : vector<8x1xf32>
    %cst_207 = arith.constant 5.000000e-01 : f32
    %630 = vector.broadcast %cst_207 : f32 to vector<8x1xf32>
    %631 = arith.addf %629, %630 : vector<8x1xf32>
    %632 = vector.extract_strided_slice %621 {offsets = [0, 2], sizes = [8, 1], strides = [1, 1]} : vector<8x4xf32> to vector<8x1xf32>
    %633 = vector.extract_strided_slice %621 {offsets = [0, 3], sizes = [8, 1], strides = [1, 1]} : vector<8x4xf32> to vector<8x1xf32>
    %634 = arith.addf %632, %633 : vector<8x1xf32>
    %cst_208 = arith.constant 5.000000e-01 : f32
    %635 = vector.broadcast %cst_208 : f32 to vector<8x1xf32>
    %636 = arith.mulf %635, %634 : vector<8x1xf32>
    %637 = math.tanh %636 : vector<8x1xf32>
    %cst_209 = arith.constant 5.000000e-01 : f32
    %638 = vector.broadcast %cst_209 : f32 to vector<8x1xf32>
    %639 = arith.mulf %638, %637 : vector<8x1xf32>
    %cst_210 = arith.constant 5.000000e-01 : f32
    %640 = vector.broadcast %cst_210 : f32 to vector<8x1xf32>
    %641 = arith.addf %639, %640 : vector<8x1xf32>
    %642 = tpu.concatenate %631, %641 in 1 : vector<8x1xf32>, vector<8x1xf32> -> vector<8x2xf32>
    %643 = vector.extract_strided_slice %642 {offsets = [0, 0], sizes = [8, 1], strides = [1, 1]} : vector<8x2xf32> to vector<8x1xf32>
    %644 = vector.shape_cast %643 : vector<8x1xf32> to vector<8x1xf32>
    %645 = vector.broadcast %644 : vector<8x1xf32> to vector<8x64xf32>
    %646 = vector.extract_strided_slice %642 {offsets = [0, 1], sizes = [8, 1], strides = [1, 1]} : vector<8x2xf32> to vector<8x1xf32>
    %647 = vector.shape_cast %646 : vector<8x1xf32> to vector<8x1xf32>
    %648 = vector.broadcast %647 : vector<8x1xf32> to vector<8x64xf32>
    %649 = tpu.concatenate %645, %648 in 1 : vector<8x64xf32>, vector<8x64xf32> -> vector<8x128xf32>
    %650 = arith.mulf %649, %583 : vector<8x128xf32>
    %cst_211 = arith.constant dense<0.000000e+00> : vector<128xf32>
    %651 = vector.multi_reduction <add>, %650, %cst_211 [0] : vector<8x128xf32> to vector<128xf32>
    %652 = vector.shape_cast %651 : vector<128xf32> to vector<1x128xf32>
    %cst_212 = arith.constant 8.000000e+00 : f32
    %653 = vector.broadcast %cst_212 : f32 to vector<1x128xf32>
    %654 = arith.divf %652, %653 : vector<1x128xf32>
    %cst_213 = arith.constant dense<0xFF800000> : vector<128xf32>
    %655 = vector.multi_reduction <maximumf>, %650, %cst_213 [0] : vector<8x128xf32> to vector<128xf32>
    %656 = vector.shape_cast %655 : vector<128xf32> to vector<1x128xf32>
    %c2_214 = arith.constant 2 : index
    %c0_215 = arith.constant 0 : index
    %c0_216 = arith.constant 0 : index
    %657 = vector.load %arg10[%c2_214, %c0_215, %c0_216] : memref<3x18x128xf32, #tpu.memory_space<vmem>>, vector<1x18x128xf32>
    %658 = vector.shape_cast %657 : vector<1x18x128xf32> to vector<18x128xf32>
    %c2_217 = arith.constant 2 : index
    %c0_218 = arith.constant 0 : index
    %c0_219 = arith.constant 0 : index
    %659 = vector.load %arg11[%c2_217, %c0_218, %c0_219] : memref<3x1x128xf32, #tpu.memory_space<vmem>>, vector<1x1x128xf32>
    %660 = vector.shape_cast %659 : vector<1x1x128xf32> to vector<1x128xf32>
    %661 = vector.extract_strided_slice %658 {offsets = [0, 0], sizes = [1, 128], strides = [1, 1]} : vector<18x128xf32> to vector<1x128xf32>
    %c9_i32_220 = arith.constant 9 : i32
    %662 = tpu.dynamic_rotate %654 by %c9_i32_220 dim 1 : vector<1x128xf32>, i32 -> vector<1x128xf32>
    %663 = vector.extract_strided_slice %0 {offsets = [0, 0], sizes = [1, 128], strides = [1, 1]} : vector<9x128xf32> to vector<1x128xf32>
    %664 = arith.mulf %662, %663 : vector<1x128xf32>
    %665 = arith.mulf %661, %664 : vector<1x128xf32>
    %666 = arith.addf %660, %665 : vector<1x128xf32>
    %667 = vector.extract_strided_slice %658 {offsets = [1, 0], sizes = [1, 128], strides = [1, 1]} : vector<18x128xf32> to vector<1x128xf32>
    %c9_i32_221 = arith.constant 9 : i32
    %668 = tpu.dynamic_rotate %656 by %c9_i32_221 dim 1 : vector<1x128xf32>, i32 -> vector<1x128xf32>
    %669 = vector.extract_strided_slice %0 {offsets = [0, 0], sizes = [1, 128], strides = [1, 1]} : vector<9x128xf32> to vector<1x128xf32>
    %670 = arith.mulf %668, %669 : vector<1x128xf32>
    %671 = arith.mulf %667, %670 : vector<1x128xf32>
    %672 = arith.addf %666, %671 : vector<1x128xf32>
    %673 = vector.extract_strided_slice %658 {offsets = [2, 0], sizes = [1, 128], strides = [1, 1]} : vector<18x128xf32> to vector<1x128xf32>
    %c8_i32_222 = arith.constant 8 : i32
    %674 = tpu.dynamic_rotate %654 by %c8_i32_222 dim 1 : vector<1x128xf32>, i32 -> vector<1x128xf32>
    %675 = vector.extract_strided_slice %0 {offsets = [1, 0], sizes = [1, 128], strides = [1, 1]} : vector<9x128xf32> to vector<1x128xf32>
    %676 = arith.mulf %674, %675 : vector<1x128xf32>
    %677 = arith.mulf %673, %676 : vector<1x128xf32>
    %678 = arith.addf %672, %677 : vector<1x128xf32>
    %679 = vector.extract_strided_slice %658 {offsets = [3, 0], sizes = [1, 128], strides = [1, 1]} : vector<18x128xf32> to vector<1x128xf32>
    %c8_i32_223 = arith.constant 8 : i32
    %680 = tpu.dynamic_rotate %656 by %c8_i32_223 dim 1 : vector<1x128xf32>, i32 -> vector<1x128xf32>
    %681 = vector.extract_strided_slice %0 {offsets = [1, 0], sizes = [1, 128], strides = [1, 1]} : vector<9x128xf32> to vector<1x128xf32>
    %682 = arith.mulf %680, %681 : vector<1x128xf32>
    %683 = arith.mulf %679, %682 : vector<1x128xf32>
    %684 = arith.addf %678, %683 : vector<1x128xf32>
    %685 = vector.extract_strided_slice %658 {offsets = [4, 0], sizes = [1, 128], strides = [1, 1]} : vector<18x128xf32> to vector<1x128xf32>
    %c7_i32_224 = arith.constant 7 : i32
    %686 = tpu.dynamic_rotate %654 by %c7_i32_224 dim 1 : vector<1x128xf32>, i32 -> vector<1x128xf32>
    %687 = vector.extract_strided_slice %0 {offsets = [2, 0], sizes = [1, 128], strides = [1, 1]} : vector<9x128xf32> to vector<1x128xf32>
    %688 = arith.mulf %686, %687 : vector<1x128xf32>
    %689 = arith.mulf %685, %688 : vector<1x128xf32>
    %690 = arith.addf %684, %689 : vector<1x128xf32>
    %691 = vector.extract_strided_slice %658 {offsets = [5, 0], sizes = [1, 128], strides = [1, 1]} : vector<18x128xf32> to vector<1x128xf32>
    %c7_i32_225 = arith.constant 7 : i32
    %692 = tpu.dynamic_rotate %656 by %c7_i32_225 dim 1 : vector<1x128xf32>, i32 -> vector<1x128xf32>
    %693 = vector.extract_strided_slice %0 {offsets = [2, 0], sizes = [1, 128], strides = [1, 1]} : vector<9x128xf32> to vector<1x128xf32>
    %694 = arith.mulf %692, %693 : vector<1x128xf32>
    %695 = arith.mulf %691, %694 : vector<1x128xf32>
    %696 = arith.addf %690, %695 : vector<1x128xf32>
    %697 = vector.extract_strided_slice %658 {offsets = [6, 0], sizes = [1, 128], strides = [1, 1]} : vector<18x128xf32> to vector<1x128xf32>
    %c1_i32_226 = arith.constant 1 : i32
    %698 = tpu.dynamic_rotate %654 by %c1_i32_226 dim 1 : vector<1x128xf32>, i32 -> vector<1x128xf32>
    %699 = vector.extract_strided_slice %0 {offsets = [3, 0], sizes = [1, 128], strides = [1, 1]} : vector<9x128xf32> to vector<1x128xf32>
    %700 = arith.mulf %698, %699 : vector<1x128xf32>
    %701 = arith.mulf %697, %700 : vector<1x128xf32>
    %702 = arith.addf %696, %701 : vector<1x128xf32>
    %703 = vector.extract_strided_slice %658 {offsets = [7, 0], sizes = [1, 128], strides = [1, 1]} : vector<18x128xf32> to vector<1x128xf32>
    %c1_i32_227 = arith.constant 1 : i32
    %704 = tpu.dynamic_rotate %656 by %c1_i32_227 dim 1 : vector<1x128xf32>, i32 -> vector<1x128xf32>
    %705 = vector.extract_strided_slice %0 {offsets = [3, 0], sizes = [1, 128], strides = [1, 1]} : vector<9x128xf32> to vector<1x128xf32>
    %706 = arith.mulf %704, %705 : vector<1x128xf32>
    %707 = arith.mulf %703, %706 : vector<1x128xf32>
    %708 = arith.addf %702, %707 : vector<1x128xf32>
    %709 = vector.extract_strided_slice %658 {offsets = [8, 0], sizes = [1, 128], strides = [1, 1]} : vector<18x128xf32> to vector<1x128xf32>
    %710 = arith.mulf %709, %654 : vector<1x128xf32>
    %711 = arith.addf %708, %710 : vector<1x128xf32>
    %712 = vector.extract_strided_slice %658 {offsets = [9, 0], sizes = [1, 128], strides = [1, 1]} : vector<18x128xf32> to vector<1x128xf32>
    %713 = arith.mulf %712, %656 : vector<1x128xf32>
    %714 = arith.addf %711, %713 : vector<1x128xf32>
    %715 = vector.extract_strided_slice %658 {offsets = [10, 0], sizes = [1, 128], strides = [1, 1]} : vector<18x128xf32> to vector<1x128xf32>
    %c127_i32_228 = arith.constant 127 : i32
    %716 = tpu.dynamic_rotate %654 by %c127_i32_228 dim 1 : vector<1x128xf32>, i32 -> vector<1x128xf32>
    %717 = vector.extract_strided_slice %0 {offsets = [5, 0], sizes = [1, 128], strides = [1, 1]} : vector<9x128xf32> to vector<1x128xf32>
    %718 = arith.mulf %716, %717 : vector<1x128xf32>
    %719 = arith.mulf %715, %718 : vector<1x128xf32>
    %720 = arith.addf %714, %719 : vector<1x128xf32>
    %721 = vector.extract_strided_slice %658 {offsets = [11, 0], sizes = [1, 128], strides = [1, 1]} : vector<18x128xf32> to vector<1x128xf32>
    %c127_i32_229 = arith.constant 127 : i32
    %722 = tpu.dynamic_rotate %656 by %c127_i32_229 dim 1 : vector<1x128xf32>, i32 -> vector<1x128xf32>
    %723 = vector.extract_strided_slice %0 {offsets = [5, 0], sizes = [1, 128], strides = [1, 1]} : vector<9x128xf32> to vector<1x128xf32>
    %724 = arith.mulf %722, %723 : vector<1x128xf32>
    %725 = arith.mulf %721, %724 : vector<1x128xf32>
    %726 = arith.addf %720, %725 : vector<1x128xf32>
    %727 = vector.extract_strided_slice %658 {offsets = [12, 0], sizes = [1, 128], strides = [1, 1]} : vector<18x128xf32> to vector<1x128xf32>
    %c121_i32_230 = arith.constant 121 : i32
    %728 = tpu.dynamic_rotate %654 by %c121_i32_230 dim 1 : vector<1x128xf32>, i32 -> vector<1x128xf32>
    %729 = vector.extract_strided_slice %0 {offsets = [6, 0], sizes = [1, 128], strides = [1, 1]} : vector<9x128xf32> to vector<1x128xf32>
    %730 = arith.mulf %728, %729 : vector<1x128xf32>
    %731 = arith.mulf %727, %730 : vector<1x128xf32>
    %732 = arith.addf %726, %731 : vector<1x128xf32>
    %733 = vector.extract_strided_slice %658 {offsets = [13, 0], sizes = [1, 128], strides = [1, 1]} : vector<18x128xf32> to vector<1x128xf32>
    %c121_i32_231 = arith.constant 121 : i32
    %734 = tpu.dynamic_rotate %656 by %c121_i32_231 dim 1 : vector<1x128xf32>, i32 -> vector<1x128xf32>
    %735 = vector.extract_strided_slice %0 {offsets = [6, 0], sizes = [1, 128], strides = [1, 1]} : vector<9x128xf32> to vector<1x128xf32>
    %736 = arith.mulf %734, %735 : vector<1x128xf32>
    %737 = arith.mulf %733, %736 : vector<1x128xf32>
    %738 = arith.addf %732, %737 : vector<1x128xf32>
    %739 = vector.extract_strided_slice %658 {offsets = [14, 0], sizes = [1, 128], strides = [1, 1]} : vector<18x128xf32> to vector<1x128xf32>
    %c120_i32_232 = arith.constant 120 : i32
    %740 = tpu.dynamic_rotate %654 by %c120_i32_232 dim 1 : vector<1x128xf32>, i32 -> vector<1x128xf32>
    %741 = vector.extract_strided_slice %0 {offsets = [7, 0], sizes = [1, 128], strides = [1, 1]} : vector<9x128xf32> to vector<1x128xf32>
    %742 = arith.mulf %740, %741 : vector<1x128xf32>
    %743 = arith.mulf %739, %742 : vector<1x128xf32>
    %744 = arith.addf %738, %743 : vector<1x128xf32>
    %745 = vector.extract_strided_slice %658 {offsets = [15, 0], sizes = [1, 128], strides = [1, 1]} : vector<18x128xf32> to vector<1x128xf32>
    %c120_i32_233 = arith.constant 120 : i32
    %746 = tpu.dynamic_rotate %656 by %c120_i32_233 dim 1 : vector<1x128xf32>, i32 -> vector<1x128xf32>
    %747 = vector.extract_strided_slice %0 {offsets = [7, 0], sizes = [1, 128], strides = [1, 1]} : vector<9x128xf32> to vector<1x128xf32>
    %748 = arith.mulf %746, %747 : vector<1x128xf32>
    %749 = arith.mulf %745, %748 : vector<1x128xf32>
    %750 = arith.addf %744, %749 : vector<1x128xf32>
    %751 = vector.extract_strided_slice %658 {offsets = [16, 0], sizes = [1, 128], strides = [1, 1]} : vector<18x128xf32> to vector<1x128xf32>
    %c119_i32_234 = arith.constant 119 : i32
    %752 = tpu.dynamic_rotate %654 by %c119_i32_234 dim 1 : vector<1x128xf32>, i32 -> vector<1x128xf32>
    %753 = vector.extract_strided_slice %0 {offsets = [8, 0], sizes = [1, 128], strides = [1, 1]} : vector<9x128xf32> to vector<1x128xf32>
    %754 = arith.mulf %752, %753 : vector<1x128xf32>
    %755 = arith.mulf %751, %754 : vector<1x128xf32>
    %756 = arith.addf %750, %755 : vector<1x128xf32>
    %757 = vector.extract_strided_slice %658 {offsets = [17, 0], sizes = [1, 128], strides = [1, 1]} : vector<18x128xf32> to vector<1x128xf32>
    %c119_i32_235 = arith.constant 119 : i32
    %758 = tpu.dynamic_rotate %656 by %c119_i32_235 dim 1 : vector<1x128xf32>, i32 -> vector<1x128xf32>
    %759 = vector.extract_strided_slice %0 {offsets = [8, 0], sizes = [1, 128], strides = [1, 1]} : vector<9x128xf32> to vector<1x128xf32>
    %760 = arith.mulf %758, %759 : vector<1x128xf32>
    %761 = arith.mulf %757, %760 : vector<1x128xf32>
    %762 = arith.addf %756, %761 : vector<1x128xf32>
    %cst_236 = arith.constant 5.000000e-01 : f32
    %763 = vector.broadcast %cst_236 : f32 to vector<1x128xf32>
    %764 = arith.mulf %763, %762 : vector<1x128xf32>
    %765 = math.tanh %764 : vector<1x128xf32>
    %cst_237 = arith.constant 5.000000e-01 : f32
    %766 = vector.broadcast %cst_237 : f32 to vector<1x128xf32>
    %767 = arith.mulf %766, %765 : vector<1x128xf32>
    %cst_238 = arith.constant 5.000000e-01 : f32
    %768 = vector.broadcast %cst_238 : f32 to vector<1x128xf32>
    %769 = arith.addf %767, %768 : vector<1x128xf32>
    %770 = vector.broadcast %769 : vector<1x128xf32> to vector<8x128xf32>
    %771 = arith.mulf %770, %650 : vector<8x128xf32>
    %772 = arith.mulf %771, %583 : vector<8x128xf32>
    %773 = arith.addf %772, %501 : vector<8x128xf32>
    %cst_239 = arith.constant 0.000000e+00 : f32
    %774 = vector.broadcast %cst_239 : f32 to vector<8x128xf32>
    %775 = arith.maximumf %773, %774 : vector<8x128xf32>
    %c0_240 = arith.constant 0 : index
    %c0_241 = arith.constant 0 : index
    %776 = vector.load %arg14[%c0_240, %c0_241] : memref<8x8xf32, #tpu.memory_space<vmem>>, vector<8x8xf32>
    %cst_242 = arith.constant dense<0.000000e+00> : vector<8x128xf32>
    %777 = tpu.matmul %776, %775, %cst_242 {dimension_numbers = #tpu.dot_dimension_numbers<[1], [0], [0], [1], [0, 0, 1, 1], [], []>} : vector<8x8xf32>, vector<8x128xf32>, vector<8x128xf32> -> vector<8x128xf32>
    %c5 = arith.constant 5 : index
    %c0_243 = arith.constant 0 : index
    %c0_244 = arith.constant 0 : index
    %778 = vector.load %arg15[%c5, %c0_243, %c0_244] : memref<6x8x1xf32, #tpu.memory_space<vmem>>, vector<1x8x1xf32>
    %779 = vector.shape_cast %778 : vector<1x8x1xf32> to vector<8x1xf32>
    %780 = vector.broadcast %779 : vector<8x1xf32> to vector<8x128xf32>
    %781 = arith.addf %777, %780 : vector<8x128xf32>
    %782 = vector.extract_strided_slice %781 {offsets = [0, 0], sizes = [1, 64], strides = [1, 1]} : vector<8x128xf32> to vector<1x64xf32>
    %783 = vector.extract_strided_slice %781 {offsets = [1, 0], sizes = [1, 64], strides = [1, 1]} : vector<8x128xf32> to vector<1x64xf32>
    %784 = vector.extract_strided_slice %781 {offsets = [2, 0], sizes = [1, 64], strides = [1, 1]} : vector<8x128xf32> to vector<1x64xf32>
    %785 = vector.extract_strided_slice %781 {offsets = [3, 0], sizes = [1, 64], strides = [1, 1]} : vector<8x128xf32> to vector<1x64xf32>
    %786 = vector.extract_strided_slice %781 {offsets = [4, 0], sizes = [1, 64], strides = [1, 1]} : vector<8x128xf32> to vector<1x64xf32>
    %787 = vector.extract_strided_slice %781 {offsets = [5, 0], sizes = [1, 64], strides = [1, 1]} : vector<8x128xf32> to vector<1x64xf32>
    %788 = vector.extract_strided_slice %781 {offsets = [6, 0], sizes = [1, 64], strides = [1, 1]} : vector<8x128xf32> to vector<1x64xf32>
    %789 = vector.extract_strided_slice %781 {offsets = [7, 0], sizes = [1, 64], strides = [1, 1]} : vector<8x128xf32> to vector<1x64xf32>
    %790 = tpu.concatenate %782, %783, %784, %785, %786, %787, %788, %789 in 1 : vector<1x64xf32>, vector<1x64xf32>, vector<1x64xf32>, vector<1x64xf32>, vector<1x64xf32>, vector<1x64xf32>, vector<1x64xf32>, vector<1x64xf32> -> vector<1x512xf32>
    %791 = vector.extract_strided_slice %781 {offsets = [0, 64], sizes = [1, 64], strides = [1, 1]} : vector<8x128xf32> to vector<1x64xf32>
    %792 = vector.extract_strided_slice %781 {offsets = [1, 64], sizes = [1, 64], strides = [1, 1]} : vector<8x128xf32> to vector<1x64xf32>
    %793 = vector.extract_strided_slice %781 {offsets = [2, 64], sizes = [1, 64], strides = [1, 1]} : vector<8x128xf32> to vector<1x64xf32>
    %794 = vector.extract_strided_slice %781 {offsets = [3, 64], sizes = [1, 64], strides = [1, 1]} : vector<8x128xf32> to vector<1x64xf32>
    %795 = vector.extract_strided_slice %781 {offsets = [4, 64], sizes = [1, 64], strides = [1, 1]} : vector<8x128xf32> to vector<1x64xf32>
    %796 = vector.extract_strided_slice %781 {offsets = [5, 64], sizes = [1, 64], strides = [1, 1]} : vector<8x128xf32> to vector<1x64xf32>
    %797 = vector.extract_strided_slice %781 {offsets = [6, 64], sizes = [1, 64], strides = [1, 1]} : vector<8x128xf32> to vector<1x64xf32>
    %798 = vector.extract_strided_slice %781 {offsets = [7, 64], sizes = [1, 64], strides = [1, 1]} : vector<8x128xf32> to vector<1x64xf32>
    %799 = tpu.concatenate %791, %792, %793, %794, %795, %796, %797, %798 in 1 : vector<1x64xf32>, vector<1x64xf32>, vector<1x64xf32>, vector<1x64xf32>, vector<1x64xf32>, vector<1x64xf32>, vector<1x64xf32>, vector<1x64xf32> -> vector<1x512xf32>
    %800 = tpu.concatenate %790, %799 in 0 : vector<1x512xf32>, vector<1x512xf32> -> vector<2x512xf32>
    %c0_245 = arith.constant 0 : index
    %c0_246 = arith.constant 0 : index
    %801 = vector.load %arg16[%c0_245, %c0_246] : memref<512x128xf32, #tpu.memory_space<vmem>>, vector<512x128xf32>
    %cst_247 = arith.constant dense<0.000000e+00> : vector<2x128xf32>
    %802 = tpu.matmul %800, %801, %cst_247 {dimension_numbers = #tpu.dot_dimension_numbers<[1], [0], [0], [1], [0, 0, 1, 1], [], []>} : vector<2x512xf32>, vector<512x128xf32>, vector<2x128xf32> -> vector<2x128xf32>
    %c0_248 = arith.constant 0 : index
    %c0_249 = arith.constant 0 : index
    %803 = vector.load %arg17[%c0_248, %c0_249] : memref<1x128xf32, #tpu.memory_space<vmem>>, vector<1x128xf32>
    %804 = vector.broadcast %803 : vector<1x128xf32> to vector<2x128xf32>
    %805 = arith.addf %802, %804 : vector<2x128xf32>
    %c0_250 = arith.constant 0 : index
    %c0_251 = arith.constant 0 : index
    %c0_252 = arith.constant 0 : index
    %806 = vector.load %arg19[%c0_250, %c0_251, %c0_252] : memref<1x2x128xf32, #tpu.memory_space<vmem>>, vector<1x2x128xf32>
    %807 = vector.shape_cast %806 : vector<1x2x128xf32> to vector<2x128xf32>
    %808 = vector.shape_cast %805 : vector<2x128xf32> to vector<1x2x128xf32>
    tpu.vector_store %arg19[%c0_250, %c0_251, %c0_252], %808 {strides = array<i32>} : memref<1x2x128xf32, #tpu.memory_space<vmem>>, vector<1x2x128xf32>,
    return
  }
  func.func @transform_0(%arg0: i32) -> (i32, i32, i32) {
    %c0_i32 = arith.constant 0 : i32
    %c0_i32_0 = arith.constant 0 : i32
    %c0_i32_1 = arith.constant 0 : i32
    return %arg0, %c0_i32, %c0_i32_0 : i32, i32, i32
  }
  func.func @transform_1(%arg0: i32) -> (i32, i32) {
    %c0_i32 = arith.constant 0 : i32
    %c0_i32_0 = arith.constant 0 : i32
    %c0_i32_1 = arith.constant 0 : i32
    return %c0_i32, %c0_i32_0 : i32, i32
  }
  func.func @transform_2(%arg0: i32) -> (i32, i32) {
    %c0_i32 = arith.constant 0 : i32
    %c0_i32_0 = arith.constant 0 : i32
    %c0_i32_1 = arith.constant 0 : i32
    return %c0_i32, %c0_i32_0 : i32, i32
  }
  func.func @transform_3(%arg0: i32) -> (i32, i32) {
    %c0_i32 = arith.constant 0 : i32
    %c0_i32_0 = arith.constant 0 : i32
    %c0_i32_1 = arith.constant 0 : i32
    return %c0_i32, %c0_i32_0 : i32, i32
  }
  func.func @transform_4(%arg0: i32) -> (i32, i32) {
    %c0_i32 = arith.constant 0 : i32
    %c0_i32_0 = arith.constant 0 : i32
    %c0_i32_1 = arith.constant 0 : i32
    return %c0_i32, %c0_i32_0 : i32, i32
  }
  func.func @transform_5(%arg0: i32) -> (i32, i32, i32) {
    %c0_i32 = arith.constant 0 : i32
    %c0_i32_0 = arith.constant 0 : i32
    %c0_i32_1 = arith.constant 0 : i32
    %c0_i32_2 = arith.constant 0 : i32
    return %c0_i32, %c0_i32_0, %c0_i32_1 : i32, i32, i32
  }
  func.func @transform_6(%arg0: i32) -> (i32, i32, i32) {
    %c0_i32 = arith.constant 0 : i32
    %c0_i32_0 = arith.constant 0 : i32
    %c0_i32_1 = arith.constant 0 : i32
    %c0_i32_2 = arith.constant 0 : i32
    return %c0_i32, %c0_i32_0, %c0_i32_1 : i32, i32, i32
  }
  func.func @transform_7(%arg0: i32) -> (i32, i32, i32) {
    %c0_i32 = arith.constant 0 : i32
    %c0_i32_0 = arith.constant 0 : i32
    %c0_i32_1 = arith.constant 0 : i32
    %c0_i32_2 = arith.constant 0 : i32
    return %c0_i32, %c0_i32_0, %c0_i32_1 : i32, i32, i32
  }
  func.func @transform_8(%arg0: i32) -> (i32, i32, i32) {
    %c0_i32 = arith.constant 0 : i32
    %c0_i32_0 = arith.constant 0 : i32
    %c0_i32_1 = arith.constant 0 : i32
    %c0_i32_2 = arith.constant 0 : i32
    return %c0_i32, %c0_i32_0, %c0_i32_1 : i32, i32, i32
  }
  func.func @transform_9(%arg0: i32) -> (i32, i32, i32) {
    %c0_i32 = arith.constant 0 : i32
    %c0_i32_0 = arith.constant 0 : i32
    %c0_i32_1 = arith.constant 0 : i32
    %c0_i32_2 = arith.constant 0 : i32
    return %c0_i32, %c0_i32_0, %c0_i32_1 : i32, i32, i32
  }
  func.func @transform_10(%arg0: i32) -> (i32, i32, i32) {
    %c0_i32 = arith.constant 0 : i32
    %c0_i32_0 = arith.constant 0 : i32
    %c0_i32_1 = arith.constant 0 : i32
    %c0_i32_2 = arith.constant 0 : i32
    return %c0_i32, %c0_i32_0, %c0_i32_1 : i32, i32, i32
  }
  func.func @transform_11(%arg0: i32) -> (i32, i32) {
    %c0_i32 = arith.constant 0 : i32
    %c0_i32_0 = arith.constant 0 : i32
    %c0_i32_1 = arith.constant 0 : i32
    return %c0_i32, %c0_i32_0 : i32, i32
  }
  func.func @transform_12(%arg0: i32) -> (i32, i32, i32) {
    %c0_i32 = arith.constant 0 : i32
    %c0_i32_0 = arith.constant 0 : i32
    %c0_i32_1 = arith.constant 0 : i32
    %c0_i32_2 = arith.constant 0 : i32
    return %c0_i32, %c0_i32_0, %c0_i32_1 : i32, i32, i32
  }
  func.func @transform_13(%arg0: i32) -> (i32, i32) {
    %c0_i32 = arith.constant 0 : i32
    %c0_i32_0 = arith.constant 0 : i32
    %c0_i32_1 = arith.constant 0 : i32
    return %c0_i32, %c0_i32_0 : i32, i32
  }
  func.func @transform_14(%arg0: i32) -> (i32, i32, i32) {
    %c0_i32 = arith.constant 0 : i32
    %c0_i32_0 = arith.constant 0 : i32
    %c0_i32_1 = arith.constant 0 : i32
    %c0_i32_2 = arith.constant 0 : i32
    return %c0_i32, %c0_i32_0, %c0_i32_1 : i32, i32, i32
  }
  func.func @transform_15(%arg0: i32) -> (i32, i32) {
    %c0_i32 = arith.constant 0 : i32
    %c0_i32_0 = arith.constant 0 : i32
    %c0_i32_1 = arith.constant 0 : i32
    return %c0_i32, %c0_i32_0 : i32, i32
  }
  func.func @transform_16(%arg0: i32) -> (i32, i32) {
    %c0_i32 = arith.constant 0 : i32
    %c0_i32_0 = arith.constant 0 : i32
    %c0_i32_1 = arith.constant 0 : i32
    return %c0_i32, %c0_i32_0 : i32, i32
  }
  func.func @transform_17(%arg0: i32) -> (i32, i32) {
    %c0_i32 = arith.constant 0 : i32
    %c0_i32_0 = arith.constant 0 : i32
    %c0_i32_1 = arith.constant 0 : i32
    return %c0_i32, %c0_i32_0 : i32, i32
  }
  func.func @transform_18(%arg0: i32) -> (i32, i32, i32) {
    %c0_i32 = arith.constant 0 : i32
    %c0_i32_0 = arith.constant 0 : i32
    %c0_i32_1 = arith.constant 0 : i32
    return %arg0, %c0_i32, %c0_i32_0 : i32, i32, i32
  }
}

</mosaic_0001>

<llo_original>
// kernel: tpu_custom_call.1
$region0: #{tpu_custom_call.1}
  #allocation0 [shape = 'u32[]', space=smem, size = 0x4, offset = 0x4, fixed_abs, tag = 'smem constant byte address 0x4 - core index']
  #allocation1 [shape = 'u32[72,128]{1,0:T(1,128)}', space=vmem, size = 0x9000, scoped, tag = 'internal scratch']
  %s0 = inlined_call_operand.vmem [shape: f32[1,16,128], index: 0, kind: input, shape index: {}]
  %s1 = inlined_call_operand.hbm [shape: f32[2,16], index: 1, kind: input, shape index: {}]
  %s2 = inlined_call_operand.vmem [shape: f32[2,1], index: 2, kind: input, shape index: {}]
  %s3 = inlined_call_operand.vmem [shape: f32[16,2], index: 3, kind: input, shape index: {}]
  %s4 = inlined_call_operand.vmem [shape: f32[16,1], index: 4, kind: input, shape index: {}]
  %s5 = inlined_call_operand.hbm [shape: f32[2,1,8], index: 5, kind: input, shape index: {}]
  %s6 = inlined_call_operand.vmem [shape: f32[2,1,1], index: 6, kind: input, shape index: {}]
  %s7 = inlined_call_operand.vmem [shape: f32[2,8,1], index: 7, kind: input, shape index: {}]
  %s8 = inlined_call_operand.vmem [shape: f32[2,8,1], index: 8, kind: input, shape index: {}]
  %s9 = inlined_call_operand.vmem [shape: f32[3,18,128], index: 9, kind: input, shape index: {}]
  %s10 = inlined_call_operand.hbm [shape: f32[3,1,128], index: 10, kind: input, shape index: {}]
  %s11 = inlined_call_operand.vmem [shape: f32[8,144], index: 11, kind: input, shape index: {}]
  %s12 = inlined_call_operand.vmem [shape: f32[4,8,72], index: 12, kind: input, shape index: {}]
  %s13 = inlined_call_operand.hbm [shape: f32[8,8], index: 13, kind: input, shape index: {}]
  %s14 = inlined_call_operand.vmem [shape: f32[6,8,1], index: 14, kind: input, shape index: {}]
  %s15 = inlined_call_operand.hbm [shape: f32[512,128], index: 15, kind: input, shape index: {}]
  %s16 = inlined_call_operand.vmem [shape: f32[1,128], index: 16, kind: input, shape index: {}]
  %s17 = inlined_call_operand.hbm [shape: f32[9,128], index: 17, kind: input, shape index: {}]
  %s18 = inlined_call_operand.hbm [shape: f32[1,2,128], index: 18, kind: output, shape index: {}]
  %s19 = sld [smem:[#allocation0]]
  $region106: #{tpu_custom_call.1} parent=0
    _
  %s21 = ssub.s32 1, %s19
  %s22 = scalar_select 0, %s21, %s19
  $region1: #{tpu_custom_call.1} parent=0
    #allocation2 [shape = 'u8[1024]{0}', space=vmem, size = 0x400, scoped, tag = 'input window, operand 1, single buffered']
    #allocation3 [shape = 's32[1]{0}', space=sflag, size = 0x4, scoped, tag = 'scoped memory for tpu_custom_call.1']
    #allocation4 [shape = 's32[1]{0}', space=sflag, size = 0x4, scoped, tag = 'scoped memory for tpu_custom_call.1']
    #allocation5 [shape = 'u8[1024]{0}', space=vmem, size = 0x400, scoped, tag = 'input window, operand 5, single buffered']
    #allocation6 [shape = 's32[1]{0}', space=sflag, size = 0x4, scoped, tag = 'scoped memory for tpu_custom_call.1']
    #allocation7 [shape = 'u8[1536]{0}', space=vmem, size = 0x800, scoped, tag = 'input window, operand 10, single buffered']
    #allocation8 [shape = 'u8[4096]{0}', space=vmem, size = 0x1000, scoped, tag = 'input window, operand 13, single buffered']
    #allocation9 [shape = 's32[1]{0}', space=sflag, size = 0x4, scoped, tag = 'scoped memory for tpu_custom_call.1']
    #allocation10 [shape = 'u8[262144]{0}', space=vmem, size = 0x40000, scoped, tag = 'input window, operand 15, single buffered']
    #allocation11 [shape = 'u8[8192]{0}', space=vmem, size = 0x2000, scoped, tag = 'input window, operand 17, single buffered']
    #allocation12 [shape = 's32[1]{0}', space=sflag, size = 0x4, scoped, tag = 'scoped memory for tpu_custom_call.1']
    #allocation13 [shape = 'u8[1024]{0}', space=vmem, size = 0x400, scoped, tag = 'output window, operand 0, single buffered']
    %23 = vsyncpa [#allocation3], 0
    %24 = vsyncpa [#allocation6], 0
    %25 = vsyncpa [#allocation9], 0
    %26 = vsyncpa [#allocation12], 0
    %27 = vsyncpa [#allocation4], 0
    // Predicated region
    $region2: #{tpu_custom_call.1} parent=1 // pred_check
      _
    $region3: #{tpu_custom_call.1} parent=1 // pred_check_branch
      %29 = sbr.rel (0) target = $region5
    $region4: #{tpu_custom_call.1} parent=1 // pred_region
      _
    $region5: #{tpu_custom_call.1} parent=1 // pred_fallthru
      _
    // Predicated region
    $region6: #{tpu_custom_call.1} parent=1 // pred_check
      _
    $region7: #{tpu_custom_call.1} parent=1 // pred_check_branch
      %31 = sbr.rel (0) target = $region9
    $region8: #{tpu_custom_call.1} parent=1 // pred_region
      %33 = vsyncadd [#allocation3], 0
      %s35 = sshll.u32 %s1, 4
      %s36 = int_to_ptr.hbm [resolvable:$true] %s35
      %s37 = sshll.u32 [#allocation2], 4
      %s38 = int_to_ptr.vmem [resolvable:$true] %s37
      %40 = dma.hbm_to_vmem [thread:$0]  %s36, 32, %s38, [#allocation3]
    $region9: #{tpu_custom_call.1} parent=1 // pred_fallthru
      _
    // Predicated region
    $region10: #{tpu_custom_call.1} parent=1 // pred_check
      _
    $region11: #{tpu_custom_call.1} parent=1 // pred_check_branch
      %42 = sbr.rel (0) target = $region13
    $region12: #{tpu_custom_call.1} parent=1 // pred_region
      _
    $region13: #{tpu_custom_call.1} parent=1 // pred_fallthru
      _
    // Predicated region
    $region14: #{tpu_custom_call.1} parent=1 // pred_check
      _
    $region15: #{tpu_custom_call.1} parent=1 // pred_check_branch
      %44 = sbr.rel (0) target = $region17
    $region16: #{tpu_custom_call.1} parent=1 // pred_region
      _
    $region17: #{tpu_custom_call.1} parent=1 // pred_fallthru
      _
    // Predicated region
    $region18: #{tpu_custom_call.1} parent=1 // pred_check
      _
    $region19: #{tpu_custom_call.1} parent=1 // pred_check_branch
      %46 = sbr.rel (0) target = $region21
    $region20: #{tpu_custom_call.1} parent=1 // pred_region
      _
    $region21: #{tpu_custom_call.1} parent=1 // pred_fallthru
      _
    // Predicated region
    $region22: #{tpu_custom_call.1} parent=1 // pred_check
      _
    $region23: #{tpu_custom_call.1} parent=1 // pred_check_branch
      %48 = sbr.rel (0) target = $region25
    $region24: #{tpu_custom_call.1} parent=1 // pred_region
      %50 = vsyncadd [#allocation6], 0
      %s51 = sshll.u32 %s5, 4
      %s52 = int_to_ptr.hbm [resolvable:$true] %s51
      %s53 = sshll.u32 [#allocation5], 4
      %s54 = int_to_ptr.vmem [resolvable:$true] %s53
      %59 = dma.hbm_to_vmem [thread:$0]  %s52, 32, %s54, [#allocation6], 16, 16, 1
    $region25: #{tpu_custom_call.1} parent=1 // pred_fallthru
      _
    // Predicated region
    $region26: #{tpu_custom_call.1} parent=1 // pred_check
      _
    $region27: #{tpu_custom_call.1} parent=1 // pred_check_branch
      %61 = sbr.rel (0) target = $region29
    $region28: #{tpu_custom_call.1} parent=1 // pred_region
      _
    $region29: #{tpu_custom_call.1} parent=1 // pred_fallthru
      _
    // Predicated region
    $region30: #{tpu_custom_call.1} parent=1 // pred_check
      _
    $region31: #{tpu_custom_call.1} parent=1 // pred_check_branch
      %63 = sbr.rel (0) target = $region33
    $region32: #{tpu_custom_call.1} parent=1 // pred_region
      _
    $region33: #{tpu_custom_call.1} parent=1 // pred_fallthru
      _
    // Predicated region
    $region34: #{tpu_custom_call.1} parent=1 // pred_check
      _
    $region35: #{tpu_custom_call.1} parent=1 // pred_check_branch
      %65 = sbr.rel (0) target = $region37
    $region36: #{tpu_custom_call.1} parent=1 // pred_region
      _
    $region37: #{tpu_custom_call.1} parent=1 // pred_fallthru
      _
    // Predicated region
    $region38: #{tpu_custom_call.1} parent=1 // pred_check
      _
    $region39: #{tpu_custom_call.1} parent=1 // pred_check_branch
      %67 = sbr.rel (0) target = $region41
    $region40: #{tpu_custom_call.1} parent=1 // pred_region
      _
    $region41: #{tpu_custom_call.1} parent=1 // pred_fallthru
      _
    // Predicated region
    $region42: #{tpu_custom_call.1} parent=1 // pred_check
      _
    $region43: #{tpu_custom_call.1} parent=1 // pred_check_branch
      %69 = sbr.rel (0) target = $region45
    $region44: #{tpu_custom_call.1} parent=1 // pred_region
      %71 = vsyncadd [#allocation6], 0
      %s72 = sshll.u32 %s10, 4
      %s73 = int_to_ptr.hbm [resolvable:$true] %s72
      %s74 = sshll.u32 [#allocation7], 4
      %s75 = int_to_ptr.vmem [resolvable:$true] %s74
      %80 = dma.hbm_to_vmem [thread:$0]  %s73, 48, %s75, [#allocation6], 16, 16, 1
    $region45: #{tpu_custom_call.1} parent=1 // pred_fallthru
      _
    // Predicated region
    $region46: #{tpu_custom_call.1} parent=1 // pred_check
      _
    $region47: #{tpu_custom_call.1} parent=1 // pred_check_branch
      %82 = sbr.rel (0) target = $region49
    $region48: #{tpu_custom_call.1} parent=1 // pred_region
      _
    $region49: #{tpu_custom_call.1} parent=1 // pred_fallthru
      _
    // Predicated region
    $region50: #{tpu_custom_call.1} parent=1 // pred_check
      _
    $region51: #{tpu_custom_call.1} parent=1 // pred_check_branch
      %84 = sbr.rel (0) target = $region53
    $region52: #{tpu_custom_call.1} parent=1 // pred_region
      _
    $region53: #{tpu_custom_call.1} parent=1 // pred_fallthru
      _
    // Predicated region
    $region54: #{tpu_custom_call.1} parent=1 // pred_check
      _
    $region55: #{tpu_custom_call.1} parent=1 // pred_check_branch
      %86 = sbr.rel (0) target = $region57
    $region56: #{tpu_custom_call.1} parent=1 // pred_region
      %88 = vsyncadd [#allocation9], 0
      %s90 = sshll.u32 %s13, 4
      %s91 = int_to_ptr.hbm [resolvable:$true] %s90
      %s92 = sshll.u32 [#allocation8], 4
      %s93 = int_to_ptr.vmem [resolvable:$true] %s92
      %95 = dma.hbm_to_vmem [thread:$0]  %s91, 128, %s93, [#allocation9]
    $region57: #{tpu_custom_call.1} parent=1 // pred_fallthru
      _
    // Predicated region
    $region58: #{tpu_custom_call.1} parent=1 // pred_check
      _
    $region59: #{tpu_custom_call.1} parent=1 // pred_check_branch
      %97 = sbr.rel (0) target = $region61
    $region60: #{tpu_custom_call.1} parent=1 // pred_region
      _
    $region61: #{tpu_custom_call.1} parent=1 // pred_fallthru
      _
    // Predicated region
    $region62: #{tpu_custom_call.1} parent=1 // pred_check
      _
    $region63: #{tpu_custom_call.1} parent=1 // pred_check_branch
      %99 = sbr.rel (0) target = $region65
    $region64: #{tpu_custom_call.1} parent=1 // pred_region
      %101 = vsyncadd [#allocation9], 0
      %s102 = sshll.u32 %s15, 4
      %s103 = int_to_ptr.hbm [resolvable:$true] %s102
      %s104 = sshll.u32 [#allocation10], 4
      %s105 = int_to_ptr.vmem [resolvable:$true] %s104
      %110 = dma.hbm_to_vmem [thread:$0]  %s103, 8192, %s105, [#allocation9], 128, 128, 8
    $region65: #{tpu_custom_call.1} parent=1 // pred_fallthru
      _
    // Predicated region
    $region66: #{tpu_custom_call.1} parent=1 // pred_check
      _
    $region67: #{tpu_custom_call.1} parent=1 // pred_check_branch
      %112 = sbr.rel (0) target = $region69
    $region68: #{tpu_custom_call.1} parent=1 // pred_region
      _
    $region69: #{tpu_custom_call.1} parent=1 // pred_fallthru
      _
    // Predicated region
    $region70: #{tpu_custom_call.1} parent=1 // pred_check
      _
    $region71: #{tpu_custom_call.1} parent=1 // pred_check_branch
      %114 = sbr.rel (0) target = $region73
    $region72: #{tpu_custom_call.1} parent=1 // pred_region
      %116 = vsyncadd [#allocation12], 0
      %s117 = sshll.u32 %s17, 4
      %s118 = int_to_ptr.hbm [resolvable:$true] %s117
      %s119 = sshll.u32 [#allocation11], 4
      %s120 = int_to_ptr.vmem [resolvable:$true] %s119
      %125 = dma.hbm_to_vmem [thread:$0]  %s118, 256, %s120, [#allocation12], 128, 128, 8
    $region73: #{tpu_custom_call.1} parent=1 // pred_fallthru
      _
    // Predicated region
    $region74: #{tpu_custom_call.1} parent=1 // pred_check
      _
    $region75: #{tpu_custom_call.1} parent=1 // pred_check_branch
      %127 = sbr.rel (0) target = $region77
    $region76: #{tpu_custom_call.1} parent=1 // pred_region
      %129 = dma.done [#allocation3], 32
    $region77: #{tpu_custom_call.1} parent=1 // pred_fallthru
      _
    // Predicated region
    $region78: #{tpu_custom_call.1} parent=1 // pred_check
      _
    $region79: #{tpu_custom_call.1} parent=1 // pred_check_branch
      %131 = sbr.rel (0) target = $region81
    $region80: #{tpu_custom_call.1} parent=1 // pred_region
      %133 = dma.done [#allocation6], 32
    $region81: #{tpu_custom_call.1} parent=1 // pred_fallthru
      _
    // Predicated region
    $region82: #{tpu_custom_call.1} parent=1 // pred_check
      _
    $region83: #{tpu_custom_call.1} parent=1 // pred_check_branch
      %135 = sbr.rel (0) target = $region85
    $region84: #{tpu_custom_call.1} parent=1 // pred_region
      %137 = dma.done [#allocation6], 48
    $region85: #{tpu_custom_call.1} parent=1 // pred_fallthru
      _
    // Predicated region
    $region86: #{tpu_custom_call.1} parent=1 // pred_check
      _
    $region87: #{tpu_custom_call.1} parent=1 // pred_check_branch
      %139 = sbr.rel (0) target = $region89
    $region88: #{tpu_custom_call.1} parent=1 // pred_region
      %141 = dma.done [#allocation9], 128
    $region89: #{tpu_custom_call.1} parent=1 // pred_fallthru
      _
    // Predicated region
    $region90: #{tpu_custom_call.1} parent=1 // pred_check
      _
    $region91: #{tpu_custom_call.1} parent=1 // pred_check_branch
      %143 = sbr.rel (0) target = $region93
    $region92: #{tpu_custom_call.1} parent=1 // pred_region
      %145 = dma.done [#allocation9], 8192
    $region93: #{tpu_custom_call.1} parent=1 // pred_fallthru
      _
    // Predicated region
    $region94: #{tpu_custom_call.1} parent=1 // pred_check
      _
    $region95: #{tpu_custom_call.1} parent=1 // pred_check_branch
      %147 = sbr.rel (0) target = $region97
    $region96: #{tpu_custom_call.1} parent=1 // pred_region
      %149 = dma.done [#allocation12], 256
    $region97: #{tpu_custom_call.1} parent=1 // pred_fallthru
      _
    %v150 = vld [vmem:[#allocation11] sm:$0xff]
    %v151 = vld [vmem:[#allocation11 + $0x8] sm:$0x1]
    %v152 = vld [vmem:[%s0] sm:$0xff]
    %v153 = vld [vmem:[%s0 + $0x8] sm:$0xff]
    %v154 = vld [vmem:[#allocation2] sm:$0x3]
    %v155 = vld [vmem:[%s2] sm:$0x3]
    %v156 = vld [vmem:[%s3] sm:$0xff]
    %v157 = vld [vmem:[%s3 + $0x8] sm:$0xff]
    %v158 = vld [vmem:[%s4] sm:$0xff]
    %v159 = vld [vmem:[%s4 + $0x8] sm:$0xff]
    %vm160 = vcmask 523264
    %v161 = vsel %vm160, %v152, 0.0
    %162 = vadd.xlane.f32.xlu0 %v161
    %v163 = vpop.xlane.xlu0 %162
    %v164 = vsel %vm160, %v153, 0.0
    %165 = vadd.xlane.f32.xlu0 %v164
    %v166 = vpop.xlane.xlu0 %165
    %v167 = vrcp.pop 64.0
    %v168 = vmul.f32 64.0, %v167
    %v169 = vsub.f32 1.0, %v168
    %v170 = vmul.f32 %v167, %v169
    %v171 = vadd.f32 %v167, %v170
    %vm172 = vweird.f32 %v167
    %v173 = vsel %vm172, %v167, %v171
    %v174 = vmul.f32 %v163, %v173
    %v175 = vmul.f32 %v166, %v173
    %v176 = vsel %vm160, %v152, -inf
    %177 = vmax.xlane.f32.xlu0 %v176
    %v178 = vpop.xlane.xlu0 %177
    %v179 = vsel %vm160, %v153, -inf
    %180 = vmax.xlane.f32.xlu0 %v179
    %v181 = vpop.xlane.xlu0 %180
    %184 = vrot.lane.b32.xlu0 %v152, 64
    %v185 = vpop.permute.xlu0 %184
    %186 = vrot.lane.b32.xlu0 %v153, 64
    %v187 = vpop.permute.xlu0 %186
    %v190 = vsel %vm160, %v185, 0.0
    %191 = vadd.xlane.f32.xlu0 %v190
    %v192 = vpop.xlane.xlu0 %191
    %v193 = vsel %vm160, %v187, 0.0
    %194 = vadd.xlane.f32.xlu0 %v193
    %v195 = vpop.xlane.xlu0 %194
    %v196 = vmul.f32 %v192, %v173
    %v197 = vmul.f32 %v195, %v173
    %vm198 = vcmask 1048064
    %v199 = vsel %vm198, %v152, -inf
    %200 = vmax.xlane.f32.xlu0 %v199
    %v201 = vpop.xlane.xlu0 %200
    %v202 = vsel %vm198, %v153, -inf
    %203 = vmax.xlane.f32.xlu0 %v202
    %v204 = vpop.xlane.xlu0 %203
    %vm205 = vcmask 7168
    %v206 = vsel %vm205, %v174, %v178
    %v207 = vsel %vm205, %v175, %v181
    %vm208 = vcmask 15360
    %v209 = vsel %vm208, %v206, %v196
    %v210 = vsel %vm208, %v207, %v197
    %vm211 = vcmask 23552
    %v212 = vsel %vm211, %v209, %v201
    %v213 = vsel %vm211, %v210, %v204
    %215 = vset.pattern.permute.xlu0 0
    %216 = vperm.xlu0 %215, %v155
    %v217 = vpop.permute.xlu0 %216
    %vm219 = vcmask 130048
    %v221 = vsel %vm219, %v154, 0
    %223 = vmatpush.msra.mxu0 0.0
    %224 = vmatpush.msra.mxu0 0.0
    %225 = vmatpush.msra.mxu0 0.0
    %226 = vmatpush.msra.mxu0 0.0
    %227 = vmatpush.msra.mxu0 0.0
    %228 = vmatpush.msra.mxu0 0.0
    %229 = vmatpush.msra.mxu0 0.0
    %230 = vmatpush.msra.mxu0 0.0
    %231 = vmatpush.msra.mxu0 0.0
    %232 = vmatpush.msra.mxu0 0.0
    %233 = vmatpush.msra.mxu0 0.0
    %234 = vmatpush.msra.mxu0 0.0
    %235 = vmatpush.msra.mxu0 0.0
    %236 = vmatpush.msra.mxu0 0.0
    %237 = vmatpush.msra.mxu0 %v213
    %238 = vmatpush.msra.mxu0 %v212
    %239 = vmatmul.f32.gmra.mxu0 %v221
    %v240 = vpop.f32.mrf.mxu0
    %v241 = vadd.f32 %v217, %v240
    %242 = vdwg.mxu0
    %v243 = vmax.f32 %v241, 0.0
    %245 = vset.pattern.permute.xlu0 0
    %246 = vperm.xlu0 %245, %v158
    %v247 = vpop.permute.xlu0 %246
    %250 = vset.pattern.permute.xlu0 0
    %251 = vperm.xlu0 %250, %v159
    %v252 = vpop.permute.xlu0 %251
    %v255 = vsel %vm208, %v156, 0
    %v258 = vsel %vm208, %v157, 0
    %vm260 = vcmask 1041408
    %v262 = vsel %vm260, %v243, 0
    %264 = vmatpush.msra.mxu0 0.0
    %265 = vmatpush.msra.mxu0 0.0
    %266 = vmatpush.msra.mxu0 0.0
    %267 = vmatpush.msra.mxu0 0.0
    %268 = vmatpush.msra.mxu0 0.0
    %269 = vmatpush.msra.mxu0 0.0
    %270 = vmatpush.msra.mxu0 0.0
    %271 = vmatpush.msra.mxu0 0.0
    %272 = vmatpush.msra.mxu0 0.0
    %273 = vmatpush.msra.mxu0 0.0
    %274 = vmatpush.msra.mxu0 0.0
    %275 = vmatpush.msra.mxu0 0.0
    %276 = vmatpush.msra.mxu0 0.0
    %277 = vmatpush.msra.mxu0 0.0
    %278 = vmatpush.msra.mxu0 0.0
    %279 = vmatpush.msra.mxu0 %v262
    %280 = vmatmul.f32.gmra.mxu0 %v255
    %v281 = vpop.f32.mrf.mxu0
    %v282 = vadd.f32 %v247, %v281
    %283 = vmatmul.f32.gmra.mxu0 %v258
    %v284 = vpop.f32.mrf.mxu0
    %v285 = vadd.f32 %v252, %v284
    %286 = vdwg.mxu0
    %v287 = vmul.f32 %v282, 0.5
    %v288 = vmul.f32 %v285, 0.5
    %v289 = vtanh.pop %v287
    %v290 = vtanh.pop %v288
    %v291 = vmul.f32 %v289, 0.5
    %v292 = vmul.f32 %v290, 0.5
    %v293 = vadd.f32 %v291, 0.5
    %v294 = vadd.f32 %v292, 0.5
    %297 = vrot.lane.b32.xlu0 %v293, 127
    %v298 = vpop.permute.xlu0 %297
    %299 = vrot.lane.b32.xlu0 %v294, 127
    %v300 = vpop.permute.xlu0 %299
    %v303 = vadd.f32 %v293, %v298
    %v304 = vadd.f32 %v294, %v300
    %v305 = vmul.f32 %v303, 0.5
    %v306 = vmul.f32 %v304, 0.5
    %v307 = vtanh.pop %v305
    %v308 = vtanh.pop %v306
    %v309 = vmul.f32 %v307, 0.5
    %v310 = vmul.f32 %v308, 0.5
    %v311 = vadd.f32 %v309, 0.5
    %v312 = vadd.f32 %v310, 0.5
    %315 = vrot.lane.b32.xlu0 %v311, 127
    %v316 = vpop.permute.xlu0 %315
    %317 = vrot.lane.b32.xlu0 %v312, 127
    %v318 = vpop.permute.xlu0 %317
    %v321 = vsel %vm205, %v311, %v316
    %v322 = vsel %vm205, %v312, %v318
    %324 = vset.pattern.permute.xlu0 0
    %325 = vperm.xlu0 %324, %v321
    %v326 = vpop.permute.xlu0 %325
    %329 = vset.pattern.permute.xlu0 0
    %330 = vperm.xlu0 %329, %v322
    %v331 = vpop.permute.xlu0 %330
    %333 = vset.pattern.permute.xlu0 1
    %334 = vperm.xlu0 %333, %v321
    %v335 = vpop.permute.xlu0 %334
    %337 = vset.pattern.permute.xlu0 1
    %338 = vperm.xlu0 %337, %v322
    %v339 = vpop.permute.xlu0 %338
    %v341 = vsel %vm160, %v326, %v335
    %v342 = vsel %vm160, %v331, %v339
    %v343 = vmul.f32 %v152, %v341
    %v344 = vmul.f32 %v153, %v342
    %v345 = vadd.f32 %v343, %v344
    %v346 = vrot.slane %v345, 4
    %v347 = vadd.f32 %v345, %v346
    %v348 = vrot.slane %v347, 2
    %v349 = vadd.f32 %v347, %v348
    %v350 = vrot.slane %v349, 1
    %v351 = vadd.f32 %v349, %v350
    %v352 = vrcp.pop 16.0
    %v353 = vmul.f32 16.0, %v352
    %v354 = vsub.f32 1.0, %v353
    %v355 = vmul.f32 %v352, %v354
    %v356 = vadd.f32 %v352, %v355
    %vm357 = vweird.f32 %v352
    %v358 = vsel %vm357, %v352, %v356
    %v359 = vmul.f32 %v351, %v358
    %v360 = vmax.f32 %v343, %v344
    %v361 = vrot.slane %v360, 4
    %v362 = vmax.f32 %v360, %v361
    %v363 = vrot.slane %v362, 2
    %v364 = vmax.f32 %v362, %v363
    %v365 = vrot.slane %v364, 1
    %v366 = vmax.f32 %v364, %v365
    %v367 = vld [vmem:[%s9] sm:$0xff]
    %v368 = vld [vmem:[%s9 + $0x8] sm:$0xff]
    %v369 = vld [vmem:[%s9 + $0x10] sm:$0x3]
    %v370 = vld [vmem:[#allocation7] sm:$0x1]
    %371 = vrot.lane.b32.xlu0 %v359, 9
    %v372 = vpop.permute.xlu0 %371
    %v373 = vmul.f32 %v372, %v150
    %v374 = vmul.f32 %v367, %v373
    %v375 = vadd.f32 %v370, %v374
    %376 = vrot.lane.b32.xlu0 %v366, 9
    %v377 = vpop.permute.xlu0 %376
    %v378 = vmul.f32 %v377, %v150
    %v380 = vrot.slane %v378, 7
    %v382 = vmul.f32 %v367, %v380
    %384 = vst [vmem:[#allocation1] sm:$0xff] %v382
    %s385 = scalar_lea.vmem [#allocation1], 1
    %v386 = vld [vmem:[%s385] ss:$9 sm:$0xff]
    %v388 = vadd.f32 %v375, %v386
    %389 = vrot.lane.b32.xlu0 %v359, 8
    %v390 = vpop.permute.xlu0 %389
    %v392 = vrot.slane %v150, 1
    %v394 = vmul.f32 %v390, %v392
    %v396 = vrot.slane %v394, 6
    %v398 = vmul.f32 %v367, %v396
    %400 = vst [vmem:[#allocation1] sm:$0xff] %v398
    %s401 = scalar_lea.vmem [#allocation1], 2
    %v402 = vld [vmem:[%s401] ss:$9 sm:$0xff]
    %v404 = vadd.f32 %v388, %v402
    %405 = vrot.lane.b32.xlu0 %v366, 8
    %v406 = vpop.permute.xlu0 %405
    %v407 = vmul.f32 %v406, %v392
    %v409 = vrot.slane %v407, 5
    %v411 = vmul.f32 %v367, %v409
    %413 = vst [vmem:[#allocation1] sm:$0xff] %v411
    %s414 = scalar_lea.vmem [#allocation1], 3
    %v415 = vld [vmem:[%s414] ss:$9 sm:$0xff]
    %v417 = vadd.f32 %v404, %v415
    %418 = vrot.lane.b32.xlu0 %v359, 7
    %v419 = vpop.permute.xlu0 %418
    %v420 = vrot.slane %v150, 2
    %v422 = vmul.f32 %v419, %v420
    %v424 = vrot.slane %v422, 4
    %v426 = vmul.f32 %v367, %v424
    %428 = vst [vmem:[#allocation1] sm:$0xff] %v426
    %s429 = scalar_lea.vmem [#allocation1], 4
    %v430 = vld [vmem:[%s429] ss:$9 sm:$0xff]
    %v432 = vadd.f32 %v417, %v430
    %433 = vrot.lane.b32.xlu0 %v366, 7
    %v434 = vpop.permute.xlu0 %433
    %v435 = vmul.f32 %v434, %v420
    %v437 = vrot.slane %v435, 3
    %v439 = vmul.f32 %v367, %v437
    %441 = vst [vmem:[#allocation1] sm:$0xff] %v439
    %s442 = scalar_lea.vmem [#allocation1], 5
    %v443 = vld [vmem:[%s442] ss:$9 sm:$0xff]
    %v445 = vadd.f32 %v432, %v443
    %446 = vrot.lane.b32.xlu0 %v359, 1
    %v447 = vpop.permute.xlu0 %446
    %v448 = vrot.slane %v150, 3
    %v450 = vmul.f32 %v447, %v448
    %v452 = vrot.slane %v450, 2
    %v454 = vmul.f32 %v367, %v452
    %456 = vst [vmem:[#allocation1] sm:$0xff] %v454
    %s457 = scalar_lea.vmem [#allocation1], 6
    %v458 = vld [vmem:[%s457] ss:$9 sm:$0xff]
    %v460 = vadd.f32 %v445, %v458
    %461 = vrot.lane.b32.xlu0 %v366, 1
    %v462 = vpop.permute.xlu0 %461
    %v463 = vmul.f32 %v462, %v448
    %v465 = vrot.slane %v463, 1
    %v467 = vmul.f32 %v367, %v465
    %469 = vst [vmem:[#allocation1] sm:$0xff] %v467
    %s470 = scalar_lea.vmem [#allocation1], 7
    %v471 = vld [vmem:[%s470] ss:$9 sm:$0xff]
    %v473 = vadd.f32 %v460, %v471
    %v474 = vmul.f32 %v368, %v359
    %v475 = vadd.f32 %v473, %v474
    %v476 = vmul.f32 %v368, %v366
    %478 = vst [vmem:[#allocation1] sm:$0xff] %v476
    %s479 = scalar_lea.vmem [#allocation1], 1
    %v480 = vld [vmem:[%s479] ss:$9 sm:$0xff]
    %v482 = vadd.f32 %v475, %v480
    %483 = vrot.lane.b32.xlu0 %v359, 127
    %v484 = vpop.permute.xlu0 %483
    %v485 = vrot.slane %v150, 5
    %v487 = vmul.f32 %v484, %v485
    %v489 = vrot.slane %v487, 6
    %v491 = vmul.f32 %v368, %v489
    %493 = vst [vmem:[#allocation1] sm:$0xff] %v491
    %s494 = scalar_lea.vmem [#allocation1], 2
    %v495 = vld [vmem:[%s494] ss:$9 sm:$0xff]
    %v497 = vadd.f32 %v482, %v495
    %498 = vrot.lane.b32.xlu0 %v366, 127
    %v499 = vpop.permute.xlu0 %498
    %v500 = vmul.f32 %v499, %v485
    %v502 = vrot.slane %v500, 5
    %v504 = vmul.f32 %v368, %v502
    %506 = vst [vmem:[#allocation1] sm:$0xff] %v504
    %s507 = scalar_lea.vmem [#allocation1], 3
    %v508 = vld [vmem:[%s507] ss:$9 sm:$0xff]
    %v510 = vadd.f32 %v497, %v508
    %511 = vrot.lane.b32.xlu0 %v359, 121
    %v512 = vpop.permute.xlu0 %511
    %v513 = vrot.slane %v150, 6
    %v515 = vmul.f32 %v512, %v513
    %v517 = vrot.slane %v515, 4
    %v519 = vmul.f32 %v368, %v517
    %521 = vst [vmem:[#allocation1] sm:$0xff] %v519
    %s522 = scalar_lea.vmem [#allocation1], 4
    %v523 = vld [vmem:[%s522] ss:$9 sm:$0xff]
    %v525 = vadd.f32 %v510, %v523
    %526 = vrot.lane.b32.xlu0 %v366, 121
    %v527 = vpop.permute.xlu0 %526
    %v528 = vmul.f32 %v527, %v513
    %v530 = vrot.slane %v528, 3
    %v532 = vmul.f32 %v368, %v530
    %534 = vst [vmem:[#allocation1] sm:$0xff] %v532
    %s535 = scalar_lea.vmem [#allocation1], 5
    %v536 = vld [vmem:[%s535] ss:$9 sm:$0xff]
    %v538 = vadd.f32 %v525, %v536
    %539 = vrot.lane.b32.xlu0 %v359, 120
    %v540 = vpop.permute.xlu0 %539
    %v541 = vrot.slane %v150, 7
    %v543 = vmul.f32 %v540, %v541
    %v545 = vrot.slane %v543, 2
    %v547 = vmul.f32 %v368, %v545
    %549 = vst [vmem:[#allocation1] sm:$0xff] %v547
    %s550 = scalar_lea.vmem [#allocation1], 6
    %v551 = vld [vmem:[%s550] ss:$9 sm:$0xff]
    %v553 = vadd.f32 %v538, %v551
    %554 = vrot.lane.b32.xlu0 %v366, 120
    %v555 = vpop.permute.xlu0 %554
    %v556 = vmul.f32 %v555, %v541
    %v558 = vrot.slane %v556, 1
    %v560 = vmul.f32 %v368, %v558
    %562 = vst [vmem:[#allocation1] sm:$0xff] %v560
    %s563 = scalar_lea.vmem [#allocation1], 7
    %v564 = vld [vmem:[%s563] ss:$9 sm:$0xff]
    %v566 = vadd.f32 %v553, %v564
    %567 = vrot.lane.b32.xlu0 %v359, 119
    %v568 = vpop.permute.xlu0 %567
    %v569 = vmul.f32 %v568, %v151
    %v570 = vmul.f32 %v369, %v569
    %v571 = vadd.f32 %v566, %v570
    %572 = vrot.lane.b32.xlu0 %v366, 119
    %v573 = vpop.permute.xlu0 %572
    %v574 = vmul.f32 %v573, %v151
    %v576 = vrot.slane %v574, 7
    %v578 = vmul.f32 %v369, %v576
    %580 = vst [vmem:[#allocation1] sm:$0xff] %v578
    %s581 = scalar_lea.vmem [#allocation1], 1
    %v582 = vld [vmem:[%s581] ss:$9 sm:$0xff]
    %v584 = vadd.f32 %v571, %v582
    %v585 = vmul.f32 %v584, 0.5
    %v586 = vtanh.pop %v585
    %v587 = vmul.f32 %v586, 0.5
    %v588 = vadd.f32 %v587, 0.5
    %v590 = vperm.slane %v588, 0
    %v592 = vmul.f32 %v590, %v343
    %v593 = vmul.f32 %v590, %v344
    %v594 = vld [vmem:[%s11] sm:$0xff]
    %v595 = vld [vmem:[%s11 + $0x8] sm:$0xff]
    %v596 = vld [vmem:[%s14] sm:$0xff]
    %597 = vrot.lane.b32.xlu0 %v592, 9
    %v598 = vpop.permute.xlu0 %597
    %599 = vrot.lane.b32.xlu0 %v593, 9
    %v600 = vpop.permute.xlu0 %599
    %v601 = vperm.slane %v150, 0
    %v602 = vmul.f32 %v598, %v601
    %v603 = vmul.f32 %v600, %v601
    %604 = vrot.lane.b32.xlu0 %v592, 8
    %v605 = vpop.permute.xlu0 %604
    %606 = vrot.lane.b32.xlu0 %v593, 8
    %v607 = vpop.permute.xlu0 %606
    %v608 = vperm.slane %v150, 1
    %v609 = vmul.f32 %v605, %v608
    %v610 = vmul.f32 %v607, %v608
    %611 = vrot.lane.b32.xlu0 %v592, 7
    %v612 = vpop.permute.xlu0 %611
    %613 = vrot.lane.b32.xlu0 %v593, 7
    %v614 = vpop.permute.xlu0 %613
    %v615 = vperm.slane %v150, 2
    %v616 = vmul.f32 %v612, %v615
    %v617 = vmul.f32 %v614, %v615
    %618 = vrot.lane.b32.xlu0 %v592, 1
    %v619 = vpop.permute.xlu0 %618
    %620 = vrot.lane.b32.xlu0 %v593, 1
    %v621 = vpop.permute.xlu0 %620
    %v622 = vperm.slane %v150, 3
    %v623 = vmul.f32 %v619, %v622
    %v624 = vmul.f32 %v621, %v622
    %625 = vrot.lane.b32.xlu0 %v592, 127
    %v626 = vpop.permute.xlu0 %625
    %627 = vrot.lane.b32.xlu0 %v593, 127
    %v628 = vpop.permute.xlu0 %627
    %v629 = vperm.slane %v150, 5
    %v630 = vmul.f32 %v626, %v629
    %v631 = vmul.f32 %v628, %v629
    %632 = vrot.lane.b32.xlu0 %v592, 121
    %v633 = vpop.permute.xlu0 %632
    %634 = vrot.lane.b32.xlu0 %v593, 121
    %v635 = vpop.permute.xlu0 %634
    %v636 = vperm.slane %v150, 6
    %v637 = vmul.f32 %v633, %v636
    %v638 = vmul.f32 %v635, %v636
    %639 = vrot.lane.b32.xlu0 %v592, 120
    %v640 = vpop.permute.xlu0 %639
    %641 = vrot.lane.b32.xlu0 %v593, 120
    %v642 = vpop.permute.xlu0 %641
    %v643 = vperm.slane %v150, 7
    %v644 = vmul.f32 %v640, %v643
    %v645 = vmul.f32 %v642, %v643
    %646 = vrot.lane.b32.xlu0 %v592, 119
    %v647 = vpop.permute.xlu0 %646
    %648 = vrot.lane.b32.xlu0 %v593, 119
    %v649 = vpop.permute.xlu0 %648
    %v650 = vperm.slane %v151, 0
    %v651 = vmul.f32 %v647, %v650
    %v652 = vmul.f32 %v649, %v650
    %654 = vset.pattern.permute.xlu0 0
    %655 = vperm.xlu0 %654, %v596
    %v656 = vpop.permute.xlu0 %655
    %v659 = vsel %vm219, %v595, 0
    %661 = vmatpush.msra.mxu0 %v645
    %662 = vmatpush.msra.mxu0 %v644
    %663 = vmatpush.msra.mxu0 %v638
    %664 = vmatpush.msra.mxu0 %v637
    %665 = vmatpush.msra.mxu0 %v631
    %666 = vmatpush.msra.mxu0 %v630
    %667 = vmatpush.msra.mxu0 %v593
    %668 = vmatpush.msra.mxu0 %v592
    %669 = vmatpush.msra.mxu0 %v624
    %670 = vmatpush.msra.mxu0 %v623
    %671 = vmatpush.msra.mxu0 %v617
    %672 = vmatpush.msra.mxu0 %v616
    %673 = vmatpush.msra.mxu0 %v610
    %674 = vmatpush.msra.mxu0 %v609
    %675 = vmatpush.msra.mxu0 %v603
    %676 = vmatpush.msra.mxu0 %v602
    %677 = vmatmul.f32.gmra.mxu0 %v594
    %v678 = vpop.f32.mrf.mxu0
    %v679 = vadd.f32 %v656, %v678
    %680 = vdwg.mxu0
    %681 = vmatpush.msra.mxu0 0.0
    %682 = vmatpush.msra.mxu0 0.0
    %683 = vmatpush.msra.mxu0 0.0
    %684 = vmatpush.msra.mxu0 0.0
    %685 = vmatpush.msra.mxu0 0.0
    %686 = vmatpush.msra.mxu0 0.0
    %687 = vmatpush.msra.mxu0 0.0
    %688 = vmatpush.msra.mxu0 0.0
    %689 = vmatpush.msra.mxu0 0.0
    %690 = vmatpush.msra.mxu0 0.0
    %691 = vmatpush.msra.mxu0 0.0
    %692 = vmatpush.msra.mxu0 0.0
    %693 = vmatpush.msra.mxu0 0.0
    %694 = vmatpush.msra.mxu0 0.0
    %695 = vmatpush.msra.mxu0 %v652
    %696 = vmatpush.msra.mxu0 %v651
    %697 = vmatmul.f32.gmra.mxu0 %v659
    %v698 = vpop.f32.mrf.mxu0
    %v699 = vadd.f32 %v679, %v698
    %700 = vdwg.mxu0
    %v701 = vmax.f32 %v699, 0.0
    %v702 = vld [vmem:[%s12] sm:$0xff]
    %s703 = scalar_lea.vmem %s14, 8
    %v704 = vld [vmem:[%s703] sm:$0xff]
    %705 = vrot.lane.b32.xlu0 %v701, 9
    %v706 = vpop.permute.xlu0 %705
    %v707 = vmul.f32 %v706, %v601
    %708 = vrot.lane.b32.xlu0 %v701, 8
    %v709 = vpop.permute.xlu0 %708
    %v710 = vmul.f32 %v709, %v608
    %711 = vrot.lane.b32.xlu0 %v701, 7
    %v712 = vpop.permute.xlu0 %711
    %v713 = vmul.f32 %v712, %v615
    %714 = vrot.lane.b32.xlu0 %v701, 1
    %v715 = vpop.permute.xlu0 %714
    %v716 = vmul.f32 %v715, %v622
    %717 = vrot.lane.b32.xlu0 %v701, 127
    %v718 = vpop.permute.xlu0 %717
    %v719 = vmul.f32 %v718, %v629
    %720 = vrot.lane.b32.xlu0 %v701, 121
    %v721 = vpop.permute.xlu0 %720
    %v722 = vmul.f32 %v721, %v636
    %723 = vrot.lane.b32.xlu0 %v701, 120
    %v724 = vpop.permute.xlu0 %723
    %v725 = vmul.f32 %v724, %v643
    %726 = vrot.lane.b32.xlu0 %v701, 119
    %v727 = vpop.permute.xlu0 %726
    %v728 = vmul.f32 %v727, %v650
    %730 = vset.pattern.permute.xlu0 0
    %731 = vperm.xlu0 %730, %v704
    %v732 = vpop.permute.xlu0 %731
    %vm734 = vcmask 588800
    %v736 = vsel %vm734, %v702, 0
    %738 = vmatpush.msra.mxu0 0.0
    %739 = vmatpush.msra.mxu0 0.0
    %740 = vmatpush.msra.mxu0 0.0
    %741 = vmatpush.msra.mxu0 0.0
    %742 = vmatpush.msra.mxu0 0.0
    %743 = vmatpush.msra.mxu0 0.0
    %744 = vmatpush.msra.mxu0 0.0
    %745 = vmatpush.msra.mxu0 %v728
    %746 = vmatpush.msra.mxu0 %v725
    %747 = vmatpush.msra.mxu0 %v722
    %748 = vmatpush.msra.mxu0 %v719
    %749 = vmatpush.msra.mxu0 %v701
    %750 = vmatpush.msra.mxu0 %v716
    %751 = vmatpush.msra.mxu0 %v713
    %752 = vmatpush.msra.mxu0 %v710
    %753 = vmatpush.msra.mxu0 %v707
    %754 = vmatmul.f32.gmra.mxu0 %v736
    %v755 = vpop.f32.mrf.mxu0
    %v756 = vadd.f32 %v732, %v755
    %757 = vdwg.mxu0
    %v758 = vmax.f32 %v756, 0.0
    %s759 = scalar_lea.vmem %s12, 8
    %v760 = vld [vmem:[%s759] sm:$0xff]
    %s761 = scalar_lea.vmem %s14, 16
    %v762 = vld [vmem:[%s761] sm:$0xff]
    %763 = vrot.lane.b32.xlu0 %v758, 9
    %v764 = vpop.permute.xlu0 %763
    %v765 = vmul.f32 %v764, %v601
    %766 = vrot.lane.b32.xlu0 %v758, 8
    %v767 = vpop.permute.xlu0 %766
    %v768 = vmul.f32 %v767, %v608
    %769 = vrot.lane.b32.xlu0 %v758, 7
    %v770 = vpop.permute.xlu0 %769
    %v771 = vmul.f32 %v770, %v615
    %772 = vrot.lane.b32.xlu0 %v758, 1
    %v773 = vpop.permute.xlu0 %772
    %v774 = vmul.f32 %v773, %v622
    %775 = vrot.lane.b32.xlu0 %v758, 127
    %v776 = vpop.permute.xlu0 %775
    %v777 = vmul.f32 %v776, %v629
    %778 = vrot.lane.b32.xlu0 %v758, 121
    %v779 = vpop.permute.xlu0 %778
    %v780 = vmul.f32 %v779, %v636
    %781 = vrot.lane.b32.xlu0 %v758, 120
    %v782 = vpop.permute.xlu0 %781
    %v783 = vmul.f32 %v782, %v643
    %784 = vrot.lane.b32.xlu0 %v758, 119
    %v785 = vpop.permute.xlu0 %784
    %v786 = vmul.f32 %v785, %v650
    %788 = vset.pattern.permute.xlu0 0
    %789 = vperm.xlu0 %788, %v762
    %v790 = vpop.permute.xlu0 %789
    %v793 = vsel %vm734, %v760, 0
    %795 = vmatpush.msra.mxu0 0.0
    %796 = vmatpush.msra.mxu0 0.0
    %797 = vmatpush.msra.mxu0 0.0
    %798 = vmatpush.msra.mxu0 0.0
    %799 = vmatpush.msra.mxu0 0.0
    %800 = vmatpush.msra.mxu0 0.0
    %801 = vmatpush.msra.mxu0 0.0
    %802 = vmatpush.msra.mxu0 %v786
    %803 = vmatpush.msra.mxu0 %v783
    %804 = vmatpush.msra.mxu0 %v780
    %805 = vmatpush.msra.mxu0 %v777
    %806 = vmatpush.msra.mxu0 %v758
    %807 = vmatpush.msra.mxu0 %v774
    %808 = vmatpush.msra.mxu0 %v771
    %809 = vmatpush.msra.mxu0 %v768
    %810 = vmatpush.msra.mxu0 %v765
    %811 = vmatmul.f32.gmra.mxu0 %v793
    %v812 = vpop.f32.mrf.mxu0
    %v813 = vadd.f32 %v790, %v812
    %814 = vdwg.mxu0
    %v815 = vld [vmem:[#allocation5] sm:$0x1]
    %v816 = vld [vmem:[%s6] sm:$0x1]
    %v817 = vld [vmem:[%s7] sm:$0xff]
    %v818 = vld [vmem:[%s8] sm:$0xff]
    %v819 = vsel %vm160, %v813, 0.0
    %820 = vadd.xlane.f32.xlu0 %v819
    %v821 = vpop.xlane.xlu0 %820
    %v822 = vmul.f32 %v821, %v173
    %v823 = vsel %vm160, %v813, -inf
    %824 = vmax.xlane.f32.xlu0 %v823
    %v825 = vpop.xlane.xlu0 %824
    %827 = vrot.lane.b32.xlu0 %v813, 64
    %v828 = vpop.permute.xlu0 %827
    %v830 = vsel %vm160, %v828, 0.0
    %831 = vadd.xlane.f32.xlu0 %v830
    %v832 = vpop.xlane.xlu0 %831
    %v833 = vmul.f32 %v832, %v173
    %v834 = vsel %vm198, %v813, -inf
    %835 = vmax.xlane.f32.xlu0 %v834
    %v836 = vpop.xlane.xlu0 %835
    %v837 = vsel %vm205, %v822, %v825
    %v838 = vsel %vm208, %v837, %v833
    %v839 = vsel %vm211, %v838, %v836
    %841 = vset.pattern.permute.xlu0 0
    %842 = vperm.xlu0 %841, %v816
    %v843 = vpop.permute.xlu0 %842
    %v845 = vperm.slane %v843, 0
    %vm846 = vcmask 64512
    %v848 = vsel %vm846, %v815, 0
    %850 = vmatpush.msra.mxu0 0.0
    %851 = vmatpush.msra.mxu0 0.0
    %852 = vmatpush.msra.mxu0 0.0
    %853 = vmatpush.msra.mxu0 0.0
    %854 = vmatpush.msra.mxu0 0.0
    %855 = vmatpush.msra.mxu0 0.0
    %856 = vmatpush.msra.mxu0 0.0
    %857 = vmatpush.msra.mxu0 0.0
    %858 = vmatpush.msra.mxu0 0.0
    %859 = vmatpush.msra.mxu0 0.0
    %860 = vmatpush.msra.mxu0 0.0
    %861 = vmatpush.msra.mxu0 0.0
    %862 = vmatpush.msra.mxu0 0.0
    %863 = vmatpush.msra.mxu0 0.0
    %864 = vmatpush.msra.mxu0 0.0
    %865 = vmatpush.msra.mxu0 %v839
    %866 = vmatmul.f32.gmra.mxu0 %v848
    %v867 = vpop.f32.mrf.mxu0
    %v868 = vadd.f32 %v845, %v867
    %869 = vdwg.mxu0
    %v870 = vmax.f32 %v868, 0.0
    %872 = vset.pattern.permute.xlu0 0
    %873 = vperm.xlu0 %872, %v818
    %v874 = vpop.permute.xlu0 %873
    %v877 = vsel %vm205, %v817, 0
    %vm879 = vcmask 1040384
    %v881 = vsel %vm879, %v870, 0
    %883 = vmatpush.msra.mxu0 0.0
    %884 = vmatpush.msra.mxu0 0.0
    %885 = vmatpush.msra.mxu0 0.0
    %886 = vmatpush.msra.mxu0 0.0
    %887 = vmatpush.msra.mxu0 0.0
    %888 = vmatpush.msra.mxu0 0.0
    %889 = vmatpush.msra.mxu0 0.0
    %890 = vmatpush.msra.mxu0 0.0
    %891 = vmatpush.msra.mxu0 0.0
    %892 = vmatpush.msra.mxu0 0.0
    %893 = vmatpush.msra.mxu0 0.0
    %894 = vmatpush.msra.mxu0 0.0
    %895 = vmatpush.msra.mxu0 0.0
    %896 = vmatpush.msra.mxu0 0.0
    %897 = vmatpush.msra.mxu0 0.0
    %898 = vmatpush.msra.mxu0 %v881
    %899 = vmatmul.f32.gmra.mxu0 %v877
    %v900 = vpop.f32.mrf.mxu0
    %v901 = vadd.f32 %v874, %v900
    %902 = vdwg.mxu0
    %v903 = vmul.f32 %v901, 0.5
    %v904 = vtanh.pop %v903
    %v905 = vmul.f32 %v904, 0.5
    %v906 = vadd.f32 %v905, 0.5
    %908 = vrot.lane.b32.xlu0 %v906, 127
    %v909 = vpop.permute.xlu0 %908
    %v911 = vadd.f32 %v906, %v909
    %v912 = vmul.f32 %v911, 0.5
    %v913 = vtanh.pop %v912
    %v914 = vmul.f32 %v913, 0.5
    %v915 = vadd.f32 %v914, 0.5
    %917 = vrot.lane.b32.xlu0 %v915, 127
    %v918 = vpop.permute.xlu0 %917
    %v920 = vsel %vm205, %v915, %v918
    %922 = vset.pattern.permute.xlu0 0
    %923 = vperm.xlu0 %922, %v920
    %v924 = vpop.permute.xlu0 %923
    %926 = vset.pattern.permute.xlu0 1
    %927 = vperm.xlu0 %926, %v920
    %v928 = vpop.permute.xlu0 %927
    %v930 = vsel %vm160, %v924, %v928
    %v931 = vmul.f32 %v930, %v813
    %v932 = vrot.slane %v931, 4
    %v933 = vadd.f32 %v931, %v932
    %v934 = vrot.slane %v933, 2
    %v935 = vadd.f32 %v933, %v934
    %v936 = vrot.slane %v935, 1
    %v937 = vadd.f32 %v935, %v936
    %v938 = vrcp.pop 8.0
    %v939 = vmul.f32 8.0, %v938
    %v940 = vsub.f32 1.0, %v939
    %v941 = vmul.f32 %v938, %v940
    %v942 = vadd.f32 %v938, %v941
    %vm943 = vweird.f32 %v938
    %v944 = vsel %vm943, %v938, %v942
    %v945 = vmul.f32 %v937, %v944
    %v946 = vrot.slane %v931, 4
    %v947 = vmax.f32 %v931, %v946
    %v948 = vrot.slane %v947, 2
    %v949 = vmax.f32 %v947, %v948
    %v950 = vrot.slane %v949, 1
    %v951 = vmax.f32 %v949, %v950
    %s952 = scalar_lea.vmem %s9, 24
    %v953 = vld [vmem:[%s952] sm:$0xff]
    %v954 = vld [vmem:[%s952 + $0x8] sm:$0xff]
    %v955 = vld [vmem:[%s952 + $0x10] sm:$0x3]
    %s956 = scalar_lea.vmem [#allocation7], 1
    %v957 = vld [vmem:[%s956] sm:$0x1]
    %958 = vrot.lane.b32.xlu0 %v945, 9
    %v959 = vpop.permute.xlu0 %958
    %v960 = vmul.f32 %v959, %v150
    %v961 = vmul.f32 %v953, %v960
    %v962 = vadd.f32 %v957, %v961
    %963 = vrot.lane.b32.xlu0 %v951, 9
    %v964 = vpop.permute.xlu0 %963
    %v965 = vmul.f32 %v964, %v150
    %v967 = vrot.slane %v965, 7
    %v969 = vmul.f32 %v953, %v967
    %971 = vst [vmem:[#allocation1] sm:$0xff] %v969
    %s972 = scalar_lea.vmem [#allocation1], 1
    %v973 = vld [vmem:[%s972] ss:$9 sm:$0xff]
    %v975 = vadd.f32 %v962, %v973
    %976 = vrot.lane.b32.xlu0 %v945, 8
    %v977 = vpop.permute.xlu0 %976
    %v978 = vmul.f32 %v977, %v392
    %v980 = vrot.slane %v978, 6
    %v982 = vmul.f32 %v953, %v980
    %984 = vst [vmem:[#allocation1] sm:$0xff] %v982
    %s985 = scalar_lea.vmem [#allocation1], 2
    %v986 = vld [vmem:[%s985] ss:$9 sm:$0xff]
    %v988 = vadd.f32 %v975, %v986
    %989 = vrot.lane.b32.xlu0 %v951, 8
    %v990 = vpop.permute.xlu0 %989
    %v991 = vmul.f32 %v990, %v392
    %v993 = vrot.slane %v991, 5
    %v995 = vmul.f32 %v953, %v993
    %997 = vst [vmem:[#allocation1] sm:$0xff] %v995
    %s998 = scalar_lea.vmem [#allocation1], 3
    %v999 = vld [vmem:[%s998] ss:$9 sm:$0xff]
    %v1001 = vadd.f32 %v988, %v999
    %1002 = vrot.lane.b32.xlu0 %v945, 7
    %v1003 = vpop.permute.xlu0 %1002
    %v1004 = vmul.f32 %v1003, %v420
    %v1006 = vrot.slane %v1004, 4
    %v1008 = vmul.f32 %v953, %v1006
    %1010 = vst [vmem:[#allocation1] sm:$0xff] %v1008
    %s1011 = scalar_lea.vmem [#allocation1], 4
    %v1012 = vld [vmem:[%s1011] ss:$9 sm:$0xff]
    %v1014 = vadd.f32 %v1001, %v1012
    %1015 = vrot.lane.b32.xlu0 %v951, 7
    %v1016 = vpop.permute.xlu0 %1015
    %v1017 = vmul.f32 %v1016, %v420
    %v1019 = vrot.slane %v1017, 3
    %v1021 = vmul.f32 %v953, %v1019
    %1023 = vst [vmem:[#allocation1] sm:$0xff] %v1021
    %s1024 = scalar_lea.vmem [#allocation1], 5
    %v1025 = vld [vmem:[%s1024] ss:$9 sm:$0xff]
    %v1027 = vadd.f32 %v1014, %v1025
    %1028 = vrot.lane.b32.xlu0 %v945, 1
    %v1029 = vpop.permute.xlu0 %1028
    %v1030 = vmul.f32 %v1029, %v448
    %v1032 = vrot.slane %v1030, 2
    %v1034 = vmul.f32 %v953, %v1032
    %1036 = vst [vmem:[#allocation1] sm:$0xff] %v1034
    %s1037 = scalar_lea.vmem [#allocation1], 6
    %v1038 = vld [vmem:[%s1037] ss:$9 sm:$0xff]
    %v1040 = vadd.f32 %v1027, %v1038
    %1041 = vrot.lane.b32.xlu0 %v951, 1
    %v1042 = vpop.permute.xlu0 %1041
    %v1043 = vmul.f32 %v1042, %v448
    %v1045 = vrot.slane %v1043, 1
    %v1047 = vmul.f32 %v953, %v1045
    %1049 = vst [vmem:[#allocation1] sm:$0xff] %v1047
    %s1050 = scalar_lea.vmem [#allocation1], 7
    %v1051 = vld [vmem:[%s1050] ss:$9 sm:$0xff]
    %v1053 = vadd.f32 %v1040, %v1051
    %v1054 = vmul.f32 %v954, %v945
    %v1055 = vadd.f32 %v1053, %v1054
    %v1056 = vmul.f32 %v954, %v951
    %1058 = vst [vmem:[#allocation1] sm:$0xff] %v1056
    %s1059 = scalar_lea.vmem [#allocation1], 1
    %v1060 = vld [vmem:[%s1059] ss:$9 sm:$0xff]
    %v1062 = vadd.f32 %v1055, %v1060
    %1063 = vrot.lane.b32.xlu0 %v945, 127
    %v1064 = vpop.permute.xlu0 %1063
    %v1065 = vmul.f32 %v1064, %v485
    %v1067 = vrot.slane %v1065, 6
    %v1069 = vmul.f32 %v954, %v1067
    %1071 = vst [vmem:[#allocation1] sm:$0xff] %v1069
    %s1072 = scalar_lea.vmem [#allocation1], 2
    %v1073 = vld [vmem:[%s1072] ss:$9 sm:$0xff]
    %v1075 = vadd.f32 %v1062, %v1073
    %1076 = vrot.lane.b32.xlu0 %v951, 127
    %v1077 = vpop.permute.xlu0 %1076
    %v1078 = vmul.f32 %v1077, %v485
    %v1080 = vrot.slane %v1078, 5
    %v1082 = vmul.f32 %v954, %v1080
    %1084 = vst [vmem:[#allocation1] sm:$0xff] %v1082
    %s1085 = scalar_lea.vmem [#allocation1], 3
    %v1086 = vld [vmem:[%s1085] ss:$9 sm:$0xff]
    %v1088 = vadd.f32 %v1075, %v1086
    %1089 = vrot.lane.b32.xlu0 %v945, 121
    %v1090 = vpop.permute.xlu0 %1089
    %v1091 = vmul.f32 %v1090, %v513
    %v1093 = vrot.slane %v1091, 4
    %v1095 = vmul.f32 %v954, %v1093
    %1097 = vst [vmem:[#allocation1] sm:$0xff] %v1095
    %s1098 = scalar_lea.vmem [#allocation1], 4
    %v1099 = vld [vmem:[%s1098] ss:$9 sm:$0xff]
    %v1101 = vadd.f32 %v1088, %v1099
    %1102 = vrot.lane.b32.xlu0 %v951, 121
    %v1103 = vpop.permute.xlu0 %1102
    %v1104 = vmul.f32 %v1103, %v513
    %v1106 = vrot.slane %v1104, 3
    %v1108 = vmul.f32 %v954, %v1106
    %1110 = vst [vmem:[#allocation1] sm:$0xff] %v1108
    %s1111 = scalar_lea.vmem [#allocation1], 5
    %v1112 = vld [vmem:[%s1111] ss:$9 sm:$0xff]
    %v1114 = vadd.f32 %v1101, %v1112
    %1115 = vrot.lane.b32.xlu0 %v945, 120
    %v1116 = vpop.permute.xlu0 %1115
    %v1117 = vmul.f32 %v1116, %v541
    %v1119 = vrot.slane %v1117, 2
    %v1121 = vmul.f32 %v954, %v1119
    %1123 = vst [vmem:[#allocation1] sm:$0xff] %v1121
    %s1124 = scalar_lea.vmem [#allocation1], 6
    %v1125 = vld [vmem:[%s1124] ss:$9 sm:$0xff]
    %v1127 = vadd.f32 %v1114, %v1125
    %1128 = vrot.lane.b32.xlu0 %v951, 120
    %v1129 = vpop.permute.xlu0 %1128
    %v1130 = vmul.f32 %v1129, %v541
    %v1132 = vrot.slane %v1130, 1
    %v1134 = vmul.f32 %v954, %v1132
    %1136 = vst [vmem:[#allocation1] sm:$0xff] %v1134
    %s1137 = scalar_lea.vmem [#allocation1], 7
    %v1138 = vld [vmem:[%s1137] ss:$9 sm:$0xff]
    %v1140 = vadd.f32 %v1127, %v1138
    %1141 = vrot.lane.b32.xlu0 %v945, 119
    %v1142 = vpop.permute.xlu0 %1141
    %v1143 = vmul.f32 %v1142, %v151
    %v1144 = vmul.f32 %v955, %v1143
    %v1145 = vadd.f32 %v1140, %v1144
    %1146 = vrot.lane.b32.xlu0 %v951, 119
    %v1147 = vpop.permute.xlu0 %1146
    %v1148 = vmul.f32 %v1147, %v151
    %v1150 = vrot.slane %v1148, 7
    %v1152 = vmul.f32 %v955, %v1150
    %1154 = vst [vmem:[#allocation1] sm:$0xff] %v1152
    %s1155 = scalar_lea.vmem [#allocation1], 1
    %v1156 = vld [vmem:[%s1155] ss:$9 sm:$0xff]
    %v1158 = vadd.f32 %v1145, %v1156
    %v1159 = vmul.f32 %v1158, 0.5
    %v1160 = vtanh.pop %v1159
    %v1161 = vmul.f32 %v1160, 0.5
    %v1162 = vadd.f32 %v1161, 0.5
    %v1164 = vperm.slane %v1162, 0
    %v1166 = vmul.f32 %v1164, %v931
    %v1167 = vmul.f32 %v1166, %v813
    %v1168 = vadd.f32 %v1167, %v701
    %v1169 = vmax.f32 %v1168, 0.0
    %s1170 = scalar_lea.vmem %s12, 16
    %v1171 = vld [vmem:[%s1170] sm:$0xff]
    %s1172 = scalar_lea.vmem %s14, 24
    %v1173 = vld [vmem:[%s1172] sm:$0xff]
    %1174 = vrot.lane.b32.xlu0 %v1169, 9
    %v1175 = vpop.permute.xlu0 %1174
    %v1176 = vmul.f32 %v1175, %v601
    %1177 = vrot.lane.b32.xlu0 %v1169, 8
    %v1178 = vpop.permute.xlu0 %1177
    %v1179 = vmul.f32 %v1178, %v608
    %1180 = vrot.lane.b32.xlu0 %v1169, 7
    %v1181 = vpop.permute.xlu0 %1180
    %v1182 = vmul.f32 %v1181, %v615
    %1183 = vrot.lane.b32.xlu0 %v1169, 1
    %v1184 = vpop.permute.xlu0 %1183
    %v1185 = vmul.f32 %v1184, %v622
    %1186 = vrot.lane.b32.xlu0 %v1169, 127
    %v1187 = vpop.permute.xlu0 %1186
    %v1188 = vmul.f32 %v1187, %v629
    %1189 = vrot.lane.b32.xlu0 %v1169, 121
    %v1190 = vpop.permute.xlu0 %1189
    %v1191 = vmul.f32 %v1190, %v636
    %1192 = vrot.lane.b32.xlu0 %v1169, 120
    %v1193 = vpop.permute.xlu0 %1192
    %v1194 = vmul.f32 %v1193, %v643
    %1195 = vrot.lane.b32.xlu0 %v1169, 119
    %v1196 = vpop.permute.xlu0 %1195
    %v1197 = vmul.f32 %v1196, %v650
    %1199 = vset.pattern.permute.xlu0 0
    %1200 = vperm.xlu0 %1199, %v1173
    %v1201 = vpop.permute.xlu0 %1200
    %v1204 = vsel %vm734, %v1171, 0
    %1206 = vmatpush.msra.mxu0 0.0
    %1207 = vmatpush.msra.mxu0 0.0
    %1208 = vmatpush.msra.mxu0 0.0
    %1209 = vmatpush.msra.mxu0 0.0
    %1210 = vmatpush.msra.mxu0 0.0
    %1211 = vmatpush.msra.mxu0 0.0
    %1212 = vmatpush.msra.mxu0 0.0
    %1213 = vmatpush.msra.mxu0 %v1197
    %1214 = vmatpush.msra.mxu0 %v1194
    %1215 = vmatpush.msra.mxu0 %v1191
    %1216 = vmatpush.msra.mxu0 %v1188
    %1217 = vmatpush.msra.mxu0 %v1169
    %1218 = vmatpush.msra.mxu0 %v1185
    %1219 = vmatpush.msra.mxu0 %v1182
    %1220 = vmatpush.msra.mxu0 %v1179
    %1221 = vmatpush.msra.mxu0 %v1176
    %1222 = vmatmul.f32.gmra.mxu0 %v1204
    %v1223 = vpop.f32.mrf.mxu0
    %v1224 = vadd.f32 %v1201, %v1223
    %1225 = vdwg.mxu0
    %v1226 = vmax.f32 %v1224, 0.0
    %s1227 = scalar_lea.vmem %s12, 24
    %v1228 = vld [vmem:[%s1227] sm:$0xff]
    %s1229 = scalar_lea.vmem %s14, 32
    %v1230 = vld [vmem:[%s1229] sm:$0xff]
    %1231 = vrot.lane.b32.xlu0 %v1226, 9
    %v1232 = vpop.permute.xlu0 %1231
    %v1233 = vmul.f32 %v1232, %v601
    %1234 = vrot.lane.b32.xlu0 %v1226, 8
    %v1235 = vpop.permute.xlu0 %1234
    %v1236 = vmul.f32 %v1235, %v608
    %1237 = vrot.lane.b32.xlu0 %v1226, 7
    %v1238 = vpop.permute.xlu0 %1237
    %v1239 = vmul.f32 %v1238, %v615
    %1240 = vrot.lane.b32.xlu0 %v1226, 1
    %v1241 = vpop.permute.xlu0 %1240
    %v1242 = vmul.f32 %v1241, %v622
    %1243 = vrot.lane.b32.xlu0 %v1226, 127
    %v1244 = vpop.permute.xlu0 %1243
    %v1245 = vmul.f32 %v1244, %v629
    %1246 = vrot.lane.b32.xlu0 %v1226, 121
    %v1247 = vpop.permute.xlu0 %1246
    %v1248 = vmul.f32 %v1247, %v636
    %1249 = vrot.lane.b32.xlu0 %v1226, 120
    %v1250 = vpop.permute.xlu0 %1249
    %v1251 = vmul.f32 %v1250, %v643
    %1252 = vrot.lane.b32.xlu0 %v1226, 119
    %v1253 = vpop.permute.xlu0 %1252
    %v1254 = vmul.f32 %v1253, %v650
    %1256 = vset.pattern.permute.xlu0 0
    %1257 = vperm.xlu0 %1256, %v1230
    %v1258 = vpop.permute.xlu0 %1257
    %v1261 = vsel %vm734, %v1228, 0
    %1263 = vmatpush.msra.mxu0 0.0
    %1264 = vmatpush.msra.mxu0 0.0
    %1265 = vmatpush.msra.mxu0 0.0
    %1266 = vmatpush.msra.mxu0 0.0
    %1267 = vmatpush.msra.mxu0 0.0
    %1268 = vmatpush.msra.mxu0 0.0
    %1269 = vmatpush.msra.mxu0 0.0
    %1270 = vmatpush.msra.mxu0 %v1254
    %1271 = vmatpush.msra.mxu0 %v1251
    %1272 = vmatpush.msra.mxu0 %v1248
    %1273 = vmatpush.msra.mxu0 %v1245
    %1274 = vmatpush.msra.mxu0 %v1226
    %1275 = vmatpush.msra.mxu0 %v1242
    %1276 = vmatpush.msra.mxu0 %v1239
    %1277 = vmatpush.msra.mxu0 %v1236
    %1278 = vmatpush.msra.mxu0 %v1233
    %1279 = vmatmul.f32.gmra.mxu0 %v1261
    %v1280 = vpop.f32.mrf.mxu0
    %v1281 = vadd.f32 %v1258, %v1280
    %1282 = vdwg.mxu0
    %s1283 = scalar_lea.vmem [#allocation5], 1
    %v1284 = vld [vmem:[%s1283] sm:$0x1]
    %s1285 = scalar_lea.vmem %s6, 1
    %v1286 = vld [vmem:[%s1285] sm:$0x1]
    %s1287 = scalar_lea.vmem %s7, 8
    %v1288 = vld [vmem:[%s1287] sm:$0xff]
    %s1289 = scalar_lea.vmem %s8, 8
    %v1290 = vld [vmem:[%s1289] sm:$0xff]
    %v1291 = vsel %vm160, %v1281, 0.0
    %1292 = vadd.xlane.f32.xlu0 %v1291
    %v1293 = vpop.xlane.xlu0 %1292
    %v1294 = vmul.f32 %v1293, %v173
    %v1295 = vsel %vm160, %v1281, -inf
    %1296 = vmax.xlane.f32.xlu0 %v1295
    %v1297 = vpop.xlane.xlu0 %1296
    %1299 = vrot.lane.b32.xlu0 %v1281, 64
    %v1300 = vpop.permute.xlu0 %1299
    %v1302 = vsel %vm160, %v1300, 0.0
    %1303 = vadd.xlane.f32.xlu0 %v1302
    %v1304 = vpop.xlane.xlu0 %1303
    %v1305 = vmul.f32 %v1304, %v173
    %v1306 = vsel %vm198, %v1281, -inf
    %1307 = vmax.xlane.f32.xlu0 %v1306
    %v1308 = vpop.xlane.xlu0 %1307
    %v1309 = vsel %vm205, %v1294, %v1297
    %v1310 = vsel %vm208, %v1309, %v1305
    %v1311 = vsel %vm211, %v1310, %v1308
    %1313 = vset.pattern.permute.xlu0 0
    %1314 = vperm.xlu0 %1313, %v1286
    %v1315 = vpop.permute.xlu0 %1314
    %v1317 = vperm.slane %v1315, 0
    %v1319 = vsel %vm846, %v1284, 0
    %1321 = vmatpush.msra.mxu0 0.0
    %1322 = vmatpush.msra.mxu0 0.0
    %1323 = vmatpush.msra.mxu0 0.0
    %1324 = vmatpush.msra.mxu0 0.0
    %1325 = vmatpush.msra.mxu0 0.0
    %1326 = vmatpush.msra.mxu0 0.0
    %1327 = vmatpush.msra.mxu0 0.0
    %1328 = vmatpush.msra.mxu0 0.0
    %1329 = vmatpush.msra.mxu0 0.0
    %1330 = vmatpush.msra.mxu0 0.0
    %1331 = vmatpush.msra.mxu0 0.0
    %1332 = vmatpush.msra.mxu0 0.0
    %1333 = vmatpush.msra.mxu0 0.0
    %1334 = vmatpush.msra.mxu0 0.0
    %1335 = vmatpush.msra.mxu0 0.0
    %1336 = vmatpush.msra.mxu0 %v1311
    %1337 = vmatmul.f32.gmra.mxu0 %v1319
    %v1338 = vpop.f32.mrf.mxu0
    %v1339 = vadd.f32 %v1317, %v1338
    %1340 = vdwg.mxu0
    %v1341 = vmax.f32 %v1339, 0.0
    %1343 = vset.pattern.permute.xlu0 0
    %1344 = vperm.xlu0 %1343, %v1290
    %v1345 = vpop.permute.xlu0 %1344
    %v1348 = vsel %vm205, %v1288, 0
    %v1351 = vsel %vm879, %v1341, 0
    %1353 = vmatpush.msra.mxu0 0.0
    %1354 = vmatpush.msra.mxu0 0.0
    %1355 = vmatpush.msra.mxu0 0.0
    %1356 = vmatpush.msra.mxu0 0.0
    %1357 = vmatpush.msra.mxu0 0.0
    %1358 = vmatpush.msra.mxu0 0.0
    %1359 = vmatpush.msra.mxu0 0.0
    %1360 = vmatpush.msra.mxu0 0.0
    %1361 = vmatpush.msra.mxu0 0.0
    %1362 = vmatpush.msra.mxu0 0.0
    %1363 = vmatpush.msra.mxu0 0.0
    %1364 = vmatpush.msra.mxu0 0.0
    %1365 = vmatpush.msra.mxu0 0.0
    %1366 = vmatpush.msra.mxu0 0.0
    %1367 = vmatpush.msra.mxu0 0.0
    %1368 = vmatpush.msra.mxu0 %v1351
    %1369 = vmatmul.f32.gmra.mxu0 %v1348
    %v1370 = vpop.f32.mrf.mxu0
    %v1371 = vadd.f32 %v1345, %v1370
    %1372 = vdwg.mxu0
    %v1373 = vmul.f32 %v1371, 0.5
    %v1374 = vtanh.pop %v1373
    %v1375 = vmul.f32 %v1374, 0.5
    %v1376 = vadd.f32 %v1375, 0.5
    %1378 = vrot.lane.b32.xlu0 %v1376, 127
    %v1379 = vpop.permute.xlu0 %1378
    %v1381 = vadd.f32 %v1376, %v1379
    %v1382 = vmul.f32 %v1381, 0.5
    %v1383 = vtanh.pop %v1382
    %v1384 = vmul.f32 %v1383, 0.5
    %v1385 = vadd.f32 %v1384, 0.5
    %1387 = vrot.lane.b32.xlu0 %v1385, 127
    %v1388 = vpop.permute.xlu0 %1387
    %v1390 = vsel %vm205, %v1385, %v1388
    %1392 = vset.pattern.permute.xlu0 0
    %1393 = vperm.xlu0 %1392, %v1390
    %v1394 = vpop.permute.xlu0 %1393
    %1396 = vset.pattern.permute.xlu0 1
    %1397 = vperm.xlu0 %1396, %v1390
    %v1398 = vpop.permute.xlu0 %1397
    %v1400 = vsel %vm160, %v1394, %v1398
    %v1401 = vmul.f32 %v1400, %v1281
    %v1402 = vrot.slane %v1401, 4
    %v1403 = vadd.f32 %v1401, %v1402
    %v1404 = vrot.slane %v1403, 2
    %v1405 = vadd.f32 %v1403, %v1404
    %v1406 = vrot.slane %v1405, 1
    %v1407 = vadd.f32 %v1405, %v1406
    %v1408 = vmul.f32 %v1407, %v944
    %v1409 = vrot.slane %v1401, 4
    %v1410 = vmax.f32 %v1401, %v1409
    %v1411 = vrot.slane %v1410, 2
    %v1412 = vmax.f32 %v1410, %v1411
    %v1413 = vrot.slane %v1412, 1
    %v1414 = vmax.f32 %v1412, %v1413
    %s1415 = scalar_lea.vmem %s9, 48
    %v1416 = vld [vmem:[%s1415] sm:$0xff]
    %v1417 = vld [vmem:[%s1415 + $0x8] sm:$0xff]
    %v1418 = vld [vmem:[%s1415 + $0x10] sm:$0x3]
    %s1419 = scalar_lea.vmem [#allocation7], 2
    %v1420 = vld [vmem:[%s1419] sm:$0x1]
    %1421 = vrot.lane.b32.xlu0 %v1408, 9
    %v1422 = vpop.permute.xlu0 %1421
    %v1423 = vmul.f32 %v1422, %v150
    %v1424 = vmul.f32 %v1416, %v1423
    %v1425 = vadd.f32 %v1420, %v1424
    %1426 = vrot.lane.b32.xlu0 %v1414, 9
    %v1427 = vpop.permute.xlu0 %1426
    %v1428 = vmul.f32 %v1427, %v150
    %v1430 = vrot.slane %v1428, 7
    %v1432 = vmul.f32 %v1416, %v1430
    %1434 = vst [vmem:[#allocation1] sm:$0xff] %v1432
    %s1435 = scalar_lea.vmem [#allocation1], 1
    %v1436 = vld [vmem:[%s1435] ss:$9 sm:$0xff]
    %v1438 = vadd.f32 %v1425, %v1436
    %1439 = vrot.lane.b32.xlu0 %v1408, 8
    %v1440 = vpop.permute.xlu0 %1439
    %v1441 = vmul.f32 %v1440, %v392
    %v1443 = vrot.slane %v1441, 6
    %v1445 = vmul.f32 %v1416, %v1443
    %1447 = vst [vmem:[#allocation1] sm:$0xff] %v1445
    %s1448 = scalar_lea.vmem [#allocation1], 2
    %v1449 = vld [vmem:[%s1448] ss:$9 sm:$0xff]
    %v1451 = vadd.f32 %v1438, %v1449
    %1452 = vrot.lane.b32.xlu0 %v1414, 8
    %v1453 = vpop.permute.xlu0 %1452
    %v1454 = vmul.f32 %v1453, %v392
    %v1456 = vrot.slane %v1454, 5
    %v1458 = vmul.f32 %v1416, %v1456
    %1460 = vst [vmem:[#allocation1] sm:$0xff] %v1458
    %s1461 = scalar_lea.vmem [#allocation1], 3
    %v1462 = vld [vmem:[%s1461] ss:$9 sm:$0xff]
    %v1464 = vadd.f32 %v1451, %v1462
    %1465 = vrot.lane.b32.xlu0 %v1408, 7
    %v1466 = vpop.permute.xlu0 %1465
    %v1467 = vmul.f32 %v1466, %v420
    %v1469 = vrot.slane %v1467, 4
    %v1471 = vmul.f32 %v1416, %v1469
    %1473 = vst [vmem:[#allocation1] sm:$0xff] %v1471
    %s1474 = scalar_lea.vmem [#allocation1], 4
    %v1475 = vld [vmem:[%s1474] ss:$9 sm:$0xff]
    %v1477 = vadd.f32 %v1464, %v1475
    %1478 = vrot.lane.b32.xlu0 %v1414, 7
    %v1479 = vpop.permute.xlu0 %1478
    %v1480 = vmul.f32 %v1479, %v420
    %v1482 = vrot.slane %v1480, 3
    %v1484 = vmul.f32 %v1416, %v1482
    %1486 = vst [vmem:[#allocation1] sm:$0xff] %v1484
    %s1487 = scalar_lea.vmem [#allocation1], 5
    %v1488 = vld [vmem:[%s1487] ss:$9 sm:$0xff]
    %v1490 = vadd.f32 %v1477, %v1488
    %1491 = vrot.lane.b32.xlu0 %v1408, 1
    %v1492 = vpop.permute.xlu0 %1491
    %v1493 = vmul.f32 %v1492, %v448
    %v1495 = vrot.slane %v1493, 2
    %v1497 = vmul.f32 %v1416, %v1495
    %1499 = vst [vmem:[#allocation1] sm:$0xff] %v1497
    %s1500 = scalar_lea.vmem [#allocation1], 6
    %v1501 = vld [vmem:[%s1500] ss:$9 sm:$0xff]
    %v1503 = vadd.f32 %v1490, %v1501
    %1504 = vrot.lane.b32.xlu0 %v1414, 1
    %v1505 = vpop.permute.xlu0 %1504
    %v1506 = vmul.f32 %v1505, %v448
    %v1508 = vrot.slane %v1506, 1
    %v1510 = vmul.f32 %v1416, %v1508
    %1512 = vst [vmem:[#allocation1] sm:$0xff] %v1510
    %s1513 = scalar_lea.vmem [#allocation1], 7
    %v1514 = vld [vmem:[%s1513] ss:$9 sm:$0xff]
    %v1516 = vadd.f32 %v1503, %v1514
    %v1517 = vmul.f32 %v1417, %v1408
    %v1518 = vadd.f32 %v1516, %v1517
    %v1519 = vmul.f32 %v1417, %v1414
    %1521 = vst [vmem:[#allocation1] sm:$0xff] %v1519
    %s1522 = scalar_lea.vmem [#allocation1], 1
    %v1523 = vld [vmem:[%s1522] ss:$9 sm:$0xff]
    %v1525 = vadd.f32 %v1518, %v1523
    %1526 = vrot.lane.b32.xlu0 %v1408, 127
    %v1527 = vpop.permute.xlu0 %1526
    %v1528 = vmul.f32 %v1527, %v485
    %v1530 = vrot.slane %v1528, 6
    %v1532 = vmul.f32 %v1417, %v1530
    %1534 = vst [vmem:[#allocation1] sm:$0xff] %v1532
    %s1535 = scalar_lea.vmem [#allocation1], 2
    %v1536 = vld [vmem:[%s1535] ss:$9 sm:$0xff]
    %v1538 = vadd.f32 %v1525, %v1536
    %1539 = vrot.lane.b32.xlu0 %v1414, 127
    %v1540 = vpop.permute.xlu0 %1539
    %v1541 = vmul.f32 %v1540, %v485
    %v1543 = vrot.slane %v1541, 5
    %v1545 = vmul.f32 %v1417, %v1543
    %1547 = vst [vmem:[#allocation1] sm:$0xff] %v1545
    %s1548 = scalar_lea.vmem [#allocation1], 3
    %v1549 = vld [vmem:[%s1548] ss:$9 sm:$0xff]
    %v1551 = vadd.f32 %v1538, %v1549
    %1552 = vrot.lane.b32.xlu0 %v1408, 121
    %v1553 = vpop.permute.xlu0 %1552
    %v1554 = vmul.f32 %v1553, %v513
    %v1556 = vrot.slane %v1554, 4
    %v1558 = vmul.f32 %v1417, %v1556
    %1560 = vst [vmem:[#allocation1] sm:$0xff] %v1558
    %s1561 = scalar_lea.vmem [#allocation1], 4
    %v1562 = vld [vmem:[%s1561] ss:$9 sm:$0xff]
    %v1564 = vadd.f32 %v1551, %v1562
    %1565 = vrot.lane.b32.xlu0 %v1414, 121
    %v1566 = vpop.permute.xlu0 %1565
    %v1567 = vmul.f32 %v1566, %v513
    %v1569 = vrot.slane %v1567, 3
    %v1571 = vmul.f32 %v1417, %v1569
    %1573 = vst [vmem:[#allocation1] sm:$0xff] %v1571
    %s1574 = scalar_lea.vmem [#allocation1], 5
    %v1575 = vld [vmem:[%s1574] ss:$9 sm:$0xff]
    %v1577 = vadd.f32 %v1564, %v1575
    %1578 = vrot.lane.b32.xlu0 %v1408, 120
    %v1579 = vpop.permute.xlu0 %1578
    %v1580 = vmul.f32 %v1579, %v541
    %v1582 = vrot.slane %v1580, 2
    %v1584 = vmul.f32 %v1417, %v1582
    %1586 = vst [vmem:[#allocation1] sm:$0xff] %v1584
    %s1587 = scalar_lea.vmem [#allocation1], 6
    %v1588 = vld [vmem:[%s1587] ss:$9 sm:$0xff]
    %v1590 = vadd.f32 %v1577, %v1588
    %1591 = vrot.lane.b32.xlu0 %v1414, 120
    %v1592 = vpop.permute.xlu0 %1591
    %v1593 = vmul.f32 %v1592, %v541
    %v1595 = vrot.slane %v1593, 1
    %v1597 = vmul.f32 %v1417, %v1595
    %1599 = vst [vmem:[#allocation1] sm:$0xff] %v1597
    %s1600 = scalar_lea.vmem [#allocation1], 7
    %v1601 = vld [vmem:[%s1600] ss:$9 sm:$0xff]
    %v1603 = vadd.f32 %v1590, %v1601
    %1604 = vrot.lane.b32.xlu0 %v1408, 119
    %v1605 = vpop.permute.xlu0 %1604
    %v1606 = vmul.f32 %v1605, %v151
    %v1607 = vmul.f32 %v1418, %v1606
    %v1608 = vadd.f32 %v1603, %v1607
    %1609 = vrot.lane.b32.xlu0 %v1414, 119
    %v1610 = vpop.permute.xlu0 %1609
    %v1611 = vmul.f32 %v1610, %v151
    %v1613 = vrot.slane %v1611, 7
    %v1615 = vmul.f32 %v1418, %v1613
    %1617 = vst [vmem:[#allocation1] sm:$0xff] %v1615
    %s1618 = scalar_lea.vmem [#allocation1], 1
    %v1619 = vld [vmem:[%s1618] ss:$9 sm:$0xff]
    %v1621 = vadd.f32 %v1608, %v1619
    %v1622 = vmul.f32 %v1621, 0.5
    %v1623 = vtanh.pop %v1622
    %v1624 = vmul.f32 %v1623, 0.5
    %v1625 = vadd.f32 %v1624, 0.5
    %v1627 = vperm.slane %v1625, 0
    %v1629 = vmul.f32 %v1627, %v1401
    %v1630 = vmul.f32 %v1629, %v1281
    %v1631 = vadd.f32 %v1630, %v1169
    %v1632 = vmax.f32 %v1631, 0.0
    %v1633 = vld [vmem:[#allocation8] sm:$0xff]
    %s1634 = scalar_lea.vmem %s14, 40
    %v1635 = vld [vmem:[%s1634] sm:$0xff]
    %1637 = vset.pattern.permute.xlu0 0
    %1638 = vperm.xlu0 %1637, %v1635
    %v1639 = vpop.permute.xlu0 %1638
    %v1642 = vsel %vm846, %v1633, 0
    %1644 = vmatpush.msra.mxu0 0.0
    %1645 = vmatpush.msra.mxu0 0.0
    %1646 = vmatpush.msra.mxu0 0.0
    %1647 = vmatpush.msra.mxu0 0.0
    %1648 = vmatpush.msra.mxu0 0.0
    %1649 = vmatpush.msra.mxu0 0.0
    %1650 = vmatpush.msra.mxu0 0.0
    %1651 = vmatpush.msra.mxu0 0.0
    %1652 = vmatpush.msra.mxu0 0.0
    %1653 = vmatpush.msra.mxu0 0.0
    %1654 = vmatpush.msra.mxu0 0.0
    %1655 = vmatpush.msra.mxu0 0.0
    %1656 = vmatpush.msra.mxu0 0.0
    %1657 = vmatpush.msra.mxu0 0.0
    %1658 = vmatpush.msra.mxu0 0.0
    %1659 = vmatpush.msra.mxu0 %v1632
    %1660 = vmatmul.f32.gmra.mxu0 %v1642
    %v1661 = vpop.f32.mrf.mxu0
    %v1662 = vadd.f32 %v1639, %v1661
    %1663 = vdwg.mxu0
    %v1665 = vrot.slane %v1662, 1
    %1666 = vrot.lane.b32.xlu0 %v1665, 64
    %v1667 = vpop.permute.xlu0 %1666
    %v1669 = vrot.slane %v1662, 2
    %v1671 = vrot.slane %v1662, 3
    %1672 = vrot.lane.b32.xlu0 %v1671, 64
    %v1673 = vpop.permute.xlu0 %1672
    %v1675 = vrot.slane %v1662, 4
    %v1677 = vrot.slane %v1662, 5
    %1678 = vrot.lane.b32.xlu0 %v1677, 64
    %v1679 = vpop.permute.xlu0 %1678
    %v1681 = vrot.slane %v1662, 6
    %v1683 = vrot.slane %v1662, 7
    %1684 = vrot.lane.b32.xlu0 %v1683, 64
    %v1685 = vpop.permute.xlu0 %1684
    %v1687 = vsel %vm160, %v1662, %v1667
    %v1688 = vsel %vm160, %v1669, %v1673
    %v1689 = vsel %vm160, %v1675, %v1679
    %v1690 = vsel %vm160, %v1681, %v1685
    %1691 = vrot.lane.b32.xlu0 %v1662, 64
    %v1692 = vpop.permute.xlu0 %1691
    %1695 = vrot.lane.b32.xlu0 %v1669, 64
    %v1696 = vpop.permute.xlu0 %1695
    %1699 = vrot.lane.b32.xlu0 %v1675, 64
    %v1700 = vpop.permute.xlu0 %1699
    %1703 = vrot.lane.b32.xlu0 %v1681, 64
    %v1704 = vpop.permute.xlu0 %1703
    %v1707 = vsel %vm160, %v1692, %v1665
    %v1708 = vsel %vm160, %v1696, %v1671
    %v1709 = vsel %vm160, %v1700, %v1677
    %v1710 = vsel %vm160, %v1704, %v1683
    %v1715 = vrot.slane %v1707, 7
    %v1716 = vrot.slane %v1708, 7
    %v1717 = vrot.slane %v1709, 7
    %v1718 = vrot.slane %v1710, 7
    %v1723 = vsel %vm879, %v1687, %v1715
    %v1724 = vsel %vm879, %v1688, %v1716
    %v1725 = vsel %vm879, %v1689, %v1717
    %v1726 = vsel %vm879, %v1690, %v1718
    %v1727 = vld [vmem:[#allocation10] sm:$0xff]
    %v1728 = vld [vmem:[#allocation10 + $0x8] sm:$0xff]
    %v1729 = vld [vmem:[#allocation10 + $0x10] sm:$0xff]
    %v1730 = vld [vmem:[#allocation10 + $0x18] sm:$0xff]
    %v1731 = vld [vmem:[#allocation10 + $0x20] sm:$0xff]
    %v1732 = vld [vmem:[#allocation10 + $0x28] sm:$0xff]
    %v1733 = vld [vmem:[#allocation10 + $0x30] sm:$0xff]
    %v1734 = vld [vmem:[#allocation10 + $0x38] sm:$0xff]
    %v1735 = vld [vmem:[#allocation10 + $0x40] sm:$0xff]
    %v1736 = vld [vmem:[#allocation10 + $0x48] sm:$0xff]
    %v1737 = vld [vmem:[#allocation10 + $0x50] sm:$0xff]
    %v1738 = vld [vmem:[#allocation10 + $0x58] sm:$0xff]
    %v1739 = vld [vmem:[#allocation10 + $0x60] sm:$0xff]
    %v1740 = vld [vmem:[#allocation10 + $0x68] sm:$0xff]
    %v1741 = vld [vmem:[#allocation10 + $0x70] sm:$0xff]
    %v1742 = vld [vmem:[#allocation10 + $0x78] sm:$0xff]
    %v1743 = vld [vmem:[#allocation10 + $0x80] sm:$0xff]
    %v1744 = vld [vmem:[#allocation10 + $0x88] sm:$0xff]
    %v1745 = vld [vmem:[#allocation10 + $0x90] sm:$0xff]
    %v1746 = vld [vmem:[#allocation10 + $0x98] sm:$0xff]
    %v1747 = vld [vmem:[#allocation10 + $0xa0] sm:$0xff]
    %v1748 = vld [vmem:[#allocation10 + $0xa8] sm:$0xff]
    %v1749 = vld [vmem:[#allocation10 + $0xb0] sm:$0xff]
    %v1750 = vld [vmem:[#allocation10 + $0xb8] sm:$0xff]
    %v1751 = vld [vmem:[#allocation10 + $0xc0] sm:$0xff]
    %v1752 = vld [vmem:[#allocation10 + $0xc8] sm:$0xff]
    %v1753 = vld [vmem:[#allocation10 + $0xd0] sm:$0xff]
    %v1754 = vld [vmem:[#allocation10 + $0xd8] sm:$0xff]
    %v1755 = vld [vmem:[#allocation10 + $0xe0] sm:$0xff]
    %v1756 = vld [vmem:[#allocation10 + $0xe8] sm:$0xff]
    %v1757 = vld [vmem:[#allocation10 + $0xf0] sm:$0xff]
    %v1758 = vld [vmem:[#allocation10 + $0xf8] sm:$0xff]
    %v1759 = vld [vmem:[#allocation10 + $0x100] sm:$0xff]
    %v1760 = vld [vmem:[#allocation10 + $0x108] sm:$0xff]
    %v1761 = vld [vmem:[#allocation10 + $0x110] sm:$0xff]
    %v1762 = vld [vmem:[#allocation10 + $0x118] sm:$0xff]
    %v1763 = vld [vmem:[#allocation10 + $0x120] sm:$0xff]
    %v1764 = vld [vmem:[#allocation10 + $0x128] sm:$0xff]
    %v1765 = vld [vmem:[#allocation10 + $0x130] sm:$0xff]
    %v1766 = vld [vmem:[#allocation10 + $0x138] sm:$0xff]
    %v1767 = vld [vmem:[#allocation10 + $0x140] sm:$0xff]
    %v1768 = vld [vmem:[#allocation10 + $0x148] sm:$0xff]
    %v1769 = vld [vmem:[#allocation10 + $0x150] sm:$0xff]
    %v1770 = vld [vmem:[#allocation10 + $0x158] sm:$0xff]
    %v1771 = vld [vmem:[#allocation10 + $0x160] sm:$0xff]
    %v1772 = vld [vmem:[#allocation10 + $0x168] sm:$0xff]
    %v1773 = vld [vmem:[#allocation10 + $0x170] sm:$0xff]
    %v1774 = vld [vmem:[#allocation10 + $0x178] sm:$0xff]
    %v1775 = vld [vmem:[#allocation10 + $0x180] sm:$0xff]
    %v1776 = vld [vmem:[#allocation10 + $0x188] sm:$0xff]
    %v1777 = vld [vmem:[#allocation10 + $0x190] sm:$0xff]
    %v1778 = vld [vmem:[#allocation10 + $0x198] sm:$0xff]
    %v1779 = vld [vmem:[#allocation10 + $0x1a0] sm:$0xff]
    %v1780 = vld [vmem:[#allocation10 + $0x1a8] sm:$0xff]
    %v1781 = vld [vmem:[#allocation10 + $0x1b0] sm:$0xff]
    %v1782 = vld [vmem:[#allocation10 + $0x1b8] sm:$0xff]
    %v1783 = vld [vmem:[#allocation10 + $0x1c0] sm:$0xff]
    %v1784 = vld [vmem:[#allocation10 + $0x1c8] sm:$0xff]
    %v1785 = vld [vmem:[#allocation10 + $0x1d0] sm:$0xff]
    %v1786 = vld [vmem:[#allocation10 + $0x1d8] sm:$0xff]
    %v1787 = vld [vmem:[#allocation10 + $0x1e0] sm:$0xff]
    %v1788 = vld [vmem:[#allocation10 + $0x1e8] sm:$0xff]
    %v1789 = vld [vmem:[#allocation10 + $0x1f0] sm:$0xff]
    %v1790 = vld [vmem:[#allocation10 + $0x1f8] sm:$0xff]
    %v1791 = vld [vmem:[%s16] sm:$0x1]
    %v1793 = vperm.slane %v1791, 0
    %1795 = vmatpush.msra.mxu0 %v1742
    %1796 = vmatpush.msra.mxu0 %v1741
    %1797 = vmatpush.msra.mxu0 %v1740
    %1798 = vmatpush.msra.mxu0 %v1739
    %1799 = vmatpush.msra.mxu0 %v1738
    %1800 = vmatpush.msra.mxu0 %v1737
    %1801 = vmatpush.msra.mxu0 %v1736
    %1802 = vmatpush.msra.mxu0 %v1735
    %1803 = vmatpush.msra.mxu0 %v1734
    %1804 = vmatpush.msra.mxu0 %v1733
    %1805 = vmatpush.msra.mxu0 %v1732
    %1806 = vmatpush.msra.mxu0 %v1731
    %1807 = vmatpush.msra.mxu0 %v1730
    %1808 = vmatpush.msra.mxu0 %v1729
    %1809 = vmatpush.msra.mxu0 %v1728
    %1810 = vmatpush.msra.mxu0 %v1727
    %1811 = vmatmul.f32.gmra.mxu0 %v1723
    %v1812 = vpop.f32.mrf.mxu0
    %v1813 = vadd.f32 %v1793, %v1812
    %1814 = vdwg.mxu0
    %1815 = vmatpush.msra.mxu0 %v1758
    %1816 = vmatpush.msra.mxu0 %v1757
    %1817 = vmatpush.msra.mxu0 %v1756
    %1818 = vmatpush.msra.mxu0 %v1755
    %1819 = vmatpush.msra.mxu0 %v1754
    %1820 = vmatpush.msra.mxu0 %v1753
    %1821 = vmatpush.msra.mxu0 %v1752
    %1822 = vmatpush.msra.mxu0 %v1751
    %1823 = vmatpush.msra.mxu0 %v1750
    %1824 = vmatpush.msra.mxu0 %v1749
    %1825 = vmatpush.msra.mxu0 %v1748
    %1826 = vmatpush.msra.mxu0 %v1747
    %1827 = vmatpush.msra.mxu0 %v1746
    %1828 = vmatpush.msra.mxu0 %v1745
    %1829 = vmatpush.msra.mxu0 %v1744
    %1830 = vmatpush.msra.mxu0 %v1743
    %1831 = vmatmul.f32.gmra.mxu0 %v1724
    %v1832 = vpop.f32.mrf.mxu0
    %v1833 = vadd.f32 %v1813, %v1832
    %1834 = vdwg.mxu0
    %1835 = vmatpush.msra.mxu0 %v1774
    %1836 = vmatpush.msra.mxu0 %v1773
    %1837 = vmatpush.msra.mxu0 %v1772
    %1838 = vmatpush.msra.mxu0 %v1771
    %1839 = vmatpush.msra.mxu0 %v1770
    %1840 = vmatpush.msra.mxu0 %v1769
    %1841 = vmatpush.msra.mxu0 %v1768
    %1842 = vmatpush.msra.mxu0 %v1767
    %1843 = vmatpush.msra.mxu0 %v1766
    %1844 = vmatpush.msra.mxu0 %v1765
    %1845 = vmatpush.msra.mxu0 %v1764
    %1846 = vmatpush.msra.mxu0 %v1763
    %1847 = vmatpush.msra.mxu0 %v1762
    %1848 = vmatpush.msra.mxu0 %v1761
    %1849 = vmatpush.msra.mxu0 %v1760
    %1850 = vmatpush.msra.mxu0 %v1759
    %1851 = vmatmul.f32.gmra.mxu0 %v1725
    %v1852 = vpop.f32.mrf.mxu0
    %v1853 = vadd.f32 %v1833, %v1852
    %1854 = vdwg.mxu0
    %1855 = vmatpush.msra.mxu0 %v1790
    %1856 = vmatpush.msra.mxu0 %v1789
    %1857 = vmatpush.msra.mxu0 %v1788
    %1858 = vmatpush.msra.mxu0 %v1787
    %1859 = vmatpush.msra.mxu0 %v1786
    %1860 = vmatpush.msra.mxu0 %v1785
    %1861 = vmatpush.msra.mxu0 %v1784
    %1862 = vmatpush.msra.mxu0 %v1783
    %1863 = vmatpush.msra.mxu0 %v1782
    %1864 = vmatpush.msra.mxu0 %v1781
    %1865 = vmatpush.msra.mxu0 %v1780
    %1866 = vmatpush.msra.mxu0 %v1779
    %1867 = vmatpush.msra.mxu0 %v1778
    %1868 = vmatpush.msra.mxu0 %v1777
    %1869 = vmatpush.msra.mxu0 %v1776
    %1870 = vmatpush.msra.mxu0 %v1775
    %1871 = vmatmul.f32.gmra.mxu0 %v1726
    %v1872 = vpop.f32.mrf.mxu0
    %v1873 = vadd.f32 %v1853, %v1872
    %1874 = vdwg.mxu0
    %1875 = vst [vmem:[#allocation13] sm:$0x3] %v1873
    // Predicated region
    $region98: #{tpu_custom_call.1} parent=1 // pred_check
      _
    $region99: #{tpu_custom_call.1} parent=1 // pred_check_branch
      %1877 = sbr.rel (0) target = $region101
    $region100: #{tpu_custom_call.1} parent=1 // pred_region
      %1879 = vsyncadd [#allocation4], 0
      %s1881 = sshll.u32 [#allocation13], 4
      %s1882 = int_to_ptr.vmem [resolvable:$true] %s1881
      %s1883 = sshll.u32 %s18, 4
      %s1884 = int_to_ptr.hbm [resolvable:$true] %s1883
      %1886 = dma.vmem_to_hbm [thread:$0]  %s1882, 32, %s1884, [#allocation4]
    $region101: #{tpu_custom_call.1} parent=1 // pred_fallthru
      _
    // Predicated region
    $region102: #{tpu_custom_call.1} parent=1 // pred_check
      _
    $region103: #{tpu_custom_call.1} parent=1 // pred_check_branch
      %1888 = sbr.rel (0) target = $region105
    $region104: #{tpu_custom_call.1} parent=1 // pred_region
      %1890 = dma.done [#allocation4], 32
    $region105: #{tpu_custom_call.1} parent=1 // pred_fallthru
      _
    %1891 = vsyncpa [#allocation3], 1
    %1892 = vsyncpa [#allocation6], 1
    %1893 = vsyncpa [#allocation9], 1
    %1894 = vsyncpa [#allocation12], 1
    %1895 = vsyncpa [#allocation4], 1

</llo_original>
